<compile_context>
chip_gen: v5e
topology: v5e:2x2
jax: 0.10.0
libtpu: 0.0.40
codegen_flags: <defaults>
</compile_context>

<pallas_src>
import functools

import numpy as np
import jax
import jax.numpy as jnp
from jax import lax
from jax.experimental import pallas as pl
from jax.experimental.pallas import tpu as pltpu


# ---------------------------------------------------------------------------
# In-kernel helpers
# ---------------------------------------------------------------------------
def _gelu(x):
    # exact (erf-based) GELU == torch.nn.GELU() default
    return 0.5 * x * (1.0 + lax.erf(x * 0.7071067811865476))


def _layernorm(x, g, b, eps=1e-5):
    mu = jnp.mean(x, axis=-1, keepdims=True)
    var = jnp.mean(jnp.square(x - mu), axis=-1, keepdims=True)
    return (x - mu) * lax.rsqrt(var + eps) * g + b


# ---------------------------------------------------------------------------
# Single fused kernel: projections + pooling + outer/patchify/embed + mixer
# ---------------------------------------------------------------------------
def _fused_kernel(wav_ref, maskmat_ref, txt_ref,
                  ww_ref, bw_ref, wt_ref, bt_ref,
                  weemb_ref, be_ref,
                  ln1g_ref, ln1b_ref, wt1_ref, bt1_ref, wt2_ref, bt2_ref,
                  ln2g_ref, ln2b_ref, wc1_ref, bc1_ref, wc2_ref, bc2_ref,
                  lnfg_ref, lnfb_ref, wh_ref, bh_ref, avg_ref,
                  out_ref, x_vmem, *, B, P, patch, D, depth):
    G = P // patch

    # ---- stage 1: wav projection + masked mean pooling + txt projection ----
    hidden = jnp.dot(wav_ref[...], ww_ref[...],
                     preferred_element_type=jnp.float32) + bw_ref[...]       # [B*T, P]
    # maskmat[b, b'*T+t] = delta(b,b') * mask[b,t] / max(sum_t mask[b,t], 1)
    pooled_wav = jnp.dot(maskmat_ref[...], hidden,
                         preferred_element_type=jnp.float32)                 # [B, P]
    pooled_txt = jnp.dot(txt_ref[...], wt_ref[...],
                         preferred_element_type=jnp.float32) + bt_ref[...]   # [B, P]

    # ---- stage 2: rank-1 outer product + patchify + patch embedding, fused ----
    # weemb = kron(I_G, We_qpd) with We_qpd[q, p1*D+d] = We[p1*patch+q, d], so
    # t_all[b, (w*patch+p1)*D + d] = sum_q pooled_txt[b, w*patch+q] * We[p1*patch+q, d]
    t_all = jnp.dot(pooled_txt, weemb_ref[...],
                    preferred_element_type=jnp.float32)                      # [B, G*patch*D]
    be = be_ref[...]                                                         # [1, D]
    u_cols = [pooled_wav[:, i:i + 1] for i in range(P)]                      # each [B, 1]
    t_cols = [t_all[:, j * D:(j + 1) * D] for j in range(G * patch)]         # each [B, D]
    # x[n*B + b, d] = be[d] + sum_{p1,p2} u[b,h*patch+p1] v[b,w*patch+p2] We[p1*patch+p2, d]
    # == (patchify(outer) @ We + be)   with token n = h*G + w   (rows n-major, batch inner)
    for h in range(G):
        for w in range(G):
            acc = be
            for p1 in range(patch):
                acc = acc + u_cols[h * patch + p1] * t_cols[w * patch + p1]
            n = h * G + w
            x_vmem[n * B:(n + 1) * B, :] = acc

    x = x_vmem[...]                                                          # [N*B, D]

    # ---- stage 3: mixer blocks (token mix over N per sample, channel mix over D) ----
    for l in range(depth):
        # token mixing (Conv1d k=1 over patches); wt1/wt2 are kron(W, I_B)
        y = _layernorm(x, ln1g_ref[l], ln1b_ref[l])
        z = jnp.dot(wt1_ref[l], y, preferred_element_type=jnp.float32) + bt1_ref[l]
        z = _gelu(z)
        z = jnp.dot(wt2_ref[l], z, preferred_element_type=jnp.float32) + bt2_ref[l]
        x = x + z
        # channel mixing (Linear over the feature axis)
        y = _layernorm(x, ln2g_ref[l], ln2b_ref[l])
        z = jnp.dot(y, wc1_ref[l], preferred_element_type=jnp.float32) + bc1_ref[l]
        z = _gelu(z)
        z = jnp.dot(z, wc2_ref[l], preferred_element_type=jnp.float32) + bc2_ref[l]
        x = x + z

    # ---- final LN + mean over tokens + classifier head (dense [B, C] store) ----
    y = _layernorm(x, lnfg_ref[...], lnfb_ref[...])
    pooled = jnp.dot(avg_ref[...], y, preferred_element_type=jnp.float32)    # [B, D]
    out_ref[...] = jnp.dot(pooled, wh_ref[...],
                           preferred_element_type=jnp.float32) + bh_ref[...]  # [B, C]


# ---------------------------------------------------------------------------
# One-time parameter preparation (kron expansions / weight permutations)
# ---------------------------------------------------------------------------
def prepare_params(p, B, patch):
    D = p["We"].shape[1]
    depth, fourN, N = p["Wt1"].shape
    P = p["Ww"].shape[1]
    G = P // patch
    f32 = jnp.float32
    eye_b = jnp.eye(B, dtype=f32)

    # We[p1*patch+p2, d] -> We_qpd[p2, p1*D+d]; then block-diag over the w axis.
    we_qpd = p["We"].reshape(patch, patch, D).transpose(1, 0, 2).reshape(patch, patch * D)
    we_embed = jnp.kron(jnp.eye(G, dtype=f32), we_qpd)                 # [P, G*patch*D]

    # kron(W, I_B): per-sample token mixing on the [N*B, D] (token-major) state.
    wt1k = jnp.einsum("lon,bc->lobnc", p["Wt1"], eye_b).reshape(depth, fourN * B, N * B)
    wt2k = jnp.einsum("lno,bc->lnboc", p["Wt2"], eye_b).reshape(depth, N * B, fourN * B)
    bt1e = jnp.repeat(p["bt1"], B, axis=1)                             # [depth, 4N*B, 1]
    bt2e = jnp.repeat(p["bt2"], B, axis=1)                             # [depth, N*B, 1]

    # token-mean pooling matrix: avg[b, n*B+b'] = delta(b,b') / N
    avg_mat = jnp.kron(jnp.ones((1, N), f32) / N, eye_b)               # [B, N*B]

    prep = dict(p)
    prep.update(We_embed=we_embed, Wt1k=wt1k, Wt2k=wt2k,
                bt1e=bt1e, bt2e=bt2e, avg_mat=avg_mat)
    return prep


# ---------------------------------------------------------------------------
# End-to-end wrapper (single pallas_call, whole batch, no grid)
# ---------------------------------------------------------------------------
@functools.partial(jax.jit, static_argnums=(4, 5))
def mlp_mixer_roberta_forward(wav_hidden, wav_feat_mask, txt_cls, prep,
                              patch, depth):
    B, T, Hw = wav_hidden.shape
    P = prep["Ww"].shape[1]
    D = prep["We"].shape[1]
    G = P // patch
    N = G * G
    C = prep["Wh"].shape[1]

    # tiny per-call prep: flatten wav (free), build normalised block mask matrix
    wav_flat = wav_hidden.reshape(B * T, Hw)
    m = wav_feat_mask.astype(jnp.float32)
    denom = jnp.maximum(jnp.sum(m, axis=1, keepdims=True), 1.0)        # empty-mask guard
    mask_norm = m / denom
    mask_mat = (jnp.eye(B, dtype=jnp.float32)[:, :, None]
                * mask_norm[None, :, :]).reshape(B, B * T)             # [B, B*T]

    order = ["Ww", "bw", "Wt", "bt", "We_embed", "be",
             "ln1g", "ln1b", "Wt1k", "bt1e", "Wt2k", "bt2e",
             "ln2g", "ln2b", "Wc1", "bc1", "Wc2", "bc2",
             "lnfg", "lnfb", "Wh", "bh", "avg_mat"]

    kernel = functools.partial(_fused_kernel, B=B, P=P, patch=patch, D=D,
                               depth=depth)
    logits = pl.pallas_call(
        kernel,
        out_shape=jax.ShapeDtypeStruct((B, C), jnp.float32),
        scratch_shapes=[pltpu.VMEM((N * B, D), jnp.float32)],
    )(wav_flat, mask_mat, txt_cls, *[prep[k] for k in order])
    return logits


# ---------------------------------------------------------------------------
# Plain-JAX reference (mirrors the PyTorch module math) + param init
# ---------------------------------------------------------------------------
def patchify(x, patch):
    # Rearrange('b c (h p1) (w p2) -> b (h w) (p1 p2 c)') with c == 1
    B, H, W = x.shape
    h, w = H // patch, W // patch
    return (x.reshape(B, h, patch, w, patch)
             .transpose(0, 1, 3, 2, 4)
             .reshape(B, h * w, patch * patch))


def init_params(key, Hw, Hx, P, patch, D, depth, C, N, Dh):
    ks = jax.random.split(key, 16)
    s = 0.05
    f32 = jnp.float32
    return dict(
        Ww=jax.random.normal(ks[0], (Hw, P), f32) * s,
        bw=jax.random.normal(ks[1], (1, P), f32) * s,
        Wt=jax.random.normal(ks[2], (Hx, P), f32) * s,
        bt=jax.random.normal(ks[3], (1, P), f32) * s,
        We=jax.random.normal(ks[4], (patch * patch, D), f32) * s,
        be=jax.random.normal(ks[5], (1, D), f32) * s,
        ln1g=jnp.ones((depth, 1, D), f32),
        ln1b=jnp.zeros((depth, 1, D), f32),
        Wt1=jax.random.normal(ks[6], (depth, 4 * N, N), f32) * s,
        bt1=jax.random.normal(ks[7], (depth, 4 * N, 1), f32) * s,
        Wt2=jax.random.normal(ks[8], (depth, N, 4 * N), f32) * s,
        bt2=jax.random.normal(ks[9], (depth, N, 1), f32) * s,
        ln2g=jnp.ones((depth, 1, D), f32),
        ln2b=jnp.zeros((depth, 1, D), f32),
        Wc1=jax.random.normal(ks[10], (depth, D, Dh), f32) * s,
        bc1=jax.random.normal(ks[11], (depth, 1, Dh), f32) * s,
        Wc2=jax.random.normal(ks[12], (depth, Dh, D), f32) * s,
        bc2=jax.random.normal(ks[13], (depth, 1, D), f32) * s,
        lnfg=jnp.ones((1, D), f32),
        lnfb=jnp.zeros((1, D), f32),
        Wh=jax.random.normal(ks[14], (D, C), f32) * s,
        bh=jax.random.normal(ks[15], (1, C), f32) * s,
    )


def reference_forward(wav_h, mask, txt_cls, p, patch, depth):
    hidden = wav_h @ p["Ww"] + p["bw"]
    masked = hidden * mask[:, :, None]
    pooled_wav = masked.sum(1) / mask.sum(1, keepdims=True)
    pooled_txt = txt_cls @ p["Wt"] + p["bt"]
    outer = pooled_wav[:, :, None] * pooled_txt[:, None, :]
    x = patchify(outer, patch) @ p["We"] + p["be"]

    def ln(v, g, b):
        mu = v.mean(-1, keepdims=True)
        var = ((v - mu) ** 2).mean(-1, keepdims=True)
        return (v - mu) / jnp.sqrt(var + 1e-5) * g + b

    gelu = lambda v: 0.5 * v * (1.0 + lax.erf(v * 0.7071067811865476))
    for l in range(depth):
        y = ln(x, p["ln1g"][l], p["ln1b"][l])
        z = jnp.einsum("on,bnd->bod", p["Wt1"][l], y) + p["bt1"][l]
        z = gelu(z)
        z = jnp.einsum("no,bod->bnd", p["Wt2"][l], z) + p["bt2"][l]
        x = x + z
        y = ln(x, p["ln2g"][l], p["ln2b"][l])
        z = y @ p["Wc1"][l] + p["bc1"][l]
        z = gelu(z)
        z = z @ p["Wc2"][l] + p["bc2"][l]
        x = x + z
    y = ln(x, p["lnfg"], p["lnfb"])
    return y.mean(1) @ p["Wh"] + p["bh"]


# ---------------------------------------------------------------------------
# Main
# ---------------------------------------------------------------------------
if __name__ == "__main__":
    # small, module-consistent shapes
    B, T, Hw, Hx = 2, 8, 64, 48               # batch, wav frames, wav hid, txt hid
    P, patch, D, depth, C = 16, 4, 32, 2, 9   # proj_size, patch, dim, depth, classes
    N = (P // patch) ** 2                     # num_patches = 16
    Dh = int(D * 0.5)                         # expansion_factor_token = 0.5

    key = jax.random.PRNGKey(0)
    k_w, k_t, k_p = jax.random.split(key, 3)
    wav_hidden = jax.random.normal(k_w, (B, T, Hw), jnp.float32)
    txt_cls = jax.random.normal(k_t, (B, Hx), jnp.float32)
    # frame-level padding mask (would come from _get_feature_vector_attention_mask)
    wav_feat_mask = jnp.array(
        [[1, 1, 1, 1, 1, 1, 0, 0], [1, 1, 1, 1, 1, 1, 1, 1]], jnp.float32)

    params = init_params(k_p, Hw, Hx, P, patch, D, depth, C, N, Dh)
    prep = prepare_params(params, B, patch)   # one-time weight re-layout

    logits = mlp_mixer_roberta_forward(
        wav_hidden, wav_feat_mask, txt_cls, prep, patch, depth)
    logits = jax.block_until_ready(logits)

    # split as in the module forward
    cls_pred = logits[:, :-2]
    reg_pred = logits[:, -2:]
    # TODO(synk): external criterions (cls/reg losses, cls_coef mix) not reproduced.

    ref = reference_forward(wav_hidden, wav_feat_mask, txt_cls, params,
                            patch, depth)
    np.testing.assert_allclose(np.asarray(logits), np.asarray(ref),
                               rtol=1e-2, atol=1e-2)
    assert cls_pred.shape == (B, C - 2) and reg_pred.shape == (B, 2)
    print("KERNEL_OK")
</pallas_src>

<mosaic_0001>
module attributes {stable_mosaic.version = 11 : i64} {
  func.func @_fused_kernel(%arg0: memref<16x64xf32, #tpu.memory_space<vmem>>, %arg1: memref<2x16xf32, #tpu.memory_space<vmem>>, %arg2: memref<2x48xf32, #tpu.memory_space<vmem>>, %arg3: memref<64x16xf32, #tpu.memory_space<vmem>>, %arg4: memref<1x16xf32, #tpu.memory_space<vmem>>, %arg5: memref<48x16xf32, #tpu.memory_space<vmem>>, %arg6: memref<1x16xf32, #tpu.memory_space<vmem>>, %arg7: memref<16x512xf32, #tpu.memory_space<vmem>>, %arg8: memref<1x32xf32, #tpu.memory_space<vmem>>, %arg9: memref<2x1x32xf32, #tpu.memory_space<vmem>>, %arg10: memref<2x1x32xf32, #tpu.memory_space<vmem>>, %arg11: memref<2x128x32xf32, #tpu.memory_space<vmem>>, %arg12: memref<2x128x1xf32, #tpu.memory_space<vmem>>, %arg13: memref<2x32x128xf32, #tpu.memory_space<vmem>>, %arg14: memref<2x32x1xf32, #tpu.memory_space<vmem>>, %arg15: memref<2x1x32xf32, #tpu.memory_space<vmem>>, %arg16: memref<2x1x32xf32, #tpu.memory_space<vmem>>, %arg17: memref<2x32x16xf32, #tpu.memory_space<vmem>>, %arg18: memref<2x1x16xf32, #tpu.memory_space<vmem>>, %arg19: memref<2x16x32xf32, #tpu.memory_space<vmem>>, %arg20: memref<2x1x32xf32, #tpu.memory_space<vmem>>, %arg21: memref<1x32xf32, #tpu.memory_space<vmem>>, %arg22: memref<1x32xf32, #tpu.memory_space<vmem>>, %arg23: memref<32x9xf32, #tpu.memory_space<vmem>>, %arg24: memref<1x9xf32, #tpu.memory_space<vmem>>, %arg25: memref<2x32xf32, #tpu.memory_space<vmem>>, %arg26: memref<2x9xf32, #tpu.memory_space<vmem>>, %arg27: memref<32x32xf32, #tpu.memory_space<vmem>>) attributes {dimension_semantics = [], scalar_prefetch = 0 : i64, scratch_operands = 1 : i64, tpu.core_type = #tpu.core_type<tc>} {
    %c0 = arith.constant 0 : index
    %c0_0 = arith.constant 0 : index
    %0 = vector.load %arg0[%c0, %c0_0] : memref<16x64xf32, #tpu.memory_space<vmem>>, vector<16x64xf32>
    %c0_1 = arith.constant 0 : index
    %c0_2 = arith.constant 0 : index
    %1 = vector.load %arg3[%c0_1, %c0_2] : memref<64x16xf32, #tpu.memory_space<vmem>>, vector<64x16xf32>
    %cst = arith.constant dense<0.000000e+00> : vector<16x16xf32>
    %2 = tpu.matmul %0, %1, %cst {dimension_numbers = #tpu.dot_dimension_numbers<[1], [0], [0], [1], [0, 0, 1, 1], [], []>} : vector<16x64xf32>, vector<64x16xf32>, vector<16x16xf32> -> vector<16x16xf32>
    %c0_3 = arith.constant 0 : index
    %c0_4 = arith.constant 0 : index
    %3 = vector.load %arg4[%c0_3, %c0_4] : memref<1x16xf32, #tpu.memory_space<vmem>>, vector<1x16xf32>
    %4 = vector.broadcast %3 : vector<1x16xf32> to vector<16x16xf32>
    %5 = arith.addf %2, %4 : vector<16x16xf32>
    %c0_5 = arith.constant 0 : index
    %c0_6 = arith.constant 0 : index
    %6 = vector.load %arg1[%c0_5, %c0_6] : memref<2x16xf32, #tpu.memory_space<vmem>>, vector<2x16xf32>
    %cst_7 = arith.constant dense<0.000000e+00> : vector<2x16xf32>
    %7 = tpu.matmul %6, %5, %cst_7 {dimension_numbers = #tpu.dot_dimension_numbers<[1], [0], [0], [1], [0, 0, 1, 1], [], []>} : vector<2x16xf32>, vector<16x16xf32>, vector<2x16xf32> -> vector<2x16xf32>
    %c0_8 = arith.constant 0 : index
    %c0_9 = arith.constant 0 : index
    %8 = vector.load %arg2[%c0_8, %c0_9] : memref<2x48xf32, #tpu.memory_space<vmem>>, vector<2x48xf32>
    %c0_10 = arith.constant 0 : index
    %c0_11 = arith.constant 0 : index
    %9 = vector.load %arg5[%c0_10, %c0_11] : memref<48x16xf32, #tpu.memory_space<vmem>>, vector<48x16xf32>
    %cst_12 = arith.constant dense<0.000000e+00> : vector<2x16xf32>
    %10 = tpu.matmul %8, %9, %cst_12 {dimension_numbers = #tpu.dot_dimension_numbers<[1], [0], [0], [1], [0, 0, 1, 1], [], []>} : vector<2x48xf32>, vector<48x16xf32>, vector<2x16xf32> -> vector<2x16xf32>
    %c0_13 = arith.constant 0 : index
    %c0_14 = arith.constant 0 : index
    %11 = vector.load %arg6[%c0_13, %c0_14] : memref<1x16xf32, #tpu.memory_space<vmem>>, vector<1x16xf32>
    %12 = vector.broadcast %11 : vector<1x16xf32> to vector<2x16xf32>
    %13 = arith.addf %10, %12 : vector<2x16xf32>
    %c0_15 = arith.constant 0 : index
    %c0_16 = arith.constant 0 : index
    %14 = vector.load %arg7[%c0_15, %c0_16] : memref<16x512xf32, #tpu.memory_space<vmem>>, vector<16x512xf32>
    %cst_17 = arith.constant dense<0.000000e+00> : vector<2x512xf32>
    %15 = tpu.matmul %13, %14, %cst_17 {dimension_numbers = #tpu.dot_dimension_numbers<[1], [0], [0], [1], [0, 0, 1, 1], [], []>} : vector<2x16xf32>, vector<16x512xf32>, vector<2x512xf32> -> vector<2x512xf32>
    %c0_18 = arith.constant 0 : index
    %c0_19 = arith.constant 0 : index
    %16 = vector.load %arg8[%c0_18, %c0_19] : memref<1x32xf32, #tpu.memory_space<vmem>>, vector<1x32xf32>
    %17 = vector.extract_strided_slice %7 {offsets = [0, 0], sizes = [2, 1], strides = [1, 1]} : vector<2x16xf32> to vector<2x1xf32>
    %18 = vector.extract_strided_slice %7 {offsets = [0, 1], sizes = [2, 1], strides = [1, 1]} : vector<2x16xf32> to vector<2x1xf32>
    %19 = vector.extract_strided_slice %7 {offsets = [0, 2], sizes = [2, 1], strides = [1, 1]} : vector<2x16xf32> to vector<2x1xf32>
    %20 = vector.extract_strided_slice %7 {offsets = [0, 3], sizes = [2, 1], strides = [1, 1]} : vector<2x16xf32> to vector<2x1xf32>
    %21 = vector.extract_strided_slice %7 {offsets = [0, 4], sizes = [2, 1], strides = [1, 1]} : vector<2x16xf32> to vector<2x1xf32>
    %22 = vector.extract_strided_slice %7 {offsets = [0, 5], sizes = [2, 1], strides = [1, 1]} : vector<2x16xf32> to vector<2x1xf32>
    %23 = vector.extract_strided_slice %7 {offsets = [0, 6], sizes = [2, 1], strides = [1, 1]} : vector<2x16xf32> to vector<2x1xf32>
    %24 = vector.extract_strided_slice %7 {offsets = [0, 7], sizes = [2, 1], strides = [1, 1]} : vector<2x16xf32> to vector<2x1xf32>
    %25 = vector.extract_strided_slice %7 {offsets = [0, 8], sizes = [2, 1], strides = [1, 1]} : vector<2x16xf32> to vector<2x1xf32>
    %26 = vector.extract_strided_slice %7 {offsets = [0, 9], sizes = [2, 1], strides = [1, 1]} : vector<2x16xf32> to vector<2x1xf32>
    %27 = vector.extract_strided_slice %7 {offsets = [0, 10], sizes = [2, 1], strides = [1, 1]} : vector<2x16xf32> to vector<2x1xf32>
    %28 = vector.extract_strided_slice %7 {offsets = [0, 11], sizes = [2, 1], strides = [1, 1]} : vector<2x16xf32> to vector<2x1xf32>
    %29 = vector.extract_strided_slice %7 {offsets = [0, 12], sizes = [2, 1], strides = [1, 1]} : vector<2x16xf32> to vector<2x1xf32>
    %30 = vector.extract_strided_slice %7 {offsets = [0, 13], sizes = [2, 1], strides = [1, 1]} : vector<2x16xf32> to vector<2x1xf32>
    %31 = vector.extract_strided_slice %7 {offsets = [0, 14], sizes = [2, 1], strides = [1, 1]} : vector<2x16xf32> to vector<2x1xf32>
    %32 = vector.extract_strided_slice %7 {offsets = [0, 15], sizes = [2, 1], strides = [1, 1]} : vector<2x16xf32> to vector<2x1xf32>
    %33 = vector.extract_strided_slice %15 {offsets = [0, 0], sizes = [2, 32], strides = [1, 1]} : vector<2x512xf32> to vector<2x32xf32>
    %34 = vector.extract_strided_slice %15 {offsets = [0, 32], sizes = [2, 32], strides = [1, 1]} : vector<2x512xf32> to vector<2x32xf32>
    %35 = vector.extract_strided_slice %15 {offsets = [0, 64], sizes = [2, 32], strides = [1, 1]} : vector<2x512xf32> to vector<2x32xf32>
    %36 = vector.extract_strided_slice %15 {offsets = [0, 96], sizes = [2, 32], strides = [1, 1]} : vector<2x512xf32> to vector<2x32xf32>
    %37 = vector.extract_strided_slice %15 {offsets = [0, 128], sizes = [2, 32], strides = [1, 1]} : vector<2x512xf32> to vector<2x32xf32>
    %38 = vector.extract_strided_slice %15 {offsets = [0, 160], sizes = [2, 32], strides = [1, 1]} : vector<2x512xf32> to vector<2x32xf32>
    %39 = vector.extract_strided_slice %15 {offsets = [0, 192], sizes = [2, 32], strides = [1, 1]} : vector<2x512xf32> to vector<2x32xf32>
    %40 = vector.extract_strided_slice %15 {offsets = [0, 224], sizes = [2, 32], strides = [1, 1]} : vector<2x512xf32> to vector<2x32xf32>
    %41 = vector.extract_strided_slice %15 {offsets = [0, 256], sizes = [2, 32], strides = [1, 1]} : vector<2x512xf32> to vector<2x32xf32>
    %42 = vector.extract_strided_slice %15 {offsets = [0, 288], sizes = [2, 32], strides = [1, 1]} : vector<2x512xf32> to vector<2x32xf32>
    %43 = vector.extract_strided_slice %15 {offsets = [0, 320], sizes = [2, 32], strides = [1, 1]} : vector<2x512xf32> to vector<2x32xf32>
    %44 = vector.extract_strided_slice %15 {offsets = [0, 352], sizes = [2, 32], strides = [1, 1]} : vector<2x512xf32> to vector<2x32xf32>
    %45 = vector.extract_strided_slice %15 {offsets = [0, 384], sizes = [2, 32], strides = [1, 1]} : vector<2x512xf32> to vector<2x32xf32>
    %46 = vector.extract_strided_slice %15 {offsets = [0, 416], sizes = [2, 32], strides = [1, 1]} : vector<2x512xf32> to vector<2x32xf32>
    %47 = vector.extract_strided_slice %15 {offsets = [0, 448], sizes = [2, 32], strides = [1, 1]} : vector<2x512xf32> to vector<2x32xf32>
    %48 = vector.extract_strided_slice %15 {offsets = [0, 480], sizes = [2, 32], strides = [1, 1]} : vector<2x512xf32> to vector<2x32xf32>
    %49 = vector.broadcast %17 : vector<2x1xf32> to vector<2x32xf32>
    %50 = arith.mulf %49, %33 : vector<2x32xf32>
    %51 = vector.broadcast %16 : vector<1x32xf32> to vector<2x32xf32>
    %52 = arith.addf %51, %50 : vector<2x32xf32>
    %53 = vector.broadcast %18 : vector<2x1xf32> to vector<2x32xf32>
    %54 = arith.mulf %53, %34 : vector<2x32xf32>
    %55 = arith.addf %52, %54 : vector<2x32xf32>
    %56 = vector.broadcast %19 : vector<2x1xf32> to vector<2x32xf32>
    %57 = arith.mulf %56, %35 : vector<2x32xf32>
    %58 = arith.addf %55, %57 : vector<2x32xf32>
    %59 = vector.broadcast %20 : vector<2x1xf32> to vector<2x32xf32>
    %60 = arith.mulf %59, %36 : vector<2x32xf32>
    %61 = arith.addf %58, %60 : vector<2x32xf32>
    %c0_20 = arith.constant 0 : index
    %c0_21 = arith.constant 0 : index
    %62 = vector.load %arg27[%c0_20, %c0_21] : memref<32x32xf32, #tpu.memory_space<vmem>>, vector<2x32xf32>
    tpu.vector_store %arg27[%c0_20, %c0_21], %61 {strides = array<i32>} : memref<32x32xf32, #tpu.memory_space<vmem>>, vector<2x32xf32>,
    %63 = vector.broadcast %17 : vector<2x1xf32> to vector<2x32xf32>
    %64 = arith.mulf %63, %37 : vector<2x32xf32>
    %65 = vector.broadcast %16 : vector<1x32xf32> to vector<2x32xf32>
    %66 = arith.addf %65, %64 : vector<2x32xf32>
    %67 = vector.broadcast %18 : vector<2x1xf32> to vector<2x32xf32>
    %68 = arith.mulf %67, %38 : vector<2x32xf32>
    %69 = arith.addf %66, %68 : vector<2x32xf32>
    %70 = vector.broadcast %19 : vector<2x1xf32> to vector<2x32xf32>
    %71 = arith.mulf %70, %39 : vector<2x32xf32>
    %72 = arith.addf %69, %71 : vector<2x32xf32>
    %73 = vector.broadcast %20 : vector<2x1xf32> to vector<2x32xf32>
    %74 = arith.mulf %73, %40 : vector<2x32xf32>
    %75 = arith.addf %72, %74 : vector<2x32xf32>
    %c2 = arith.constant 2 : index
    %c0_22 = arith.constant 0 : index
    %76 = vector.load %arg27[%c2, %c0_22] : memref<32x32xf32, #tpu.memory_space<vmem>>, vector<2x32xf32>
    tpu.vector_store %arg27[%c2, %c0_22], %75 {strides = array<i32>} : memref<32x32xf32, #tpu.memory_space<vmem>>, vector<2x32xf32>,
    %77 = vector.broadcast %17 : vector<2x1xf32> to vector<2x32xf32>
    %78 = arith.mulf %77, %41 : vector<2x32xf32>
    %79 = vector.broadcast %16 : vector<1x32xf32> to vector<2x32xf32>
    %80 = arith.addf %79, %78 : vector<2x32xf32>
    %81 = vector.broadcast %18 : vector<2x1xf32> to vector<2x32xf32>
    %82 = arith.mulf %81, %42 : vector<2x32xf32>
    %83 = arith.addf %80, %82 : vector<2x32xf32>
    %84 = vector.broadcast %19 : vector<2x1xf32> to vector<2x32xf32>
    %85 = arith.mulf %84, %43 : vector<2x32xf32>
    %86 = arith.addf %83, %85 : vector<2x32xf32>
    %87 = vector.broadcast %20 : vector<2x1xf32> to vector<2x32xf32>
    %88 = arith.mulf %87, %44 : vector<2x32xf32>
    %89 = arith.addf %86, %88 : vector<2x32xf32>
    %c4 = arith.constant 4 : index
    %c0_23 = arith.constant 0 : index
    %90 = vector.load %arg27[%c4, %c0_23] : memref<32x32xf32, #tpu.memory_space<vmem>>, vector<2x32xf32>
    tpu.vector_store %arg27[%c4, %c0_23], %89 {strides = array<i32>} : memref<32x32xf32, #tpu.memory_space<vmem>>, vector<2x32xf32>,
    %91 = vector.broadcast %17 : vector<2x1xf32> to vector<2x32xf32>
    %92 = arith.mulf %91, %45 : vector<2x32xf32>
    %93 = vector.broadcast %16 : vector<1x32xf32> to vector<2x32xf32>
    %94 = arith.addf %93, %92 : vector<2x32xf32>
    %95 = vector.broadcast %18 : vector<2x1xf32> to vector<2x32xf32>
    %96 = arith.mulf %95, %46 : vector<2x32xf32>
    %97 = arith.addf %94, %96 : vector<2x32xf32>
    %98 = vector.broadcast %19 : vector<2x1xf32> to vector<2x32xf32>
    %99 = arith.mulf %98, %47 : vector<2x32xf32>
    %100 = arith.addf %97, %99 : vector<2x32xf32>
    %101 = vector.broadcast %20 : vector<2x1xf32> to vector<2x32xf32>
    %102 = arith.mulf %101, %48 : vector<2x32xf32>
    %103 = arith.addf %100, %102 : vector<2x32xf32>
    %c6 = arith.constant 6 : index
    %c0_24 = arith.constant 0 : index
    %104 = vector.load %arg27[%c6, %c0_24] : memref<32x32xf32, #tpu.memory_space<vmem>>, vector<2x32xf32>
    tpu.vector_store %arg27[%c6, %c0_24], %103 {strides = array<i32>} : memref<32x32xf32, #tpu.memory_space<vmem>>, vector<2x32xf32>,
    %105 = vector.broadcast %21 : vector<2x1xf32> to vector<2x32xf32>
    %106 = arith.mulf %105, %33 : vector<2x32xf32>
    %107 = vector.broadcast %16 : vector<1x32xf32> to vector<2x32xf32>
    %108 = arith.addf %107, %106 : vector<2x32xf32>
    %109 = vector.broadcast %22 : vector<2x1xf32> to vector<2x32xf32>
    %110 = arith.mulf %109, %34 : vector<2x32xf32>
    %111 = arith.addf %108, %110 : vector<2x32xf32>
    %112 = vector.broadcast %23 : vector<2x1xf32> to vector<2x32xf32>
    %113 = arith.mulf %112, %35 : vector<2x32xf32>
    %114 = arith.addf %111, %113 : vector<2x32xf32>
    %115 = vector.broadcast %24 : vector<2x1xf32> to vector<2x32xf32>
    %116 = arith.mulf %115, %36 : vector<2x32xf32>
    %117 = arith.addf %114, %116 : vector<2x32xf32>
    %c8 = arith.constant 8 : index
    %c0_25 = arith.constant 0 : index
    %118 = vector.load %arg27[%c8, %c0_25] : memref<32x32xf32, #tpu.memory_space<vmem>>, vector<2x32xf32>
    tpu.vector_store %arg27[%c8, %c0_25], %117 {strides = array<i32>} : memref<32x32xf32, #tpu.memory_space<vmem>>, vector<2x32xf32>,
    %119 = vector.broadcast %21 : vector<2x1xf32> to vector<2x32xf32>
    %120 = arith.mulf %119, %37 : vector<2x32xf32>
    %121 = vector.broadcast %16 : vector<1x32xf32> to vector<2x32xf32>
    %122 = arith.addf %121, %120 : vector<2x32xf32>
    %123 = vector.broadcast %22 : vector<2x1xf32> to vector<2x32xf32>
    %124 = arith.mulf %123, %38 : vector<2x32xf32>
    %125 = arith.addf %122, %124 : vector<2x32xf32>
    %126 = vector.broadcast %23 : vector<2x1xf32> to vector<2x32xf32>
    %127 = arith.mulf %126, %39 : vector<2x32xf32>
    %128 = arith.addf %125, %127 : vector<2x32xf32>
    %129 = vector.broadcast %24 : vector<2x1xf32> to vector<2x32xf32>
    %130 = arith.mulf %129, %40 : vector<2x32xf32>
    %131 = arith.addf %128, %130 : vector<2x32xf32>
    %c10 = arith.constant 10 : index
    %c0_26 = arith.constant 0 : index
    %132 = vector.load %arg27[%c10, %c0_26] : memref<32x32xf32, #tpu.memory_space<vmem>>, vector<2x32xf32>
    tpu.vector_store %arg27[%c10, %c0_26], %131 {strides = array<i32>} : memref<32x32xf32, #tpu.memory_space<vmem>>, vector<2x32xf32>,
    %133 = vector.broadcast %21 : vector<2x1xf32> to vector<2x32xf32>
    %134 = arith.mulf %133, %41 : vector<2x32xf32>
    %135 = vector.broadcast %16 : vector<1x32xf32> to vector<2x32xf32>
    %136 = arith.addf %135, %134 : vector<2x32xf32>
    %137 = vector.broadcast %22 : vector<2x1xf32> to vector<2x32xf32>
    %138 = arith.mulf %137, %42 : vector<2x32xf32>
    %139 = arith.addf %136, %138 : vector<2x32xf32>
    %140 = vector.broadcast %23 : vector<2x1xf32> to vector<2x32xf32>
    %141 = arith.mulf %140, %43 : vector<2x32xf32>
    %142 = arith.addf %139, %141 : vector<2x32xf32>
    %143 = vector.broadcast %24 : vector<2x1xf32> to vector<2x32xf32>
    %144 = arith.mulf %143, %44 : vector<2x32xf32>
    %145 = arith.addf %142, %144 : vector<2x32xf32>
    %c12 = arith.constant 12 : index
    %c0_27 = arith.constant 0 : index
    %146 = vector.load %arg27[%c12, %c0_27] : memref<32x32xf32, #tpu.memory_space<vmem>>, vector<2x32xf32>
    tpu.vector_store %arg27[%c12, %c0_27], %145 {strides = array<i32>} : memref<32x32xf32, #tpu.memory_space<vmem>>, vector<2x32xf32>,
    %147 = vector.broadcast %21 : vector<2x1xf32> to vector<2x32xf32>
    %148 = arith.mulf %147, %45 : vector<2x32xf32>
    %149 = vector.broadcast %16 : vector<1x32xf32> to vector<2x32xf32>
    %150 = arith.addf %149, %148 : vector<2x32xf32>
    %151 = vector.broadcast %22 : vector<2x1xf32> to vector<2x32xf32>
    %152 = arith.mulf %151, %46 : vector<2x32xf32>
    %153 = arith.addf %150, %152 : vector<2x32xf32>
    %154 = vector.broadcast %23 : vector<2x1xf32> to vector<2x32xf32>
    %155 = arith.mulf %154, %47 : vector<2x32xf32>
    %156 = arith.addf %153, %155 : vector<2x32xf32>
    %157 = vector.broadcast %24 : vector<2x1xf32> to vector<2x32xf32>
    %158 = arith.mulf %157, %48 : vector<2x32xf32>
    %159 = arith.addf %156, %158 : vector<2x32xf32>
    %c14 = arith.constant 14 : index
    %c0_28 = arith.constant 0 : index
    %160 = vector.load %arg27[%c14, %c0_28] : memref<32x32xf32, #tpu.memory_space<vmem>>, vector<2x32xf32>
    tpu.vector_store %arg27[%c14, %c0_28], %159 {strides = array<i32>} : memref<32x32xf32, #tpu.memory_space<vmem>>, vector<2x32xf32>,
    %161 = vector.broadcast %25 : vector<2x1xf32> to vector<2x32xf32>
    %162 = arith.mulf %161, %33 : vector<2x32xf32>
    %163 = vector.broadcast %16 : vector<1x32xf32> to vector<2x32xf32>
    %164 = arith.addf %163, %162 : vector<2x32xf32>
    %165 = vector.broadcast %26 : vector<2x1xf32> to vector<2x32xf32>
    %166 = arith.mulf %165, %34 : vector<2x32xf32>
    %167 = arith.addf %164, %166 : vector<2x32xf32>
    %168 = vector.broadcast %27 : vector<2x1xf32> to vector<2x32xf32>
    %169 = arith.mulf %168, %35 : vector<2x32xf32>
    %170 = arith.addf %167, %169 : vector<2x32xf32>
    %171 = vector.broadcast %28 : vector<2x1xf32> to vector<2x32xf32>
    %172 = arith.mulf %171, %36 : vector<2x32xf32>
    %173 = arith.addf %170, %172 : vector<2x32xf32>
    %c16 = arith.constant 16 : index
    %c0_29 = arith.constant 0 : index
    %174 = vector.load %arg27[%c16, %c0_29] : memref<32x32xf32, #tpu.memory_space<vmem>>, vector<2x32xf32>
    tpu.vector_store %arg27[%c16, %c0_29], %173 {strides = array<i32>} : memref<32x32xf32, #tpu.memory_space<vmem>>, vector<2x32xf32>,
    %175 = vector.broadcast %25 : vector<2x1xf32> to vector<2x32xf32>
    %176 = arith.mulf %175, %37 : vector<2x32xf32>
    %177 = vector.broadcast %16 : vector<1x32xf32> to vector<2x32xf32>
    %178 = arith.addf %177, %176 : vector<2x32xf32>
    %179 = vector.broadcast %26 : vector<2x1xf32> to vector<2x32xf32>
    %180 = arith.mulf %179, %38 : vector<2x32xf32>
    %181 = arith.addf %178, %180 : vector<2x32xf32>
    %182 = vector.broadcast %27 : vector<2x1xf32> to vector<2x32xf32>
    %183 = arith.mulf %182, %39 : vector<2x32xf32>
    %184 = arith.addf %181, %183 : vector<2x32xf32>
    %185 = vector.broadcast %28 : vector<2x1xf32> to vector<2x32xf32>
    %186 = arith.mulf %185, %40 : vector<2x32xf32>
    %187 = arith.addf %184, %186 : vector<2x32xf32>
    %c18 = arith.constant 18 : index
    %c0_30 = arith.constant 0 : index
    %188 = vector.load %arg27[%c18, %c0_30] : memref<32x32xf32, #tpu.memory_space<vmem>>, vector<2x32xf32>
    tpu.vector_store %arg27[%c18, %c0_30], %187 {strides = array<i32>} : memref<32x32xf32, #tpu.memory_space<vmem>>, vector<2x32xf32>,
    %189 = vector.broadcast %25 : vector<2x1xf32> to vector<2x32xf32>
    %190 = arith.mulf %189, %41 : vector<2x32xf32>
    %191 = vector.broadcast %16 : vector<1x32xf32> to vector<2x32xf32>
    %192 = arith.addf %191, %190 : vector<2x32xf32>
    %193 = vector.broadcast %26 : vector<2x1xf32> to vector<2x32xf32>
    %194 = arith.mulf %193, %42 : vector<2x32xf32>
    %195 = arith.addf %192, %194 : vector<2x32xf32>
    %196 = vector.broadcast %27 : vector<2x1xf32> to vector<2x32xf32>
    %197 = arith.mulf %196, %43 : vector<2x32xf32>
    %198 = arith.addf %195, %197 : vector<2x32xf32>
    %199 = vector.broadcast %28 : vector<2x1xf32> to vector<2x32xf32>
    %200 = arith.mulf %199, %44 : vector<2x32xf32>
    %201 = arith.addf %198, %200 : vector<2x32xf32>
    %c20 = arith.constant 20 : index
    %c0_31 = arith.constant 0 : index
    %202 = vector.load %arg27[%c20, %c0_31] : memref<32x32xf32, #tpu.memory_space<vmem>>, vector<2x32xf32>
    tpu.vector_store %arg27[%c20, %c0_31], %201 {strides = array<i32>} : memref<32x32xf32, #tpu.memory_space<vmem>>, vector<2x32xf32>,
    %203 = vector.broadcast %25 : vector<2x1xf32> to vector<2x32xf32>
    %204 = arith.mulf %203, %45 : vector<2x32xf32>
    %205 = vector.broadcast %16 : vector<1x32xf32> to vector<2x32xf32>
    %206 = arith.addf %205, %204 : vector<2x32xf32>
    %207 = vector.broadcast %26 : vector<2x1xf32> to vector<2x32xf32>
    %208 = arith.mulf %207, %46 : vector<2x32xf32>
    %209 = arith.addf %206, %208 : vector<2x32xf32>
    %210 = vector.broadcast %27 : vector<2x1xf32> to vector<2x32xf32>
    %211 = arith.mulf %210, %47 : vector<2x32xf32>
    %212 = arith.addf %209, %211 : vector<2x32xf32>
    %213 = vector.broadcast %28 : vector<2x1xf32> to vector<2x32xf32>
    %214 = arith.mulf %213, %48 : vector<2x32xf32>
    %215 = arith.addf %212, %214 : vector<2x32xf32>
    %c22 = arith.constant 22 : index
    %c0_32 = arith.constant 0 : index
    %216 = vector.load %arg27[%c22, %c0_32] : memref<32x32xf32, #tpu.memory_space<vmem>>, vector<2x32xf32>
    tpu.vector_store %arg27[%c22, %c0_32], %215 {strides = array<i32>} : memref<32x32xf32, #tpu.memory_space<vmem>>, vector<2x32xf32>,
    %217 = vector.broadcast %29 : vector<2x1xf32> to vector<2x32xf32>
    %218 = arith.mulf %217, %33 : vector<2x32xf32>
    %219 = vector.broadcast %16 : vector<1x32xf32> to vector<2x32xf32>
    %220 = arith.addf %219, %218 : vector<2x32xf32>
    %221 = vector.broadcast %30 : vector<2x1xf32> to vector<2x32xf32>
    %222 = arith.mulf %221, %34 : vector<2x32xf32>
    %223 = arith.addf %220, %222 : vector<2x32xf32>
    %224 = vector.broadcast %31 : vector<2x1xf32> to vector<2x32xf32>
    %225 = arith.mulf %224, %35 : vector<2x32xf32>
    %226 = arith.addf %223, %225 : vector<2x32xf32>
    %227 = vector.broadcast %32 : vector<2x1xf32> to vector<2x32xf32>
    %228 = arith.mulf %227, %36 : vector<2x32xf32>
    %229 = arith.addf %226, %228 : vector<2x32xf32>
    %c24 = arith.constant 24 : index
    %c0_33 = arith.constant 0 : index
    %230 = vector.load %arg27[%c24, %c0_33] : memref<32x32xf32, #tpu.memory_space<vmem>>, vector<2x32xf32>
    tpu.vector_store %arg27[%c24, %c0_33], %229 {strides = array<i32>} : memref<32x32xf32, #tpu.memory_space<vmem>>, vector<2x32xf32>,
    %231 = vector.broadcast %29 : vector<2x1xf32> to vector<2x32xf32>
    %232 = arith.mulf %231, %37 : vector<2x32xf32>
    %233 = vector.broadcast %16 : vector<1x32xf32> to vector<2x32xf32>
    %234 = arith.addf %233, %232 : vector<2x32xf32>
    %235 = vector.broadcast %30 : vector<2x1xf32> to vector<2x32xf32>
    %236 = arith.mulf %235, %38 : vector<2x32xf32>
    %237 = arith.addf %234, %236 : vector<2x32xf32>
    %238 = vector.broadcast %31 : vector<2x1xf32> to vector<2x32xf32>
    %239 = arith.mulf %238, %39 : vector<2x32xf32>
    %240 = arith.addf %237, %239 : vector<2x32xf32>
    %241 = vector.broadcast %32 : vector<2x1xf32> to vector<2x32xf32>
    %242 = arith.mulf %241, %40 : vector<2x32xf32>
    %243 = arith.addf %240, %242 : vector<2x32xf32>
    %c26 = arith.constant 26 : index
    %c0_34 = arith.constant 0 : index
    %244 = vector.load %arg27[%c26, %c0_34] : memref<32x32xf32, #tpu.memory_space<vmem>>, vector<2x32xf32>
    tpu.vector_store %arg27[%c26, %c0_34], %243 {strides = array<i32>} : memref<32x32xf32, #tpu.memory_space<vmem>>, vector<2x32xf32>,
    %245 = vector.broadcast %29 : vector<2x1xf32> to vector<2x32xf32>
    %246 = arith.mulf %245, %41 : vector<2x32xf32>
    %247 = vector.broadcast %16 : vector<1x32xf32> to vector<2x32xf32>
    %248 = arith.addf %247, %246 : vector<2x32xf32>
    %249 = vector.broadcast %30 : vector<2x1xf32> to vector<2x32xf32>
    %250 = arith.mulf %249, %42 : vector<2x32xf32>
    %251 = arith.addf %248, %250 : vector<2x32xf32>
    %252 = vector.broadcast %31 : vector<2x1xf32> to vector<2x32xf32>
    %253 = arith.mulf %252, %43 : vector<2x32xf32>
    %254 = arith.addf %251, %253 : vector<2x32xf32>
    %255 = vector.broadcast %32 : vector<2x1xf32> to vector<2x32xf32>
    %256 = arith.mulf %255, %44 : vector<2x32xf32>
    %257 = arith.addf %254, %256 : vector<2x32xf32>
    %c28 = arith.constant 28 : index
    %c0_35 = arith.constant 0 : index
    %258 = vector.load %arg27[%c28, %c0_35] : memref<32x32xf32, #tpu.memory_space<vmem>>, vector<2x32xf32>
    tpu.vector_store %arg27[%c28, %c0_35], %257 {strides = array<i32>} : memref<32x32xf32, #tpu.memory_space<vmem>>, vector<2x32xf32>,
    %259 = vector.broadcast %29 : vector<2x1xf32> to vector<2x32xf32>
    %260 = arith.mulf %259, %45 : vector<2x32xf32>
    %261 = vector.broadcast %16 : vector<1x32xf32> to vector<2x32xf32>
    %262 = arith.addf %261, %260 : vector<2x32xf32>
    %263 = vector.broadcast %30 : vector<2x1xf32> to vector<2x32xf32>
    %264 = arith.mulf %263, %46 : vector<2x32xf32>
    %265 = arith.addf %262, %264 : vector<2x32xf32>
    %266 = vector.broadcast %31 : vector<2x1xf32> to vector<2x32xf32>
    %267 = arith.mulf %266, %47 : vector<2x32xf32>
    %268 = arith.addf %265, %267 : vector<2x32xf32>
    %269 = vector.broadcast %32 : vector<2x1xf32> to vector<2x32xf32>
    %270 = arith.mulf %269, %48 : vector<2x32xf32>
    %271 = arith.addf %268, %270 : vector<2x32xf32>
    %c30 = arith.constant 30 : index
    %c0_36 = arith.constant 0 : index
    %272 = vector.load %arg27[%c30, %c0_36] : memref<32x32xf32, #tpu.memory_space<vmem>>, vector<2x32xf32>
    tpu.vector_store %arg27[%c30, %c0_36], %271 {strides = array<i32>} : memref<32x32xf32, #tpu.memory_space<vmem>>, vector<2x32xf32>,
    %c0_37 = arith.constant 0 : index
    %c0_38 = arith.constant 0 : index
    %273 = vector.load %arg27[%c0_37, %c0_38] : memref<32x32xf32, #tpu.memory_space<vmem>>, vector<32x32xf32>
    %c0_39 = arith.constant 0 : index
    %c0_40 = arith.constant 0 : index
    %c0_41 = arith.constant 0 : index
    %274 = vector.load %arg9[%c0_39, %c0_40, %c0_41] : memref<2x1x32xf32, #tpu.memory_space<vmem>>, vector<1x1x32xf32>
    %275 = vector.shape_cast %274 : vector<1x1x32xf32> to vector<1x32xf32>
    %c0_42 = arith.constant 0 : index
    %c0_43 = arith.constant 0 : index
    %c0_44 = arith.constant 0 : index
    %276 = vector.load %arg10[%c0_42, %c0_43, %c0_44] : memref<2x1x32xf32, #tpu.memory_space<vmem>>, vector<1x1x32xf32>
    %277 = vector.shape_cast %276 : vector<1x1x32xf32> to vector<1x32xf32>
    %cst_45 = arith.constant dense<0.000000e+00> : vector<32xf32>
    %278 = vector.multi_reduction <add>, %273, %cst_45 [1] : vector<32x32xf32> to vector<32xf32>
    %279 = vector.shape_cast %278 : vector<32xf32> to vector<32x1xf32>
    %cst_46 = arith.constant 3.200000e+01 : f32
    %280 = vector.broadcast %cst_46 : f32 to vector<32x1xf32>
    %281 = arith.divf %279, %280 : vector<32x1xf32>
    %282 = vector.broadcast %281 : vector<32x1xf32> to vector<32x32xf32>
    %283 = arith.subf %273, %282 : vector<32x32xf32>
    %284 = arith.mulf %283, %283 : vector<32x32xf32>
    %cst_47 = arith.constant dense<0.000000e+00> : vector<32xf32>
    %285 = vector.multi_reduction <add>, %284, %cst_47 [1] : vector<32x32xf32> to vector<32xf32>
    %286 = vector.shape_cast %285 : vector<32xf32> to vector<32x1xf32>
    %cst_48 = arith.constant 3.200000e+01 : f32
    %287 = vector.broadcast %cst_48 : f32 to vector<32x1xf32>
    %288 = arith.divf %286, %287 : vector<32x1xf32>
    %289 = vector.broadcast %281 : vector<32x1xf32> to vector<32x32xf32>
    %290 = arith.subf %273, %289 : vector<32x32xf32>
    %cst_49 = arith.constant 9.99999974E-6 : f32
    %291 = vector.broadcast %cst_49 : f32 to vector<32x1xf32>
    %292 = arith.addf %288, %291 : vector<32x1xf32>
    %293 = math.rsqrt %292 : vector<32x1xf32>
    %294 = vector.broadcast %293 : vector<32x1xf32> to vector<32x32xf32>
    %295 = arith.mulf %290, %294 : vector<32x32xf32>
    %296 = vector.broadcast %275 : vector<1x32xf32> to vector<32x32xf32>
    %297 = arith.mulf %295, %296 : vector<32x32xf32>
    %298 = vector.broadcast %277 : vector<1x32xf32> to vector<32x32xf32>
    %299 = arith.addf %297, %298 : vector<32x32xf32>
    %c0_50 = arith.constant 0 : index
    %c0_51 = arith.constant 0 : index
    %c0_52 = arith.constant 0 : index
    %300 = vector.load %arg11[%c0_50, %c0_51, %c0_52] : memref<2x128x32xf32, #tpu.memory_space<vmem>>, vector<1x128x32xf32>
    %301 = vector.shape_cast %300 : vector<1x128x32xf32> to vector<128x32xf32>
    %cst_53 = arith.constant dense<0.000000e+00> : vector<128x32xf32>
    %302 = tpu.matmul %301, %299, %cst_53 {dimension_numbers = #tpu.dot_dimension_numbers<[1], [0], [0], [1], [0, 0, 1, 1], [], []>} : vector<128x32xf32>, vector<32x32xf32>, vector<128x32xf32> -> vector<128x32xf32>
    %c0_54 = arith.constant 0 : index
    %c0_55 = arith.constant 0 : index
    %c0_56 = arith.constant 0 : index
    %303 = vector.load %arg12[%c0_54, %c0_55, %c0_56] : memref<2x128x1xf32, #tpu.memory_space<vmem>>, vector<1x128x1xf32>
    %304 = vector.shape_cast %303 : vector<1x128x1xf32> to vector<128x1xf32>
    %305 = vector.broadcast %304 : vector<128x1xf32> to vector<128x32xf32>
    %306 = arith.addf %302, %305 : vector<128x32xf32>
    %cst_57 = arith.constant 5.000000e-01 : f32
    %307 = vector.broadcast %cst_57 : f32 to vector<128x32xf32>
    %308 = arith.mulf %307, %306 : vector<128x32xf32>
    %cst_58 = arith.constant 0.707106769 : f32
    %309 = vector.broadcast %cst_58 : f32 to vector<128x32xf32>
    %310 = arith.mulf %306, %309 : vector<128x32xf32>
    %311 = math.erf %310 : vector<128x32xf32>
    %cst_59 = arith.constant 1.000000e+00 : f32
    %312 = vector.broadcast %cst_59 : f32 to vector<128x32xf32>
    %313 = arith.addf %312, %311 : vector<128x32xf32>
    %314 = arith.mulf %308, %313 : vector<128x32xf32>
    %c0_60 = arith.constant 0 : index
    %c0_61 = arith.constant 0 : index
    %c0_62 = arith.constant 0 : index
    %315 = vector.load %arg13[%c0_60, %c0_61, %c0_62] : memref<2x32x128xf32, #tpu.memory_space<vmem>>, vector<1x32x128xf32>
    %316 = vector.shape_cast %315 : vector<1x32x128xf32> to vector<32x128xf32>
    %cst_63 = arith.constant dense<0.000000e+00> : vector<32x32xf32>
    %317 = tpu.matmul %316, %314, %cst_63 {dimension_numbers = #tpu.dot_dimension_numbers<[1], [0], [0], [1], [0, 0, 1, 1], [], []>} : vector<32x128xf32>, vector<128x32xf32>, vector<32x32xf32> -> vector<32x32xf32>
    %c0_64 = arith.constant 0 : index
    %c0_65 = arith.constant 0 : index
    %c0_66 = arith.constant 0 : index
    %318 = vector.load %arg14[%c0_64, %c0_65, %c0_66] : memref<2x32x1xf32, #tpu.memory_space<vmem>>, vector<1x32x1xf32>
    %319 = vector.shape_cast %318 : vector<1x32x1xf32> to vector<32x1xf32>
    %320 = vector.broadcast %319 : vector<32x1xf32> to vector<32x32xf32>
    %321 = arith.addf %317, %320 : vector<32x32xf32>
    %322 = arith.addf %273, %321 : vector<32x32xf32>
    %c0_67 = arith.constant 0 : index
    %c0_68 = arith.constant 0 : index
    %c0_69 = arith.constant 0 : index
    %323 = vector.load %arg15[%c0_67, %c0_68, %c0_69] : memref<2x1x32xf32, #tpu.memory_space<vmem>>, vector<1x1x32xf32>
    %324 = vector.shape_cast %323 : vector<1x1x32xf32> to vector<1x32xf32>
    %c0_70 = arith.constant 0 : index
    %c0_71 = arith.constant 0 : index
    %c0_72 = arith.constant 0 : index
    %325 = vector.load %arg16[%c0_70, %c0_71, %c0_72] : memref<2x1x32xf32, #tpu.memory_space<vmem>>, vector<1x1x32xf32>
    %326 = vector.shape_cast %325 : vector<1x1x32xf32> to vector<1x32xf32>
    %cst_73 = arith.constant dense<0.000000e+00> : vector<32xf32>
    %327 = vector.multi_reduction <add>, %322, %cst_73 [1] : vector<32x32xf32> to vector<32xf32>
    %328 = vector.shape_cast %327 : vector<32xf32> to vector<32x1xf32>
    %cst_74 = arith.constant 3.200000e+01 : f32
    %329 = vector.broadcast %cst_74 : f32 to vector<32x1xf32>
    %330 = arith.divf %328, %329 : vector<32x1xf32>
    %331 = vector.broadcast %330 : vector<32x1xf32> to vector<32x32xf32>
    %332 = arith.subf %322, %331 : vector<32x32xf32>
    %333 = arith.mulf %332, %332 : vector<32x32xf32>
    %cst_75 = arith.constant dense<0.000000e+00> : vector<32xf32>
    %334 = vector.multi_reduction <add>, %333, %cst_75 [1] : vector<32x32xf32> to vector<32xf32>
    %335 = vector.shape_cast %334 : vector<32xf32> to vector<32x1xf32>
    %cst_76 = arith.constant 3.200000e+01 : f32
    %336 = vector.broadcast %cst_76 : f32 to vector<32x1xf32>
    %337 = arith.divf %335, %336 : vector<32x1xf32>
    %338 = vector.broadcast %330 : vector<32x1xf32> to vector<32x32xf32>
    %339 = arith.subf %322, %338 : vector<32x32xf32>
    %cst_77 = arith.constant 9.99999974E-6 : f32
    %340 = vector.broadcast %cst_77 : f32 to vector<32x1xf32>
    %341 = arith.addf %337, %340 : vector<32x1xf32>
    %342 = math.rsqrt %341 : vector<32x1xf32>
    %343 = vector.broadcast %342 : vector<32x1xf32> to vector<32x32xf32>
    %344 = arith.mulf %339, %343 : vector<32x32xf32>
    %345 = vector.broadcast %324 : vector<1x32xf32> to vector<32x32xf32>
    %346 = arith.mulf %344, %345 : vector<32x32xf32>
    %347 = vector.broadcast %326 : vector<1x32xf32> to vector<32x32xf32>
    %348 = arith.addf %346, %347 : vector<32x32xf32>
    %c0_78 = arith.constant 0 : index
    %c0_79 = arith.constant 0 : index
    %c0_80 = arith.constant 0 : index
    %349 = vector.load %arg17[%c0_78, %c0_79, %c0_80] : memref<2x32x16xf32, #tpu.memory_space<vmem>>, vector<1x32x16xf32>
    %350 = vector.shape_cast %349 : vector<1x32x16xf32> to vector<32x16xf32>
    %cst_81 = arith.constant dense<0.000000e+00> : vector<32x16xf32>
    %351 = tpu.matmul %348, %350, %cst_81 {dimension_numbers = #tpu.dot_dimension_numbers<[1], [0], [0], [1], [0, 0, 1, 1], [], []>} : vector<32x32xf32>, vector<32x16xf32>, vector<32x16xf32> -> vector<32x16xf32>
    %c0_82 = arith.constant 0 : index
    %c0_83 = arith.constant 0 : index
    %c0_84 = arith.constant 0 : index
    %352 = vector.load %arg18[%c0_82, %c0_83, %c0_84] : memref<2x1x16xf32, #tpu.memory_space<vmem>>, vector<1x1x16xf32>
    %353 = vector.shape_cast %352 : vector<1x1x16xf32> to vector<1x16xf32>
    %354 = vector.broadcast %353 : vector<1x16xf32> to vector<32x16xf32>
    %355 = arith.addf %351, %354 : vector<32x16xf32>
    %cst_85 = arith.constant 5.000000e-01 : f32
    %356 = vector.broadcast %cst_85 : f32 to vector<32x16xf32>
    %357 = arith.mulf %356, %355 : vector<32x16xf32>
    %cst_86 = arith.constant 0.707106769 : f32
    %358 = vector.broadcast %cst_86 : f32 to vector<32x16xf32>
    %359 = arith.mulf %355, %358 : vector<32x16xf32>
    %360 = math.erf %359 : vector<32x16xf32>
    %cst_87 = arith.constant 1.000000e+00 : f32
    %361 = vector.broadcast %cst_87 : f32 to vector<32x16xf32>
    %362 = arith.addf %361, %360 : vector<32x16xf32>
    %363 = arith.mulf %357, %362 : vector<32x16xf32>
    %c0_88 = arith.constant 0 : index
    %c0_89 = arith.constant 0 : index
    %c0_90 = arith.constant 0 : index
    %364 = vector.load %arg19[%c0_88, %c0_89, %c0_90] : memref<2x16x32xf32, #tpu.memory_space<vmem>>, vector<1x16x32xf32>
    %365 = vector.shape_cast %364 : vector<1x16x32xf32> to vector<16x32xf32>
    %cst_91 = arith.constant dense<0.000000e+00> : vector<32x32xf32>
    %366 = tpu.matmul %363, %365, %cst_91 {dimension_numbers = #tpu.dot_dimension_numbers<[1], [0], [0], [1], [0, 0, 1, 1], [], []>} : vector<32x16xf32>, vector<16x32xf32>, vector<32x32xf32> -> vector<32x32xf32>
    %c0_92 = arith.constant 0 : index
    %c0_93 = arith.constant 0 : index
    %c0_94 = arith.constant 0 : index
    %367 = vector.load %arg20[%c0_92, %c0_93, %c0_94] : memref<2x1x32xf32, #tpu.memory_space<vmem>>, vector<1x1x32xf32>
    %368 = vector.shape_cast %367 : vector<1x1x32xf32> to vector<1x32xf32>
    %369 = vector.broadcast %368 : vector<1x32xf32> to vector<32x32xf32>
    %370 = arith.addf %366, %369 : vector<32x32xf32>
    %371 = arith.addf %322, %370 : vector<32x32xf32>
    %c1 = arith.constant 1 : index
    %c0_95 = arith.constant 0 : index
    %c0_96 = arith.constant 0 : index
    %372 = vector.load %arg9[%c1, %c0_95, %c0_96] : memref<2x1x32xf32, #tpu.memory_space<vmem>>, vector<1x1x32xf32>
    %373 = vector.shape_cast %372 : vector<1x1x32xf32> to vector<1x32xf32>
    %c1_97 = arith.constant 1 : index
    %c0_98 = arith.constant 0 : index
    %c0_99 = arith.constant 0 : index
    %374 = vector.load %arg10[%c1_97, %c0_98, %c0_99] : memref<2x1x32xf32, #tpu.memory_space<vmem>>, vector<1x1x32xf32>
    %375 = vector.shape_cast %374 : vector<1x1x32xf32> to vector<1x32xf32>
    %cst_100 = arith.constant dense<0.000000e+00> : vector<32xf32>
    %376 = vector.multi_reduction <add>, %371, %cst_100 [1] : vector<32x32xf32> to vector<32xf32>
    %377 = vector.shape_cast %376 : vector<32xf32> to vector<32x1xf32>
    %cst_101 = arith.constant 3.200000e+01 : f32
    %378 = vector.broadcast %cst_101 : f32 to vector<32x1xf32>
    %379 = arith.divf %377, %378 : vector<32x1xf32>
    %380 = vector.broadcast %379 : vector<32x1xf32> to vector<32x32xf32>
    %381 = arith.subf %371, %380 : vector<32x32xf32>
    %382 = arith.mulf %381, %381 : vector<32x32xf32>
    %cst_102 = arith.constant dense<0.000000e+00> : vector<32xf32>
    %383 = vector.multi_reduction <add>, %382, %cst_102 [1] : vector<32x32xf32> to vector<32xf32>
    %384 = vector.shape_cast %383 : vector<32xf32> to vector<32x1xf32>
    %cst_103 = arith.constant 3.200000e+01 : f32
    %385 = vector.broadcast %cst_103 : f32 to vector<32x1xf32>
    %386 = arith.divf %384, %385 : vector<32x1xf32>
    %387 = vector.broadcast %379 : vector<32x1xf32> to vector<32x32xf32>
    %388 = arith.subf %371, %387 : vector<32x32xf32>
    %cst_104 = arith.constant 9.99999974E-6 : f32
    %389 = vector.broadcast %cst_104 : f32 to vector<32x1xf32>
    %390 = arith.addf %386, %389 : vector<32x1xf32>
    %391 = math.rsqrt %390 : vector<32x1xf32>
    %392 = vector.broadcast %391 : vector<32x1xf32> to vector<32x32xf32>
    %393 = arith.mulf %388, %392 : vector<32x32xf32>
    %394 = vector.broadcast %373 : vector<1x32xf32> to vector<32x32xf32>
    %395 = arith.mulf %393, %394 : vector<32x32xf32>
    %396 = vector.broadcast %375 : vector<1x32xf32> to vector<32x32xf32>
    %397 = arith.addf %395, %396 : vector<32x32xf32>
    %c1_105 = arith.constant 1 : index
    %c0_106 = arith.constant 0 : index
    %c0_107 = arith.constant 0 : index
    %398 = vector.load %arg11[%c1_105, %c0_106, %c0_107] : memref<2x128x32xf32, #tpu.memory_space<vmem>>, vector<1x128x32xf32>
    %399 = vector.shape_cast %398 : vector<1x128x32xf32> to vector<128x32xf32>
    %cst_108 = arith.constant dense<0.000000e+00> : vector<128x32xf32>
    %400 = tpu.matmul %399, %397, %cst_108 {dimension_numbers = #tpu.dot_dimension_numbers<[1], [0], [0], [1], [0, 0, 1, 1], [], []>} : vector<128x32xf32>, vector<32x32xf32>, vector<128x32xf32> -> vector<128x32xf32>
    %c1_109 = arith.constant 1 : index
    %c0_110 = arith.constant 0 : index
    %c0_111 = arith.constant 0 : index
    %401 = vector.load %arg12[%c1_109, %c0_110, %c0_111] : memref<2x128x1xf32, #tpu.memory_space<vmem>>, vector<1x128x1xf32>
    %402 = vector.shape_cast %401 : vector<1x128x1xf32> to vector<128x1xf32>
    %403 = vector.broadcast %402 : vector<128x1xf32> to vector<128x32xf32>
    %404 = arith.addf %400, %403 : vector<128x32xf32>
    %cst_112 = arith.constant 5.000000e-01 : f32
    %405 = vector.broadcast %cst_112 : f32 to vector<128x32xf32>
    %406 = arith.mulf %405, %404 : vector<128x32xf32>
    %cst_113 = arith.constant 0.707106769 : f32
    %407 = vector.broadcast %cst_113 : f32 to vector<128x32xf32>
    %408 = arith.mulf %404, %407 : vector<128x32xf32>
    %409 = math.erf %408 : vector<128x32xf32>
    %cst_114 = arith.constant 1.000000e+00 : f32
    %410 = vector.broadcast %cst_114 : f32 to vector<128x32xf32>
    %411 = arith.addf %410, %409 : vector<128x32xf32>
    %412 = arith.mulf %406, %411 : vector<128x32xf32>
    %c1_115 = arith.constant 1 : index
    %c0_116 = arith.constant 0 : index
    %c0_117 = arith.constant 0 : index
    %413 = vector.load %arg13[%c1_115, %c0_116, %c0_117] : memref<2x32x128xf32, #tpu.memory_space<vmem>>, vector<1x32x128xf32>
    %414 = vector.shape_cast %413 : vector<1x32x128xf32> to vector<32x128xf32>
    %cst_118 = arith.constant dense<0.000000e+00> : vector<32x32xf32>
    %415 = tpu.matmul %414, %412, %cst_118 {dimension_numbers = #tpu.dot_dimension_numbers<[1], [0], [0], [1], [0, 0, 1, 1], [], []>} : vector<32x128xf32>, vector<128x32xf32>, vector<32x32xf32> -> vector<32x32xf32>
    %c1_119 = arith.constant 1 : index
    %c0_120 = arith.constant 0 : index
    %c0_121 = arith.constant 0 : index
    %416 = vector.load %arg14[%c1_119, %c0_120, %c0_121] : memref<2x32x1xf32, #tpu.memory_space<vmem>>, vector<1x32x1xf32>
    %417 = vector.shape_cast %416 : vector<1x32x1xf32> to vector<32x1xf32>
    %418 = vector.broadcast %417 : vector<32x1xf32> to vector<32x32xf32>
    %419 = arith.addf %415, %418 : vector<32x32xf32>
    %420 = arith.addf %371, %419 : vector<32x32xf32>
    %c1_122 = arith.constant 1 : index
    %c0_123 = arith.constant 0 : index
    %c0_124 = arith.constant 0 : index
    %421 = vector.load %arg15[%c1_122, %c0_123, %c0_124] : memref<2x1x32xf32, #tpu.memory_space<vmem>>, vector<1x1x32xf32>
    %422 = vector.shape_cast %421 : vector<1x1x32xf32> to vector<1x32xf32>
    %c1_125 = arith.constant 1 : index
    %c0_126 = arith.constant 0 : index
    %c0_127 = arith.constant 0 : index
    %423 = vector.load %arg16[%c1_125, %c0_126, %c0_127] : memref<2x1x32xf32, #tpu.memory_space<vmem>>, vector<1x1x32xf32>
    %424 = vector.shape_cast %423 : vector<1x1x32xf32> to vector<1x32xf32>
    %cst_128 = arith.constant dense<0.000000e+00> : vector<32xf32>
    %425 = vector.multi_reduction <add>, %420, %cst_128 [1] : vector<32x32xf32> to vector<32xf32>
    %426 = vector.shape_cast %425 : vector<32xf32> to vector<32x1xf32>
    %cst_129 = arith.constant 3.200000e+01 : f32
    %427 = vector.broadcast %cst_129 : f32 to vector<32x1xf32>
    %428 = arith.divf %426, %427 : vector<32x1xf32>
    %429 = vector.broadcast %428 : vector<32x1xf32> to vector<32x32xf32>
    %430 = arith.subf %420, %429 : vector<32x32xf32>
    %431 = arith.mulf %430, %430 : vector<32x32xf32>
    %cst_130 = arith.constant dense<0.000000e+00> : vector<32xf32>
    %432 = vector.multi_reduction <add>, %431, %cst_130 [1] : vector<32x32xf32> to vector<32xf32>
    %433 = vector.shape_cast %432 : vector<32xf32> to vector<32x1xf32>
    %cst_131 = arith.constant 3.200000e+01 : f32
    %434 = vector.broadcast %cst_131 : f32 to vector<32x1xf32>
    %435 = arith.divf %433, %434 : vector<32x1xf32>
    %436 = vector.broadcast %428 : vector<32x1xf32> to vector<32x32xf32>
    %437 = arith.subf %420, %436 : vector<32x32xf32>
    %cst_132 = arith.constant 9.99999974E-6 : f32
    %438 = vector.broadcast %cst_132 : f32 to vector<32x1xf32>
    %439 = arith.addf %435, %438 : vector<32x1xf32>
    %440 = math.rsqrt %439 : vector<32x1xf32>
    %441 = vector.broadcast %440 : vector<32x1xf32> to vector<32x32xf32>
    %442 = arith.mulf %437, %441 : vector<32x32xf32>
    %443 = vector.broadcast %422 : vector<1x32xf32> to vector<32x32xf32>
    %444 = arith.mulf %442, %443 : vector<32x32xf32>
    %445 = vector.broadcast %424 : vector<1x32xf32> to vector<32x32xf32>
    %446 = arith.addf %444, %445 : vector<32x32xf32>
    %c1_133 = arith.constant 1 : index
    %c0_134 = arith.constant 0 : index
    %c0_135 = arith.constant 0 : index
    %447 = vector.load %arg17[%c1_133, %c0_134, %c0_135] : memref<2x32x16xf32, #tpu.memory_space<vmem>>, vector<1x32x16xf32>
    %448 = vector.shape_cast %447 : vector<1x32x16xf32> to vector<32x16xf32>
    %cst_136 = arith.constant dense<0.000000e+00> : vector<32x16xf32>
    %449 = tpu.matmul %446, %448, %cst_136 {dimension_numbers = #tpu.dot_dimension_numbers<[1], [0], [0], [1], [0, 0, 1, 1], [], []>} : vector<32x32xf32>, vector<32x16xf32>, vector<32x16xf32> -> vector<32x16xf32>
    %c1_137 = arith.constant 1 : index
    %c0_138 = arith.constant 0 : index
    %c0_139 = arith.constant 0 : index
    %450 = vector.load %arg18[%c1_137, %c0_138, %c0_139] : memref<2x1x16xf32, #tpu.memory_space<vmem>>, vector<1x1x16xf32>
    %451 = vector.shape_cast %450 : vector<1x1x16xf32> to vector<1x16xf32>
    %452 = vector.broadcast %451 : vector<1x16xf32> to vector<32x16xf32>
    %453 = arith.addf %449, %452 : vector<32x16xf32>
    %cst_140 = arith.constant 5.000000e-01 : f32
    %454 = vector.broadcast %cst_140 : f32 to vector<32x16xf32>
    %455 = arith.mulf %454, %453 : vector<32x16xf32>
    %cst_141 = arith.constant 0.707106769 : f32
    %456 = vector.broadcast %cst_141 : f32 to vector<32x16xf32>
    %457 = arith.mulf %453, %456 : vector<32x16xf32>
    %458 = math.erf %457 : vector<32x16xf32>
    %cst_142 = arith.constant 1.000000e+00 : f32
    %459 = vector.broadcast %cst_142 : f32 to vector<32x16xf32>
    %460 = arith.addf %459, %458 : vector<32x16xf32>
    %461 = arith.mulf %455, %460 : vector<32x16xf32>
    %c1_143 = arith.constant 1 : index
    %c0_144 = arith.constant 0 : index
    %c0_145 = arith.constant 0 : index
    %462 = vector.load %arg19[%c1_143, %c0_144, %c0_145] : memref<2x16x32xf32, #tpu.memory_space<vmem>>, vector<1x16x32xf32>
    %463 = vector.shape_cast %462 : vector<1x16x32xf32> to vector<16x32xf32>
    %cst_146 = arith.constant dense<0.000000e+00> : vector<32x32xf32>
    %464 = tpu.matmul %461, %463, %cst_146 {dimension_numbers = #tpu.dot_dimension_numbers<[1], [0], [0], [1], [0, 0, 1, 1], [], []>} : vector<32x16xf32>, vector<16x32xf32>, vector<32x32xf32> -> vector<32x32xf32>
    %c1_147 = arith.constant 1 : index
    %c0_148 = arith.constant 0 : index
    %c0_149 = arith.constant 0 : index
    %465 = vector.load %arg20[%c1_147, %c0_148, %c0_149] : memref<2x1x32xf32, #tpu.memory_space<vmem>>, vector<1x1x32xf32>
    %466 = vector.shape_cast %465 : vector<1x1x32xf32> to vector<1x32xf32>
    %467 = vector.broadcast %466 : vector<1x32xf32> to vector<32x32xf32>
    %468 = arith.addf %464, %467 : vector<32x32xf32>
    %469 = arith.addf %420, %468 : vector<32x32xf32>
    %c0_150 = arith.constant 0 : index
    %c0_151 = arith.constant 0 : index
    %470 = vector.load %arg21[%c0_150, %c0_151] : memref<1x32xf32, #tpu.memory_space<vmem>>, vector<1x32xf32>
    %c0_152 = arith.constant 0 : index
    %c0_153 = arith.constant 0 : index
    %471 = vector.load %arg22[%c0_152, %c0_153] : memref<1x32xf32, #tpu.memory_space<vmem>>, vector<1x32xf32>
    %cst_154 = arith.constant dense<0.000000e+00> : vector<32xf32>
    %472 = vector.multi_reduction <add>, %469, %cst_154 [1] : vector<32x32xf32> to vector<32xf32>
    %473 = vector.shape_cast %472 : vector<32xf32> to vector<32x1xf32>
    %cst_155 = arith.constant 3.200000e+01 : f32
    %474 = vector.broadcast %cst_155 : f32 to vector<32x1xf32>
    %475 = arith.divf %473, %474 : vector<32x1xf32>
    %476 = vector.broadcast %475 : vector<32x1xf32> to vector<32x32xf32>
    %477 = arith.subf %469, %476 : vector<32x32xf32>
    %478 = arith.mulf %477, %477 : vector<32x32xf32>
    %cst_156 = arith.constant dense<0.000000e+00> : vector<32xf32>
    %479 = vector.multi_reduction <add>, %478, %cst_156 [1] : vector<32x32xf32> to vector<32xf32>
    %480 = vector.shape_cast %479 : vector<32xf32> to vector<32x1xf32>
    %cst_157 = arith.constant 3.200000e+01 : f32
    %481 = vector.broadcast %cst_157 : f32 to vector<32x1xf32>
    %482 = arith.divf %480, %481 : vector<32x1xf32>
    %483 = vector.broadcast %475 : vector<32x1xf32> to vector<32x32xf32>
    %484 = arith.subf %469, %483 : vector<32x32xf32>
    %cst_158 = arith.constant 9.99999974E-6 : f32
    %485 = vector.broadcast %cst_158 : f32 to vector<32x1xf32>
    %486 = arith.addf %482, %485 : vector<32x1xf32>
    %487 = math.rsqrt %486 : vector<32x1xf32>
    %488 = vector.broadcast %487 : vector<32x1xf32> to vector<32x32xf32>
    %489 = arith.mulf %484, %488 : vector<32x32xf32>
    %490 = vector.broadcast %470 : vector<1x32xf32> to vector<32x32xf32>
    %491 = arith.mulf %489, %490 : vector<32x32xf32>
    %492 = vector.broadcast %471 : vector<1x32xf32> to vector<32x32xf32>
    %493 = arith.addf %491, %492 : vector<32x32xf32>
    %c0_159 = arith.constant 0 : index
    %c0_160 = arith.constant 0 : index
    %494 = vector.load %arg25[%c0_159, %c0_160] : memref<2x32xf32, #tpu.memory_space<vmem>>, vector<2x32xf32>
    %cst_161 = arith.constant dense<0.000000e+00> : vector<2x32xf32>
    %495 = tpu.matmul %494, %493, %cst_161 {dimension_numbers = #tpu.dot_dimension_numbers<[1], [0], [0], [1], [0, 0, 1, 1], [], []>} : vector<2x32xf32>, vector<32x32xf32>, vector<2x32xf32> -> vector<2x32xf32>
    %c0_162 = arith.constant 0 : index
    %c0_163 = arith.constant 0 : index
    %496 = vector.load %arg23[%c0_162, %c0_163] : memref<32x9xf32, #tpu.memory_space<vmem>>, vector<32x9xf32>
    %cst_164 = arith.constant dense<0.000000e+00> : vector<2x9xf32>
    %497 = tpu.matmul %495, %496, %cst_164 {dimension_numbers = #tpu.dot_dimension_numbers<[1], [0], [0], [1], [0, 0, 1, 1], [], []>} : vector<2x32xf32>, vector<32x9xf32>, vector<2x9xf32> -> vector<2x9xf32>
    %c0_165 = arith.constant 0 : index
    %c0_166 = arith.constant 0 : index
    %498 = vector.load %arg24[%c0_165, %c0_166] : memref<1x9xf32, #tpu.memory_space<vmem>>, vector<1x9xf32>
    %499 = vector.broadcast %498 : vector<1x9xf32> to vector<2x9xf32>
    %500 = arith.addf %497, %499 : vector<2x9xf32>
    %c0_167 = arith.constant 0 : index
    %c0_168 = arith.constant 0 : index
    %501 = vector.load %arg26[%c0_167, %c0_168] : memref<2x9xf32, #tpu.memory_space<vmem>>, vector<2x9xf32>
    tpu.vector_store %arg26[%c0_167, %c0_168], %500 {strides = array<i32>} : memref<2x9xf32, #tpu.memory_space<vmem>>, vector<2x9xf32>,
    return
  }
}

</mosaic_0001>

<llo_original>
// kernel: mlp_mixer_roberta_forward.1
$region0: #{mlp_mixer_roberta_forward.1}
  #allocation0 [shape = 'u32[]', space=smem, size = 0x4, offset = 0x4, fixed_abs, tag = 'smem constant byte address 0x4 - core index']
  #allocation1 [shape = 'u32[72,128]{1,0:T(1,128)}', space=vmem, size = 0x9000, scoped, tag = 'internal scratch']
  #allocation2 [shape = 'f32[32,32]{1,0:T(8,128)}', space=vmem, size = 0x4000, scoped, tag = 'scratch operand']
  %s0 = inlined_call_operand.vmem [shape: f32[16,64], index: 0, kind: input, shape index: {}]
  %s1 = inlined_call_operand.vmem [shape: f32[2,16], index: 1, kind: input, shape index: {}]
  %s2 = inlined_call_operand.vmem [shape: f32[2,48], index: 2, kind: input, shape index: {}]
  %s3 = inlined_call_operand.vmem [shape: f32[64,16], index: 3, kind: input, shape index: {}]
  %s4 = inlined_call_operand.vmem [shape: f32[1,16], index: 4, kind: input, shape index: {}]
  %s5 = inlined_call_operand.vmem [shape: f32[48,16], index: 5, kind: input, shape index: {}]
  %s6 = inlined_call_operand.vmem [shape: f32[1,16], index: 6, kind: input, shape index: {}]
  %s7 = inlined_call_operand.vmem [shape: f32[16,512], index: 7, kind: input, shape index: {}]
  %s8 = inlined_call_operand.vmem [shape: f32[1,32], index: 8, kind: input, shape index: {}]
  %s9 = inlined_call_operand.vmem [shape: f32[2,1,32], index: 9, kind: input, shape index: {}]
  %s10 = inlined_call_operand.vmem [shape: f32[2,1,32], index: 10, kind: input, shape index: {}]
  %s11 = inlined_call_operand.vmem [shape: f32[2,128,32], index: 11, kind: input, shape index: {}]
  %s12 = inlined_call_operand.vmem [shape: f32[2,128,1], index: 12, kind: input, shape index: {}]
  %s13 = inlined_call_operand.vmem [shape: f32[2,32,128], index: 13, kind: input, shape index: {}]
  %s14 = inlined_call_operand.vmem [shape: f32[2,32,1], index: 14, kind: input, shape index: {}]
  %s15 = inlined_call_operand.vmem [shape: f32[2,1,32], index: 15, kind: input, shape index: {}]
  %s16 = inlined_call_operand.vmem [shape: f32[2,1,32], index: 16, kind: input, shape index: {}]
  %s17 = inlined_call_operand.vmem [shape: f32[2,32,16], index: 17, kind: input, shape index: {}]
  %s18 = inlined_call_operand.vmem [shape: f32[2,1,16], index: 18, kind: input, shape index: {}]
  %s19 = inlined_call_operand.vmem [shape: f32[2,16,32], index: 19, kind: input, shape index: {}]
  %s20 = inlined_call_operand.vmem [shape: f32[2,1,32], index: 20, kind: input, shape index: {}]
  %s21 = inlined_call_operand.vmem [shape: f32[1,32], index: 21, kind: input, shape index: {}]
  %s22 = inlined_call_operand.vmem [shape: f32[1,32], index: 22, kind: input, shape index: {}]
  %s23 = inlined_call_operand.vmem [shape: f32[32,9], index: 23, kind: input, shape index: {}]
  %s24 = inlined_call_operand.vmem [shape: f32[1,9], index: 24, kind: input, shape index: {}]
  %s25 = inlined_call_operand.vmem [shape: f32[2,32], index: 25, kind: input, shape index: {}]
  %s26 = inlined_call_operand.hbm [shape: f32[2,9], index: 26, kind: output, shape index: {}]
  %s27 = sld [smem:[#allocation0]]
  $region114: #{mlp_mixer_roberta_forward.1} parent=0
    _
  %s29 = ssub.s32 1, %s27
  %s30 = scalar_select 0, %s29, %s27
  $region1: #{mlp_mixer_roberta_forward.1} parent=0
    #allocation3 [shape = 'u8[1024]{0}', space=vmem, size = 0x400, scoped, tag = 'output window, operand 0, single buffered']
    #allocation4 [shape = 's32[1]{0}', space=sflag, size = 0x4, scoped, tag = 'scoped memory for mlp_mixer_roberta_forward.1']
    %31 = vsyncpa [#allocation4], 0
    // Predicated region
    $region2: #{mlp_mixer_roberta_forward.1} parent=1 // pred_check
      _
    $region3: #{mlp_mixer_roberta_forward.1} parent=1 // pred_check_branch
      %33 = sbr.rel (0) target = $region5
    $region4: #{mlp_mixer_roberta_forward.1} parent=1 // pred_region
      _
    $region5: #{mlp_mixer_roberta_forward.1} parent=1 // pred_fallthru
      _
    // Predicated region
    $region6: #{mlp_mixer_roberta_forward.1} parent=1 // pred_check
      _
    $region7: #{mlp_mixer_roberta_forward.1} parent=1 // pred_check_branch
      %35 = sbr.rel (0) target = $region9
    $region8: #{mlp_mixer_roberta_forward.1} parent=1 // pred_region
      _
    $region9: #{mlp_mixer_roberta_forward.1} parent=1 // pred_fallthru
      _
    // Predicated region
    $region10: #{mlp_mixer_roberta_forward.1} parent=1 // pred_check
      _
    $region11: #{mlp_mixer_roberta_forward.1} parent=1 // pred_check_branch
      %37 = sbr.rel (0) target = $region13
    $region12: #{mlp_mixer_roberta_forward.1} parent=1 // pred_region
      _
    $region13: #{mlp_mixer_roberta_forward.1} parent=1 // pred_fallthru
      _
    // Predicated region
    $region14: #{mlp_mixer_roberta_forward.1} parent=1 // pred_check
      _
    $region15: #{mlp_mixer_roberta_forward.1} parent=1 // pred_check_branch
      %39 = sbr.rel (0) target = $region17
    $region16: #{mlp_mixer_roberta_forward.1} parent=1 // pred_region
      _
    $region17: #{mlp_mixer_roberta_forward.1} parent=1 // pred_fallthru
      _
    // Predicated region
    $region18: #{mlp_mixer_roberta_forward.1} parent=1 // pred_check
      _
    $region19: #{mlp_mixer_roberta_forward.1} parent=1 // pred_check_branch
      %41 = sbr.rel (0) target = $region21
    $region20: #{mlp_mixer_roberta_forward.1} parent=1 // pred_region
      _
    $region21: #{mlp_mixer_roberta_forward.1} parent=1 // pred_fallthru
      _
    // Predicated region
    $region22: #{mlp_mixer_roberta_forward.1} parent=1 // pred_check
      _
    $region23: #{mlp_mixer_roberta_forward.1} parent=1 // pred_check_branch
      %43 = sbr.rel (0) target = $region25
    $region24: #{mlp_mixer_roberta_forward.1} parent=1 // pred_region
      _
    $region25: #{mlp_mixer_roberta_forward.1} parent=1 // pred_fallthru
      _
    // Predicated region
    $region26: #{mlp_mixer_roberta_forward.1} parent=1 // pred_check
      _
    $region27: #{mlp_mixer_roberta_forward.1} parent=1 // pred_check_branch
      %45 = sbr.rel (0) target = $region29
    $region28: #{mlp_mixer_roberta_forward.1} parent=1 // pred_region
      _
    $region29: #{mlp_mixer_roberta_forward.1} parent=1 // pred_fallthru
      _
    // Predicated region
    $region30: #{mlp_mixer_roberta_forward.1} parent=1 // pred_check
      _
    $region31: #{mlp_mixer_roberta_forward.1} parent=1 // pred_check_branch
      %47 = sbr.rel (0) target = $region33
    $region32: #{mlp_mixer_roberta_forward.1} parent=1 // pred_region
      _
    $region33: #{mlp_mixer_roberta_forward.1} parent=1 // pred_fallthru
      _
    // Predicated region
    $region34: #{mlp_mixer_roberta_forward.1} parent=1 // pred_check
      _
    $region35: #{mlp_mixer_roberta_forward.1} parent=1 // pred_check_branch
      %49 = sbr.rel (0) target = $region37
    $region36: #{mlp_mixer_roberta_forward.1} parent=1 // pred_region
      _
    $region37: #{mlp_mixer_roberta_forward.1} parent=1 // pred_fallthru
      _
    // Predicated region
    $region38: #{mlp_mixer_roberta_forward.1} parent=1 // pred_check
      _
    $region39: #{mlp_mixer_roberta_forward.1} parent=1 // pred_check_branch
      %51 = sbr.rel (0) target = $region41
    $region40: #{mlp_mixer_roberta_forward.1} parent=1 // pred_region
      _
    $region41: #{mlp_mixer_roberta_forward.1} parent=1 // pred_fallthru
      _
    // Predicated region
    $region42: #{mlp_mixer_roberta_forward.1} parent=1 // pred_check
      _
    $region43: #{mlp_mixer_roberta_forward.1} parent=1 // pred_check_branch
      %53 = sbr.rel (0) target = $region45
    $region44: #{mlp_mixer_roberta_forward.1} parent=1 // pred_region
      _
    $region45: #{mlp_mixer_roberta_forward.1} parent=1 // pred_fallthru
      _
    // Predicated region
    $region46: #{mlp_mixer_roberta_forward.1} parent=1 // pred_check
      _
    $region47: #{mlp_mixer_roberta_forward.1} parent=1 // pred_check_branch
      %55 = sbr.rel (0) target = $region49
    $region48: #{mlp_mixer_roberta_forward.1} parent=1 // pred_region
      _
    $region49: #{mlp_mixer_roberta_forward.1} parent=1 // pred_fallthru
      _
    // Predicated region
    $region50: #{mlp_mixer_roberta_forward.1} parent=1 // pred_check
      _
    $region51: #{mlp_mixer_roberta_forward.1} parent=1 // pred_check_branch
      %57 = sbr.rel (0) target = $region53
    $region52: #{mlp_mixer_roberta_forward.1} parent=1 // pred_region
      _
    $region53: #{mlp_mixer_roberta_forward.1} parent=1 // pred_fallthru
      _
    // Predicated region
    $region54: #{mlp_mixer_roberta_forward.1} parent=1 // pred_check
      _
    $region55: #{mlp_mixer_roberta_forward.1} parent=1 // pred_check_branch
      %59 = sbr.rel (0) target = $region57
    $region56: #{mlp_mixer_roberta_forward.1} parent=1 // pred_region
      _
    $region57: #{mlp_mixer_roberta_forward.1} parent=1 // pred_fallthru
      _
    // Predicated region
    $region58: #{mlp_mixer_roberta_forward.1} parent=1 // pred_check
      _
    $region59: #{mlp_mixer_roberta_forward.1} parent=1 // pred_check_branch
      %61 = sbr.rel (0) target = $region61
    $region60: #{mlp_mixer_roberta_forward.1} parent=1 // pred_region
      _
    $region61: #{mlp_mixer_roberta_forward.1} parent=1 // pred_fallthru
      _
    // Predicated region
    $region62: #{mlp_mixer_roberta_forward.1} parent=1 // pred_check
      _
    $region63: #{mlp_mixer_roberta_forward.1} parent=1 // pred_check_branch
      %63 = sbr.rel (0) target = $region65
    $region64: #{mlp_mixer_roberta_forward.1} parent=1 // pred_region
      _
    $region65: #{mlp_mixer_roberta_forward.1} parent=1 // pred_fallthru
      _
    // Predicated region
    $region66: #{mlp_mixer_roberta_forward.1} parent=1 // pred_check
      _
    $region67: #{mlp_mixer_roberta_forward.1} parent=1 // pred_check_branch
      %65 = sbr.rel (0) target = $region69
    $region68: #{mlp_mixer_roberta_forward.1} parent=1 // pred_region
      _
    $region69: #{mlp_mixer_roberta_forward.1} parent=1 // pred_fallthru
      _
    // Predicated region
    $region70: #{mlp_mixer_roberta_forward.1} parent=1 // pred_check
      _
    $region71: #{mlp_mixer_roberta_forward.1} parent=1 // pred_check_branch
      %67 = sbr.rel (0) target = $region73
    $region72: #{mlp_mixer_roberta_forward.1} parent=1 // pred_region
      _
    $region73: #{mlp_mixer_roberta_forward.1} parent=1 // pred_fallthru
      _
    // Predicated region
    $region74: #{mlp_mixer_roberta_forward.1} parent=1 // pred_check
      _
    $region75: #{mlp_mixer_roberta_forward.1} parent=1 // pred_check_branch
      %69 = sbr.rel (0) target = $region77
    $region76: #{mlp_mixer_roberta_forward.1} parent=1 // pred_region
      _
    $region77: #{mlp_mixer_roberta_forward.1} parent=1 // pred_fallthru
      _
    // Predicated region
    $region78: #{mlp_mixer_roberta_forward.1} parent=1 // pred_check
      _
    $region79: #{mlp_mixer_roberta_forward.1} parent=1 // pred_check_branch
      %71 = sbr.rel (0) target = $region81
    $region80: #{mlp_mixer_roberta_forward.1} parent=1 // pred_region
      _
    $region81: #{mlp_mixer_roberta_forward.1} parent=1 // pred_fallthru
      _
    // Predicated region
    $region82: #{mlp_mixer_roberta_forward.1} parent=1 // pred_check
      _
    $region83: #{mlp_mixer_roberta_forward.1} parent=1 // pred_check_branch
      %73 = sbr.rel (0) target = $region85
    $region84: #{mlp_mixer_roberta_forward.1} parent=1 // pred_region
      _
    $region85: #{mlp_mixer_roberta_forward.1} parent=1 // pred_fallthru
      _
    // Predicated region
    $region86: #{mlp_mixer_roberta_forward.1} parent=1 // pred_check
      _
    $region87: #{mlp_mixer_roberta_forward.1} parent=1 // pred_check_branch
      %75 = sbr.rel (0) target = $region89
    $region88: #{mlp_mixer_roberta_forward.1} parent=1 // pred_region
      _
    $region89: #{mlp_mixer_roberta_forward.1} parent=1 // pred_fallthru
      _
    // Predicated region
    $region90: #{mlp_mixer_roberta_forward.1} parent=1 // pred_check
      _
    $region91: #{mlp_mixer_roberta_forward.1} parent=1 // pred_check_branch
      %77 = sbr.rel (0) target = $region93
    $region92: #{mlp_mixer_roberta_forward.1} parent=1 // pred_region
      _
    $region93: #{mlp_mixer_roberta_forward.1} parent=1 // pred_fallthru
      _
    // Predicated region
    $region94: #{mlp_mixer_roberta_forward.1} parent=1 // pred_check
      _
    $region95: #{mlp_mixer_roberta_forward.1} parent=1 // pred_check_branch
      %79 = sbr.rel (0) target = $region97
    $region96: #{mlp_mixer_roberta_forward.1} parent=1 // pred_region
      _
    $region97: #{mlp_mixer_roberta_forward.1} parent=1 // pred_fallthru
      _
    // Predicated region
    $region98: #{mlp_mixer_roberta_forward.1} parent=1 // pred_check
      _
    $region99: #{mlp_mixer_roberta_forward.1} parent=1 // pred_check_branch
      %81 = sbr.rel (0) target = $region101
    $region100: #{mlp_mixer_roberta_forward.1} parent=1 // pred_region
      _
    $region101: #{mlp_mixer_roberta_forward.1} parent=1 // pred_fallthru
      _
    // Predicated region
    $region102: #{mlp_mixer_roberta_forward.1} parent=1 // pred_check
      _
    $region103: #{mlp_mixer_roberta_forward.1} parent=1 // pred_check_branch
      %83 = sbr.rel (0) target = $region105
    $region104: #{mlp_mixer_roberta_forward.1} parent=1 // pred_region
      _
    $region105: #{mlp_mixer_roberta_forward.1} parent=1 // pred_fallthru
      _
    %v84 = vld [vmem:[%s0] sm:$0xff]
    %v85 = vld [vmem:[%s0 + $0x8] sm:$0xff]
    %v86 = vld [vmem:[%s3] sm:$0xff]
    %v87 = vld [vmem:[%s3 + $0x8] sm:$0xff]
    %v88 = vld [vmem:[%s3 + $0x10] sm:$0xff]
    %v89 = vld [vmem:[%s3 + $0x18] sm:$0xff]
    %v90 = vld [vmem:[%s3 + $0x20] sm:$0xff]
    %v91 = vld [vmem:[%s3 + $0x28] sm:$0xff]
    %v92 = vld [vmem:[%s3 + $0x30] sm:$0xff]
    %v93 = vld [vmem:[%s3 + $0x38] sm:$0xff]
    %v94 = vld [vmem:[%s4] sm:$0x1]
    %v96 = vperm.slane %v94, 0
    %vm98 = vcmask 523264
    %v100 = vsel %vm98, %v84, 0
    %v103 = vsel %vm98, %v85, 0
    %105 = vmatpush.msra.mxu0 0.0
    %106 = vmatpush.msra.mxu0 0.0
    %107 = vmatpush.msra.mxu0 0.0
    %108 = vmatpush.msra.mxu0 0.0
    %109 = vmatpush.msra.mxu0 0.0
    %110 = vmatpush.msra.mxu0 0.0
    %111 = vmatpush.msra.mxu0 0.0
    %112 = vmatpush.msra.mxu0 0.0
    %113 = vmatpush.msra.mxu0 %v93
    %114 = vmatpush.msra.mxu0 %v92
    %115 = vmatpush.msra.mxu0 %v91
    %116 = vmatpush.msra.mxu0 %v90
    %117 = vmatpush.msra.mxu0 %v89
    %118 = vmatpush.msra.mxu0 %v88
    %119 = vmatpush.msra.mxu0 %v87
    %120 = vmatpush.msra.mxu0 %v86
    %121 = vmatmul.f32.gmra.mxu0 %v100
    %v122 = vpop.f32.mrf.mxu0
    %v123 = vadd.f32 %v96, %v122
    %124 = vmatmul.f32.gmra.mxu0 %v103
    %v125 = vpop.f32.mrf.mxu0
    %v126 = vadd.f32 %v96, %v125
    %127 = vdwg.mxu0
    %v128 = vld [vmem:[%s1] sm:$0x3]
    %vm129 = vcmask 130048
    %v131 = vsel %vm129, %v128, 0
    %133 = vmatpush.msra.mxu0 0.0
    %134 = vmatpush.msra.mxu0 0.0
    %135 = vmatpush.msra.mxu0 0.0
    %136 = vmatpush.msra.mxu0 0.0
    %137 = vmatpush.msra.mxu0 0.0
    %138 = vmatpush.msra.mxu0 0.0
    %139 = vmatpush.msra.mxu0 0.0
    %140 = vmatpush.msra.mxu0 0.0
    %141 = vmatpush.msra.mxu0 0.0
    %142 = vmatpush.msra.mxu0 0.0
    %143 = vmatpush.msra.mxu0 0.0
    %144 = vmatpush.msra.mxu0 0.0
    %145 = vmatpush.msra.mxu0 0.0
    %146 = vmatpush.msra.mxu0 0.0
    %147 = vmatpush.msra.mxu0 %v126
    %148 = vmatpush.msra.mxu0 %v123
    %149 = vmatmul.f32.gmra.mxu0 %v131
    %v150 = vpop.f32.mrf.mxu0
    %v151 = vadd.f32 0.0, %v150
    %152 = vdwg.mxu0
    %v153 = vld [vmem:[%s2] sm:$0x3]
    %v154 = vld [vmem:[%s5] sm:$0xff]
    %v155 = vld [vmem:[%s5 + $0x8] sm:$0xff]
    %v156 = vld [vmem:[%s5 + $0x10] sm:$0xff]
    %v157 = vld [vmem:[%s5 + $0x18] sm:$0xff]
    %v158 = vld [vmem:[%s5 + $0x20] sm:$0xff]
    %v159 = vld [vmem:[%s5 + $0x28] sm:$0xff]
    %v160 = vld [vmem:[%s6] sm:$0x1]
    %v162 = vperm.slane %v160, 0
    %vm164 = vcmask 392192
    %v166 = vsel %vm164, %v153, 0
    %168 = vmatpush.msra.mxu0 0.0
    %169 = vmatpush.msra.mxu0 0.0
    %170 = vmatpush.msra.mxu0 0.0
    %171 = vmatpush.msra.mxu0 0.0
    %172 = vmatpush.msra.mxu0 0.0
    %173 = vmatpush.msra.mxu0 0.0
    %174 = vmatpush.msra.mxu0 0.0
    %175 = vmatpush.msra.mxu0 0.0
    %176 = vmatpush.msra.mxu0 0.0
    %177 = vmatpush.msra.mxu0 0.0
    %178 = vmatpush.msra.mxu0 %v159
    %179 = vmatpush.msra.mxu0 %v158
    %180 = vmatpush.msra.mxu0 %v157
    %181 = vmatpush.msra.mxu0 %v156
    %182 = vmatpush.msra.mxu0 %v155
    %183 = vmatpush.msra.mxu0 %v154
    %184 = vmatmul.f32.gmra.mxu0 %v166
    %v185 = vpop.f32.mrf.mxu0
    %v186 = vadd.f32 %v162, %v185
    %187 = vdwg.mxu0
    %v188 = vld [vmem:[%s7] sm:$0xff]
    %v189 = vld [vmem:[%s7 + $0x8] sm:$0xff]
    %v190 = vld [vmem:[%s7 + $0x10] sm:$0xff]
    %v191 = vld [vmem:[%s7 + $0x18] sm:$0xff]
    %v192 = vld [vmem:[%s7 + $0x20] sm:$0xff]
    %v193 = vld [vmem:[%s7 + $0x28] sm:$0xff]
    %v194 = vld [vmem:[%s7 + $0x30] sm:$0xff]
    %v195 = vld [vmem:[%s7 + $0x38] sm:$0xff]
    %v197 = vsel %vm129, %v186, 0
    %199 = vmatpush.msra.mxu0 0.0
    %200 = vmatpush.msra.mxu0 0.0
    %201 = vmatpush.msra.mxu0 0.0
    %202 = vmatpush.msra.mxu0 0.0
    %203 = vmatpush.msra.mxu0 0.0
    %204 = vmatpush.msra.mxu0 0.0
    %205 = vmatpush.msra.mxu0 0.0
    %206 = vmatpush.msra.mxu0 0.0
    %207 = vmatpush.msra.mxu0 0.0
    %208 = vmatpush.msra.mxu0 0.0
    %209 = vmatpush.msra.mxu0 0.0
    %210 = vmatpush.msra.mxu0 0.0
    %211 = vmatpush.msra.mxu0 0.0
    %212 = vmatpush.msra.mxu0 0.0
    %213 = vmatpush.msra.mxu0 %v192
    %214 = vmatpush.msra.mxu0 %v188
    %215 = vmatmul.f32.gmra.mxu0 %v197
    %v216 = vpop.f32.mrf.mxu0
    %v217 = vadd.f32 0.0, %v216
    %218 = vdwg.mxu0
    %219 = vmatpush.msra.mxu0 0.0
    %220 = vmatpush.msra.mxu0 0.0
    %221 = vmatpush.msra.mxu0 0.0
    %222 = vmatpush.msra.mxu0 0.0
    %223 = vmatpush.msra.mxu0 0.0
    %224 = vmatpush.msra.mxu0 0.0
    %225 = vmatpush.msra.mxu0 0.0
    %226 = vmatpush.msra.mxu0 0.0
    %227 = vmatpush.msra.mxu0 0.0
    %228 = vmatpush.msra.mxu0 0.0
    %229 = vmatpush.msra.mxu0 0.0
    %230 = vmatpush.msra.mxu0 0.0
    %231 = vmatpush.msra.mxu0 0.0
    %232 = vmatpush.msra.mxu0 0.0
    %233 = vmatpush.msra.mxu0 %v193
    %234 = vmatpush.msra.mxu0 %v189
    %235 = vmatmul.f32.gmra.mxu0 %v197
    %v236 = vpop.f32.mrf.mxu0
    %v237 = vadd.f32 0.0, %v236
    %238 = vdwg.mxu0
    %239 = vmatpush.msra.mxu0 0.0
    %240 = vmatpush.msra.mxu0 0.0
    %241 = vmatpush.msra.mxu0 0.0
    %242 = vmatpush.msra.mxu0 0.0
    %243 = vmatpush.msra.mxu0 0.0
    %244 = vmatpush.msra.mxu0 0.0
    %245 = vmatpush.msra.mxu0 0.0
    %246 = vmatpush.msra.mxu0 0.0
    %247 = vmatpush.msra.mxu0 0.0
    %248 = vmatpush.msra.mxu0 0.0
    %249 = vmatpush.msra.mxu0 0.0
    %250 = vmatpush.msra.mxu0 0.0
    %251 = vmatpush.msra.mxu0 0.0
    %252 = vmatpush.msra.mxu0 0.0
    %253 = vmatpush.msra.mxu0 %v194
    %254 = vmatpush.msra.mxu0 %v190
    %255 = vmatmul.f32.gmra.mxu0 %v197
    %v256 = vpop.f32.mrf.mxu0
    %v257 = vadd.f32 0.0, %v256
    %258 = vdwg.mxu0
    %259 = vmatpush.msra.mxu0 0.0
    %260 = vmatpush.msra.mxu0 0.0
    %261 = vmatpush.msra.mxu0 0.0
    %262 = vmatpush.msra.mxu0 0.0
    %263 = vmatpush.msra.mxu0 0.0
    %264 = vmatpush.msra.mxu0 0.0
    %265 = vmatpush.msra.mxu0 0.0
    %266 = vmatpush.msra.mxu0 0.0
    %267 = vmatpush.msra.mxu0 0.0
    %268 = vmatpush.msra.mxu0 0.0
    %269 = vmatpush.msra.mxu0 0.0
    %270 = vmatpush.msra.mxu0 0.0
    %271 = vmatpush.msra.mxu0 0.0
    %272 = vmatpush.msra.mxu0 0.0
    %273 = vmatpush.msra.mxu0 %v195
    %274 = vmatpush.msra.mxu0 %v191
    %275 = vmatmul.f32.gmra.mxu0 %v197
    %v276 = vpop.f32.mrf.mxu0
    %v277 = vadd.f32 0.0, %v276
    %278 = vdwg.mxu0
    %v279 = vld [vmem:[%s8] sm:$0x1]
    %281 = vset.pattern.permute.xlu0 0
    %282 = vperm.xlu0 %281, %v151
    %v283 = vpop.permute.xlu0 %282
    %v285 = vmul.f32 %v283, %v217
    %v287 = vperm.slane %v279, 0
    %v289 = vadd.f32 %v287, %v285
    %290 = vset.pattern.permute.xlu0 1
    %291 = vperm.xlu0 %290, %v151
    %v292 = vpop.permute.xlu0 %291
    %v294 = vmul.f32 %v292, %v217
    %296 = vrot.lane.b32.xlu0 %v294, 96
    %v297 = vpop.permute.xlu0 %296
    %v299 = vadd.f32 %v289, %v297
    %300 = vset.pattern.permute.xlu0 2
    %301 = vperm.xlu0 %300, %v151
    %v302 = vpop.permute.xlu0 %301
    %v304 = vmul.f32 %v302, %v217
    %306 = vrot.lane.b32.xlu0 %v304, 64
    %v307 = vpop.permute.xlu0 %306
    %v309 = vadd.f32 %v299, %v307
    %310 = vset.pattern.permute.xlu0 3
    %311 = vperm.xlu0 %310, %v151
    %v312 = vpop.permute.xlu0 %311
    %v314 = vmul.f32 %v312, %v217
    %316 = vrot.lane.b32.xlu0 %v314, 32
    %v317 = vpop.permute.xlu0 %316
    %v319 = vadd.f32 %v309, %v317
    %vm320 = vcmask 254976
    %321 = vst.msk [vmem:[#allocation2] sm:$0x3] %vm320, %v319
    %v322 = vmul.f32 %v283, %v237
    %v323 = vadd.f32 %v287, %v322
    %v324 = vmul.f32 %v292, %v237
    %326 = vrot.lane.b32.xlu0 %v324, 96
    %v327 = vpop.permute.xlu0 %326
    %v329 = vadd.f32 %v323, %v327
    %v330 = vmul.f32 %v302, %v237
    %332 = vrot.lane.b32.xlu0 %v330, 64
    %v333 = vpop.permute.xlu0 %332
    %v335 = vadd.f32 %v329, %v333
    %v336 = vmul.f32 %v312, %v237
    %338 = vrot.lane.b32.xlu0 %v336, 32
    %v339 = vpop.permute.xlu0 %338
    %v341 = vadd.f32 %v335, %v339
    %342 = vst.msk [vmem:[#allocation2 + $0x2] sm:$0x3] %vm320, %v341
    %v343 = vmul.f32 %v283, %v257
    %v344 = vadd.f32 %v287, %v343
    %v345 = vmul.f32 %v292, %v257
    %347 = vrot.lane.b32.xlu0 %v345, 96
    %v348 = vpop.permute.xlu0 %347
    %v350 = vadd.f32 %v344, %v348
    %v351 = vmul.f32 %v302, %v257
    %353 = vrot.lane.b32.xlu0 %v351, 64
    %v354 = vpop.permute.xlu0 %353
    %v356 = vadd.f32 %v350, %v354
    %v357 = vmul.f32 %v312, %v257
    %359 = vrot.lane.b32.xlu0 %v357, 32
    %v360 = vpop.permute.xlu0 %359
    %v362 = vadd.f32 %v356, %v360
    %363 = vst.msk [vmem:[#allocation2 + $0x4] sm:$0x3] %vm320, %v362
    %v364 = vmul.f32 %v283, %v277
    %v365 = vadd.f32 %v287, %v364
    %v366 = vmul.f32 %v292, %v277
    %368 = vrot.lane.b32.xlu0 %v366, 96
    %v369 = vpop.permute.xlu0 %368
    %v371 = vadd.f32 %v365, %v369
    %v372 = vmul.f32 %v302, %v277
    %374 = vrot.lane.b32.xlu0 %v372, 64
    %v375 = vpop.permute.xlu0 %374
    %v377 = vadd.f32 %v371, %v375
    %v378 = vmul.f32 %v312, %v277
    %380 = vrot.lane.b32.xlu0 %v378, 32
    %v381 = vpop.permute.xlu0 %380
    %v383 = vadd.f32 %v377, %v381
    %384 = vst.msk [vmem:[#allocation2 + $0x6] sm:$0x3] %vm320, %v383
    %385 = vset.pattern.permute.xlu0 4
    %386 = vperm.xlu0 %385, %v151
    %v387 = vpop.permute.xlu0 %386
    %v389 = vmul.f32 %v387, %v217
    %v390 = vadd.f32 %v287, %v389
    %391 = vset.pattern.permute.xlu0 5
    %392 = vperm.xlu0 %391, %v151
    %v393 = vpop.permute.xlu0 %392
    %v395 = vmul.f32 %v393, %v217
    %397 = vrot.lane.b32.xlu0 %v395, 96
    %v398 = vpop.permute.xlu0 %397
    %v400 = vadd.f32 %v390, %v398
    %401 = vset.pattern.permute.xlu0 6
    %402 = vperm.xlu0 %401, %v151
    %v403 = vpop.permute.xlu0 %402
    %v405 = vmul.f32 %v403, %v217
    %407 = vrot.lane.b32.xlu0 %v405, 64
    %v408 = vpop.permute.xlu0 %407
    %v410 = vadd.f32 %v400, %v408
    %411 = vset.pattern.permute.xlu0 7
    %412 = vperm.xlu0 %411, %v151
    %v413 = vpop.permute.xlu0 %412
    %v415 = vmul.f32 %v413, %v217
    %417 = vrot.lane.b32.xlu0 %v415, 32
    %v418 = vpop.permute.xlu0 %417
    %v420 = vadd.f32 %v410, %v418
    %421 = vst.msk [vmem:[#allocation2 + $0x8] sm:$0x3] %vm320, %v420
    %v422 = vmul.f32 %v387, %v237
    %v423 = vadd.f32 %v287, %v422
    %v424 = vmul.f32 %v393, %v237
    %426 = vrot.lane.b32.xlu0 %v424, 96
    %v427 = vpop.permute.xlu0 %426
    %v429 = vadd.f32 %v423, %v427
    %v430 = vmul.f32 %v403, %v237
    %432 = vrot.lane.b32.xlu0 %v430, 64
    %v433 = vpop.permute.xlu0 %432
    %v435 = vadd.f32 %v429, %v433
    %v436 = vmul.f32 %v413, %v237
    %438 = vrot.lane.b32.xlu0 %v436, 32
    %v439 = vpop.permute.xlu0 %438
    %v441 = vadd.f32 %v435, %v439
    %442 = vst.msk [vmem:[#allocation2 + $0xa] sm:$0x3] %vm320, %v441
    %v443 = vmul.f32 %v387, %v257
    %v444 = vadd.f32 %v287, %v443
    %v445 = vmul.f32 %v393, %v257
    %447 = vrot.lane.b32.xlu0 %v445, 96
    %v448 = vpop.permute.xlu0 %447
    %v450 = vadd.f32 %v444, %v448
    %v451 = vmul.f32 %v403, %v257
    %453 = vrot.lane.b32.xlu0 %v451, 64
    %v454 = vpop.permute.xlu0 %453
    %v456 = vadd.f32 %v450, %v454
    %v457 = vmul.f32 %v413, %v257
    %459 = vrot.lane.b32.xlu0 %v457, 32
    %v460 = vpop.permute.xlu0 %459
    %v462 = vadd.f32 %v456, %v460
    %463 = vst.msk [vmem:[#allocation2 + $0xc] sm:$0x3] %vm320, %v462
    %v464 = vmul.f32 %v387, %v277
    %v465 = vadd.f32 %v287, %v464
    %v466 = vmul.f32 %v393, %v277
    %468 = vrot.lane.b32.xlu0 %v466, 96
    %v469 = vpop.permute.xlu0 %468
    %v471 = vadd.f32 %v465, %v469
    %v472 = vmul.f32 %v403, %v277
    %474 = vrot.lane.b32.xlu0 %v472, 64
    %v475 = vpop.permute.xlu0 %474
    %v477 = vadd.f32 %v471, %v475
    %v478 = vmul.f32 %v413, %v277
    %480 = vrot.lane.b32.xlu0 %v478, 32
    %v481 = vpop.permute.xlu0 %480
    %v483 = vadd.f32 %v477, %v481
    %484 = vst.msk [vmem:[#allocation2 + $0xe] sm:$0x3] %vm320, %v483
    %485 = vset.pattern.permute.xlu0 8
    %486 = vperm.xlu0 %485, %v151
    %v487 = vpop.permute.xlu0 %486
    %v489 = vmul.f32 %v487, %v217
    %v490 = vadd.f32 %v287, %v489
    %491 = vset.pattern.permute.xlu0 9
    %492 = vperm.xlu0 %491, %v151
    %v493 = vpop.permute.xlu0 %492
    %v495 = vmul.f32 %v493, %v217
    %497 = vrot.lane.b32.xlu0 %v495, 96
    %v498 = vpop.permute.xlu0 %497
    %v500 = vadd.f32 %v490, %v498
    %501 = vset.pattern.permute.xlu0 10
    %502 = vperm.xlu0 %501, %v151
    %v503 = vpop.permute.xlu0 %502
    %v505 = vmul.f32 %v503, %v217
    %507 = vrot.lane.b32.xlu0 %v505, 64
    %v508 = vpop.permute.xlu0 %507
    %v510 = vadd.f32 %v500, %v508
    %511 = vset.pattern.permute.xlu0 11
    %512 = vperm.xlu0 %511, %v151
    %v513 = vpop.permute.xlu0 %512
    %v515 = vmul.f32 %v513, %v217
    %517 = vrot.lane.b32.xlu0 %v515, 32
    %v518 = vpop.permute.xlu0 %517
    %v520 = vadd.f32 %v510, %v518
    %521 = vst.msk [vmem:[#allocation2 + $0x10] sm:$0x3] %vm320, %v520
    %v522 = vmul.f32 %v487, %v237
    %v523 = vadd.f32 %v287, %v522
    %v524 = vmul.f32 %v493, %v237
    %526 = vrot.lane.b32.xlu0 %v524, 96
    %v527 = vpop.permute.xlu0 %526
    %v529 = vadd.f32 %v523, %v527
    %v530 = vmul.f32 %v503, %v237
    %532 = vrot.lane.b32.xlu0 %v530, 64
    %v533 = vpop.permute.xlu0 %532
    %v535 = vadd.f32 %v529, %v533
    %v536 = vmul.f32 %v513, %v237
    %538 = vrot.lane.b32.xlu0 %v536, 32
    %v539 = vpop.permute.xlu0 %538
    %v541 = vadd.f32 %v535, %v539
    %542 = vst.msk [vmem:[#allocation2 + $0x12] sm:$0x3] %vm320, %v541
    %v543 = vmul.f32 %v487, %v257
    %v544 = vadd.f32 %v287, %v543
    %v545 = vmul.f32 %v493, %v257
    %547 = vrot.lane.b32.xlu0 %v545, 96
    %v548 = vpop.permute.xlu0 %547
    %v550 = vadd.f32 %v544, %v548
    %v551 = vmul.f32 %v503, %v257
    %553 = vrot.lane.b32.xlu0 %v551, 64
    %v554 = vpop.permute.xlu0 %553
    %v556 = vadd.f32 %v550, %v554
    %v557 = vmul.f32 %v513, %v257
    %559 = vrot.lane.b32.xlu0 %v557, 32
    %v560 = vpop.permute.xlu0 %559
    %v562 = vadd.f32 %v556, %v560
    %563 = vst.msk [vmem:[#allocation2 + $0x14] sm:$0x3] %vm320, %v562
    %v564 = vmul.f32 %v487, %v277
    %v565 = vadd.f32 %v287, %v564
    %v566 = vmul.f32 %v493, %v277
    %568 = vrot.lane.b32.xlu0 %v566, 96
    %v569 = vpop.permute.xlu0 %568
    %v571 = vadd.f32 %v565, %v569
    %v572 = vmul.f32 %v503, %v277
    %574 = vrot.lane.b32.xlu0 %v572, 64
    %v575 = vpop.permute.xlu0 %574
    %v577 = vadd.f32 %v571, %v575
    %v578 = vmul.f32 %v513, %v277
    %580 = vrot.lane.b32.xlu0 %v578, 32
    %v581 = vpop.permute.xlu0 %580
    %v583 = vadd.f32 %v577, %v581
    %584 = vst.msk [vmem:[#allocation2 + $0x16] sm:$0x3] %vm320, %v583
    %585 = vset.pattern.permute.xlu0 12
    %586 = vperm.xlu0 %585, %v151
    %v587 = vpop.permute.xlu0 %586
    %v589 = vmul.f32 %v587, %v217
    %v590 = vadd.f32 %v287, %v589
    %591 = vset.pattern.permute.xlu0 13
    %592 = vperm.xlu0 %591, %v151
    %v593 = vpop.permute.xlu0 %592
    %v595 = vmul.f32 %v593, %v217
    %597 = vrot.lane.b32.xlu0 %v595, 96
    %v598 = vpop.permute.xlu0 %597
    %v600 = vadd.f32 %v590, %v598
    %601 = vset.pattern.permute.xlu0 14
    %602 = vperm.xlu0 %601, %v151
    %v603 = vpop.permute.xlu0 %602
    %v605 = vmul.f32 %v603, %v217
    %607 = vrot.lane.b32.xlu0 %v605, 64
    %v608 = vpop.permute.xlu0 %607
    %v610 = vadd.f32 %v600, %v608
    %611 = vset.pattern.permute.xlu0 15
    %612 = vperm.xlu0 %611, %v151
    %v613 = vpop.permute.xlu0 %612
    %v615 = vmul.f32 %v613, %v217
    %617 = vrot.lane.b32.xlu0 %v615, 32
    %v618 = vpop.permute.xlu0 %617
    %v620 = vadd.f32 %v610, %v618
    %621 = vst.msk [vmem:[#allocation2 + $0x18] sm:$0x3] %vm320, %v620
    %v622 = vmul.f32 %v587, %v237
    %v623 = vadd.f32 %v287, %v622
    %v624 = vmul.f32 %v593, %v237
    %626 = vrot.lane.b32.xlu0 %v624, 96
    %v627 = vpop.permute.xlu0 %626
    %v629 = vadd.f32 %v623, %v627
    %v630 = vmul.f32 %v603, %v237
    %632 = vrot.lane.b32.xlu0 %v630, 64
    %v633 = vpop.permute.xlu0 %632
    %v635 = vadd.f32 %v629, %v633
    %v636 = vmul.f32 %v613, %v237
    %638 = vrot.lane.b32.xlu0 %v636, 32
    %v639 = vpop.permute.xlu0 %638
    %v641 = vadd.f32 %v635, %v639
    %642 = vst.msk [vmem:[#allocation2 + $0x1a] sm:$0x3] %vm320, %v641
    %v643 = vmul.f32 %v587, %v257
    %v644 = vadd.f32 %v287, %v643
    %v645 = vmul.f32 %v593, %v257
    %647 = vrot.lane.b32.xlu0 %v645, 96
    %v648 = vpop.permute.xlu0 %647
    %v650 = vadd.f32 %v644, %v648
    %v651 = vmul.f32 %v603, %v257
    %653 = vrot.lane.b32.xlu0 %v651, 64
    %v654 = vpop.permute.xlu0 %653
    %v656 = vadd.f32 %v650, %v654
    %v657 = vmul.f32 %v613, %v257
    %659 = vrot.lane.b32.xlu0 %v657, 32
    %v660 = vpop.permute.xlu0 %659
    %v662 = vadd.f32 %v656, %v660
    %663 = vst.msk [vmem:[#allocation2 + $0x1c] sm:$0x3] %vm320, %v662
    %v664 = vmul.f32 %v587, %v277
    %v665 = vadd.f32 %v287, %v664
    %v666 = vmul.f32 %v593, %v277
    %668 = vrot.lane.b32.xlu0 %v666, 96
    %v669 = vpop.permute.xlu0 %668
    %v671 = vadd.f32 %v665, %v669
    %v672 = vmul.f32 %v603, %v277
    %674 = vrot.lane.b32.xlu0 %v672, 64
    %v675 = vpop.permute.xlu0 %674
    %v677 = vadd.f32 %v671, %v675
    %v678 = vmul.f32 %v613, %v277
    %680 = vrot.lane.b32.xlu0 %v678, 32
    %v681 = vpop.permute.xlu0 %680
    %v683 = vadd.f32 %v677, %v681
    %684 = vst.msk [vmem:[#allocation2 + $0x1e] sm:$0x3] %vm320, %v683
    %v685 = vld [vmem:[#allocation2] sm:$0xff]
    %v686 = vld [vmem:[#allocation2 + $0x8] sm:$0xff]
    %v687 = vld [vmem:[#allocation2 + $0x10] sm:$0xff]
    %v688 = vld [vmem:[#allocation2 + $0x18] sm:$0xff]
    %v689 = vld [vmem:[%s9] sm:$0x1]
    %v690 = vld [vmem:[%s10] sm:$0x1]
    %vm691 = vcmask 261120
    %v692 = vsel %vm691, %v685, 0.0
    %693 = vadd.xlane.f32.xlu0 %v692
    %v694 = vpop.xlane.xlu0 %693
    %v695 = vsel %vm691, %v686, 0.0
    %696 = vadd.xlane.f32.xlu0 %v695
    %v697 = vpop.xlane.xlu0 %696
    %v698 = vsel %vm691, %v687, 0.0
    %699 = vadd.xlane.f32.xlu0 %v698
    %v700 = vpop.xlane.xlu0 %699
    %v701 = vsel %vm691, %v688, 0.0
    %702 = vadd.xlane.f32.xlu0 %v701
    %v703 = vpop.xlane.xlu0 %702
    %v704 = vrcp.pop 32.0
    %v705 = vmul.f32 32.0, %v704
    %v706 = vsub.f32 1.0, %v705
    %v707 = vmul.f32 %v704, %v706
    %v708 = vadd.f32 %v704, %v707
    %vm709 = vweird.f32 %v704
    %v710 = vsel %vm709, %v704, %v708
    %v711 = vmul.f32 %v694, %v710
    %v712 = vmul.f32 %v697, %v710
    %v713 = vmul.f32 %v700, %v710
    %v714 = vmul.f32 %v703, %v710
    %v715 = vsub.f32 %v685, %v711
    %v716 = vsub.f32 %v686, %v712
    %v717 = vsub.f32 %v687, %v713
    %v718 = vsub.f32 %v688, %v714
    %v719 = vmul.f32 %v715, %v715
    %v720 = vmul.f32 %v716, %v716
    %v721 = vmul.f32 %v717, %v717
    %v722 = vmul.f32 %v718, %v718
    %v723 = vsel %vm691, %v719, 0.0
    %724 = vadd.xlane.f32.xlu0 %v723
    %v725 = vpop.xlane.xlu0 %724
    %v726 = vsel %vm691, %v720, 0.0
    %727 = vadd.xlane.f32.xlu0 %v726
    %v728 = vpop.xlane.xlu0 %727
    %v729 = vsel %vm691, %v721, 0.0
    %730 = vadd.xlane.f32.xlu0 %v729
    %v731 = vpop.xlane.xlu0 %730
    %v732 = vsel %vm691, %v722, 0.0
    %733 = vadd.xlane.f32.xlu0 %v732
    %v734 = vpop.xlane.xlu0 %733
    %v735 = vmul.f32 %v725, %v710
    %v736 = vmul.f32 %v728, %v710
    %v737 = vmul.f32 %v731, %v710
    %v738 = vmul.f32 %v734, %v710
    %v739 = vadd.f32 %v735, 1e-05
    %v740 = vadd.f32 %v736, 1e-05
    %v741 = vadd.f32 %v737, 1e-05
    %v742 = vadd.f32 %v738, 1e-05
    %v743 = vrsqrt.pop %v739
    %v744 = vmul.f32 %v743, %v739
    %v745 = vmul.f32 %v744, %v743
    %v746 = vmul.f32 0.5, %v745
    %v747 = vsub.f32 1.5, %v746
    %v748 = vmul.f32 %v743, %v747
    %vm749 = vweird.f32 %v739
    %vm750 = vweird.f32 %v743
    %vm751 = vmor %vm749, %vm750
    %v752 = vsel %vm751, %v743, %v748
    %v753 = vrsqrt.pop %v740
    %v754 = vmul.f32 %v753, %v740
    %v755 = vmul.f32 %v754, %v753
    %v756 = vmul.f32 0.5, %v755
    %v757 = vsub.f32 1.5, %v756
    %v758 = vmul.f32 %v753, %v757
    %vm759 = vweird.f32 %v740
    %vm760 = vweird.f32 %v753
    %vm761 = vmor %vm759, %vm760
    %v762 = vsel %vm761, %v753, %v758
    %v763 = vrsqrt.pop %v741
    %v764 = vmul.f32 %v763, %v741
    %v765 = vmul.f32 %v764, %v763
    %v766 = vmul.f32 0.5, %v765
    %v767 = vsub.f32 1.5, %v766
    %v768 = vmul.f32 %v763, %v767
    %vm769 = vweird.f32 %v741
    %vm770 = vweird.f32 %v763
    %vm771 = vmor %vm769, %vm770
    %v772 = vsel %vm771, %v763, %v768
    %v773 = vrsqrt.pop %v742
    %v774 = vmul.f32 %v773, %v742
    %v775 = vmul.f32 %v774, %v773
    %v776 = vmul.f32 0.5, %v775
    %v777 = vsub.f32 1.5, %v776
    %v778 = vmul.f32 %v773, %v777
    %vm779 = vweird.f32 %v742
    %vm780 = vweird.f32 %v773
    %vm781 = vmor %vm779, %vm780
    %v782 = vsel %vm781, %v773, %v778
    %v783 = vmul.f32 %v715, %v752
    %v784 = vmul.f32 %v716, %v762
    %v785 = vmul.f32 %v717, %v772
    %v786 = vmul.f32 %v718, %v782
    %v788 = vperm.slane %v689, 0
    %v790 = vmul.f32 %v783, %v788
    %v791 = vmul.f32 %v784, %v788
    %v792 = vmul.f32 %v785, %v788
    %v793 = vmul.f32 %v786, %v788
    %v795 = vperm.slane %v690, 0
    %v797 = vadd.f32 %v790, %v795
    %v798 = vadd.f32 %v791, %v795
    %v799 = vadd.f32 %v792, %v795
    %v800 = vadd.f32 %v793, %v795
    %v801 = vld [vmem:[%s11] sm:$0xff]
    %v802 = vld [vmem:[%s11 + $0x8] sm:$0xff]
    %v803 = vld [vmem:[%s11 + $0x10] sm:$0xff]
    %v804 = vld [vmem:[%s11 + $0x18] sm:$0xff]
    %v805 = vld [vmem:[%s11 + $0x20] sm:$0xff]
    %v806 = vld [vmem:[%s11 + $0x28] sm:$0xff]
    %v807 = vld [vmem:[%s11 + $0x30] sm:$0xff]
    %v808 = vld [vmem:[%s11 + $0x38] sm:$0xff]
    %v809 = vld [vmem:[%s11 + $0x40] sm:$0xff]
    %v810 = vld [vmem:[%s11 + $0x48] sm:$0xff]
    %v811 = vld [vmem:[%s11 + $0x50] sm:$0xff]
    %v812 = vld [vmem:[%s11 + $0x58] sm:$0xff]
    %v813 = vld [vmem:[%s11 + $0x60] sm:$0xff]
    %v814 = vld [vmem:[%s11 + $0x68] sm:$0xff]
    %v815 = vld [vmem:[%s11 + $0x70] sm:$0xff]
    %v816 = vld [vmem:[%s11 + $0x78] sm:$0xff]
    %v817 = vld [vmem:[%s12] sm:$0xff]
    %v818 = vld [vmem:[%s12 + $0x8] sm:$0xff]
    %v819 = vld [vmem:[%s12 + $0x10] sm:$0xff]
    %v820 = vld [vmem:[%s12 + $0x18] sm:$0xff]
    %v821 = vld [vmem:[%s12 + $0x20] sm:$0xff]
    %v822 = vld [vmem:[%s12 + $0x28] sm:$0xff]
    %v823 = vld [vmem:[%s12 + $0x30] sm:$0xff]
    %v824 = vld [vmem:[%s12 + $0x38] sm:$0xff]
    %v825 = vld [vmem:[%s12 + $0x40] sm:$0xff]
    %v826 = vld [vmem:[%s12 + $0x48] sm:$0xff]
    %v827 = vld [vmem:[%s12 + $0x50] sm:$0xff]
    %v828 = vld [vmem:[%s12 + $0x58] sm:$0xff]
    %v829 = vld [vmem:[%s12 + $0x60] sm:$0xff]
    %v830 = vld [vmem:[%s12 + $0x68] sm:$0xff]
    %v831 = vld [vmem:[%s12 + $0x70] sm:$0xff]
    %v832 = vld [vmem:[%s12 + $0x78] sm:$0xff]
    %834 = vset.pattern.permute.xlu0 0
    %835 = vperm.xlu0 %834, %v817
    %v836 = vpop.permute.xlu0 %835
    %839 = vset.pattern.permute.xlu0 0
    %840 = vperm.xlu0 %839, %v818
    %v841 = vpop.permute.xlu0 %840
    %844 = vset.pattern.permute.xlu0 0
    %845 = vperm.xlu0 %844, %v819
    %v846 = vpop.permute.xlu0 %845
    %849 = vset.pattern.permute.xlu0 0
    %850 = vperm.xlu0 %849, %v820
    %v851 = vpop.permute.xlu0 %850
    %854 = vset.pattern.permute.xlu0 0
    %855 = vperm.xlu0 %854, %v821
    %v856 = vpop.permute.xlu0 %855
    %859 = vset.pattern.permute.xlu0 0
    %860 = vperm.xlu0 %859, %v822
    %v861 = vpop.permute.xlu0 %860
    %864 = vset.pattern.permute.xlu0 0
    %865 = vperm.xlu0 %864, %v823
    %v866 = vpop.permute.xlu0 %865
    %869 = vset.pattern.permute.xlu0 0
    %870 = vperm.xlu0 %869, %v824
    %v871 = vpop.permute.xlu0 %870
    %874 = vset.pattern.permute.xlu0 0
    %875 = vperm.xlu0 %874, %v825
    %v876 = vpop.permute.xlu0 %875
    %879 = vset.pattern.permute.xlu0 0
    %880 = vperm.xlu0 %879, %v826
    %v881 = vpop.permute.xlu0 %880
    %884 = vset.pattern.permute.xlu0 0
    %885 = vperm.xlu0 %884, %v827
    %v886 = vpop.permute.xlu0 %885
    %889 = vset.pattern.permute.xlu0 0
    %890 = vperm.xlu0 %889, %v828
    %v891 = vpop.permute.xlu0 %890
    %894 = vset.pattern.permute.xlu0 0
    %895 = vperm.xlu0 %894, %v829
    %v896 = vpop.permute.xlu0 %895
    %899 = vset.pattern.permute.xlu0 0
    %900 = vperm.xlu0 %899, %v830
    %v901 = vpop.permute.xlu0 %900
    %904 = vset.pattern.permute.xlu0 0
    %905 = vperm.xlu0 %904, %v831
    %v906 = vpop.permute.xlu0 %905
    %909 = vset.pattern.permute.xlu0 0
    %910 = vperm.xlu0 %909, %v832
    %v911 = vpop.permute.xlu0 %910
    %v914 = vsel %vm691, %v801, 0
    %v917 = vsel %vm691, %v802, 0
    %v920 = vsel %vm691, %v803, 0
    %v923 = vsel %vm691, %v804, 0
    %v926 = vsel %vm691, %v805, 0
    %v929 = vsel %vm691, %v806, 0
    %v932 = vsel %vm691, %v807, 0
    %v935 = vsel %vm691, %v808, 0
    %v938 = vsel %vm691, %v809, 0
    %v941 = vsel %vm691, %v810, 0
    %v944 = vsel %vm691, %v811, 0
    %v947 = vsel %vm691, %v812, 0
    %v950 = vsel %vm691, %v813, 0
    %v953 = vsel %vm691, %v814, 0
    %v956 = vsel %vm691, %v815, 0
    %v959 = vsel %vm691, %v816, 0
    %961 = vmatpush.msra.mxu0 0.0
    %962 = vmatpush.msra.mxu0 0.0
    %963 = vmatpush.msra.mxu0 0.0
    %964 = vmatpush.msra.mxu0 0.0
    %965 = vmatpush.msra.mxu0 0.0
    %966 = vmatpush.msra.mxu0 0.0
    %967 = vmatpush.msra.mxu0 0.0
    %968 = vmatpush.msra.mxu0 0.0
    %969 = vmatpush.msra.mxu0 0.0
    %970 = vmatpush.msra.mxu0 0.0
    %971 = vmatpush.msra.mxu0 0.0
    %972 = vmatpush.msra.mxu0 0.0
    %973 = vmatpush.msra.mxu0 %v800
    %974 = vmatpush.msra.mxu0 %v799
    %975 = vmatpush.msra.mxu0 %v798
    %976 = vmatpush.msra.mxu0 %v797
    %977 = vmatmul.f32.gmra.mxu0 %v914
    %v978 = vpop.f32.mrf.mxu0
    %v979 = vadd.f32 %v836, %v978
    %980 = vmatmul.f32.gmra.mxu0 %v917
    %v981 = vpop.f32.mrf.mxu0
    %v982 = vadd.f32 %v841, %v981
    %983 = vmatmul.f32.gmra.mxu0 %v920
    %v984 = vpop.f32.mrf.mxu0
    %v985 = vadd.f32 %v846, %v984
    %986 = vmatmul.f32.gmra.mxu0 %v923
    %v987 = vpop.f32.mrf.mxu0
    %v988 = vadd.f32 %v851, %v987
    %989 = vmatmul.f32.gmra.mxu0 %v926
    %v990 = vpop.f32.mrf.mxu0
    %v991 = vadd.f32 %v856, %v990
    %992 = vmatmul.f32.gmra.mxu0 %v929
    %v993 = vpop.f32.mrf.mxu0
    %v994 = vadd.f32 %v861, %v993
    %995 = vmatmul.f32.gmra.mxu0 %v932
    %v996 = vpop.f32.mrf.mxu0
    %v997 = vadd.f32 %v866, %v996
    %998 = vmatmul.f32.gmra.mxu0 %v935
    %v999 = vpop.f32.mrf.mxu0
    %v1000 = vadd.f32 %v871, %v999
    %1001 = vmatmul.f32.gmra.mxu0 %v938
    %v1002 = vpop.f32.mrf.mxu0
    %v1003 = vadd.f32 %v876, %v1002
    %1004 = vmatmul.f32.gmra.mxu0 %v941
    %v1005 = vpop.f32.mrf.mxu0
    %v1006 = vadd.f32 %v881, %v1005
    %1007 = vmatmul.f32.gmra.mxu0 %v944
    %v1008 = vpop.f32.mrf.mxu0
    %v1009 = vadd.f32 %v886, %v1008
    %1010 = vmatmul.f32.gmra.mxu0 %v947
    %v1011 = vpop.f32.mrf.mxu0
    %v1012 = vadd.f32 %v891, %v1011
    %1013 = vmatmul.f32.gmra.mxu0 %v950
    %v1014 = vpop.f32.mrf.mxu0
    %v1015 = vadd.f32 %v896, %v1014
    %1016 = vmatmul.f32.gmra.mxu0 %v953
    %v1017 = vpop.f32.mrf.mxu0
    %v1018 = vadd.f32 %v901, %v1017
    %1019 = vmatmul.f32.gmra.mxu0 %v956
    %v1020 = vpop.f32.mrf.mxu0
    %v1021 = vadd.f32 %v906, %v1020
    %1022 = vmatmul.f32.gmra.mxu0 %v959
    %v1023 = vpop.f32.mrf.mxu0
    %v1024 = vadd.f32 %v911, %v1023
    %1025 = vdwg.mxu0
    %v1026 = vmul.f32 %v979, 0.5
    %v1027 = vmul.f32 %v982, 0.5
    %v1028 = vmul.f32 %v985, 0.5
    %v1029 = vmul.f32 %v988, 0.5
    %v1030 = vmul.f32 %v991, 0.5
    %v1031 = vmul.f32 %v994, 0.5
    %v1032 = vmul.f32 %v997, 0.5
    %v1033 = vmul.f32 %v1000, 0.5
    %v1034 = vmul.f32 %v1003, 0.5
    %v1035 = vmul.f32 %v1006, 0.5
    %v1036 = vmul.f32 %v1009, 0.5
    %v1037 = vmul.f32 %v1012, 0.5
    %v1038 = vmul.f32 %v1015, 0.5
    %v1039 = vmul.f32 %v1018, 0.5
    %v1040 = vmul.f32 %v1021, 0.5
    %v1041 = vmul.f32 %v1024, 0.5
    %v1042 = vmul.f32 %v979, 0.70710677
    %v1043 = vmul.f32 %v982, 0.70710677
    %v1044 = vmul.f32 %v985, 0.70710677
    %v1045 = vmul.f32 %v988, 0.70710677
    %v1046 = vmul.f32 %v991, 0.70710677
    %v1047 = vmul.f32 %v994, 0.70710677
    %v1048 = vmul.f32 %v997, 0.70710677
    %v1049 = vmul.f32 %v1000, 0.70710677
    %v1050 = vmul.f32 %v1003, 0.70710677
    %v1051 = vmul.f32 %v1006, 0.70710677
    %v1052 = vmul.f32 %v1009, 0.70710677
    %v1053 = vmul.f32 %v1012, 0.70710677
    %v1054 = vmul.f32 %v1015, 0.70710677
    %v1055 = vmul.f32 %v1018, 0.70710677
    %v1056 = vmul.f32 %v1021, 0.70710677
    %v1057 = vmul.f32 %v1024, 0.70710677
    %v1058 = vmul.f32 %v1042, %v1042
    %v1059 = vmin.f32 16.0, %v1058
    %v1060 = vmul.f32 %v1059, 2.1237322e-06
    %v1061 = vadd.f32 %v1060, 0.00028619796
    %v1062 = vmul.f32 %v1059, %v1061
    %v1063 = vadd.f32 %v1062, 0.0036580483
    %v1064 = vmul.f32 %v1059, %v1063
    %v1065 = vadd.f32 %v1064, 0.05243302
    %v1066 = vmul.f32 %v1059, %v1065
    %v1067 = vadd.f32 %v1066, 0.18741608
    %v1068 = vmul.f32 %v1059, %v1067
    %v1069 = vadd.f32 %v1068, 1.1283791
    %v1070 = vmul.f32 %v1042, %v1069
    %v1071 = vmul.f32 %v1059, 3.8918573e-05
    %v1072 = vadd.f32 %v1071, 0.001143296
    %v1073 = vmul.f32 %v1059, %v1072
    %v1074 = vadd.f32 %v1073, 0.014752088
    %v1075 = vmul.f32 %v1059, %v1074
    %v1076 = vadd.f32 %v1075, 0.112945676
    %v1077 = vmul.f32 %v1059, %v1076
    %v1078 = vadd.f32 %v1077, 0.4994258
    %v1079 = vmul.f32 %v1059, %v1078
    %v1080 = vadd.f32 %v1079, 1.0
    %v1081 = vrcp.pop %v1080
    %v1082 = vmul.f32 %v1080, %v1081
    %v1083 = vsub.f32 1.0, %v1082
    %v1084 = vmul.f32 %v1081, %v1083
    %v1085 = vadd.f32 %v1081, %v1084
    %vm1086 = vweird.f32 %v1080
    %vm1087 = vweird.f32 %v1081
    %vm1088 = vmor %vm1086, %vm1087
    %v1089 = vsel %vm1088, %v1081, %v1085
    %v1090 = vand.u32 2147483647, %v1080
    %vm1091 = vcmp.eq.f32.partialorder %v1090, 8.507059e+37
    %v1092 = vand.u32 %v1080, 2147483648
    %v1093 = vor.u32 1.1754944e-38, %v1092
    %v1094 = vsel %vm1091, %v1093, %v1089
    %v1095 = vmul.f32 %v1070, %v1094
    %v1096 = vmin.f32 %v1095, 1.0
    %v1097 = vmax.f32 %v1096, -1.0
    %v1098 = vmul.f32 %v1043, %v1043
    %v1099 = vmin.f32 16.0, %v1098
    %v1100 = vmul.f32 %v1099, 2.1237322e-06
    %v1101 = vadd.f32 %v1100, 0.00028619796
    %v1102 = vmul.f32 %v1099, %v1101
    %v1103 = vadd.f32 %v1102, 0.0036580483
    %v1104 = vmul.f32 %v1099, %v1103
    %v1105 = vadd.f32 %v1104, 0.05243302
    %v1106 = vmul.f32 %v1099, %v1105
    %v1107 = vadd.f32 %v1106, 0.18741608
    %v1108 = vmul.f32 %v1099, %v1107
    %v1109 = vadd.f32 %v1108, 1.1283791
    %v1110 = vmul.f32 %v1043, %v1109
    %v1111 = vmul.f32 %v1099, 3.8918573e-05
    %v1112 = vadd.f32 %v1111, 0.001143296
    %v1113 = vmul.f32 %v1099, %v1112
    %v1114 = vadd.f32 %v1113, 0.014752088
    %v1115 = vmul.f32 %v1099, %v1114
    %v1116 = vadd.f32 %v1115, 0.112945676
    %v1117 = vmul.f32 %v1099, %v1116
    %v1118 = vadd.f32 %v1117, 0.4994258
    %v1119 = vmul.f32 %v1099, %v1118
    %v1120 = vadd.f32 %v1119, 1.0
    %v1121 = vrcp.pop %v1120
    %v1122 = vmul.f32 %v1120, %v1121
    %v1123 = vsub.f32 1.0, %v1122
    %v1124 = vmul.f32 %v1121, %v1123
    %v1125 = vadd.f32 %v1121, %v1124
    %vm1126 = vweird.f32 %v1120
    %vm1127 = vweird.f32 %v1121
    %vm1128 = vmor %vm1126, %vm1127
    %v1129 = vsel %vm1128, %v1121, %v1125
    %v1130 = vand.u32 2147483647, %v1120
    %vm1131 = vcmp.eq.f32.partialorder %v1130, 8.507059e+37
    %v1132 = vand.u32 %v1120, 2147483648
    %v1133 = vor.u32 1.1754944e-38, %v1132
    %v1134 = vsel %vm1131, %v1133, %v1129
    %v1135 = vmul.f32 %v1110, %v1134
    %v1136 = vmin.f32 %v1135, 1.0
    %v1137 = vmax.f32 %v1136, -1.0
    %v1138 = vmul.f32 %v1044, %v1044
    %v1139 = vmin.f32 16.0, %v1138
    %v1140 = vmul.f32 %v1139, 2.1237322e-06
    %v1141 = vadd.f32 %v1140, 0.00028619796
    %v1142 = vmul.f32 %v1139, %v1141
    %v1143 = vadd.f32 %v1142, 0.0036580483
    %v1144 = vmul.f32 %v1139, %v1143
    %v1145 = vadd.f32 %v1144, 0.05243302
    %v1146 = vmul.f32 %v1139, %v1145
    %v1147 = vadd.f32 %v1146, 0.18741608
    %v1148 = vmul.f32 %v1139, %v1147
    %v1149 = vadd.f32 %v1148, 1.1283791
    %v1150 = vmul.f32 %v1044, %v1149
    %v1151 = vmul.f32 %v1139, 3.8918573e-05
    %v1152 = vadd.f32 %v1151, 0.001143296
    %v1153 = vmul.f32 %v1139, %v1152
    %v1154 = vadd.f32 %v1153, 0.014752088
    %v1155 = vmul.f32 %v1139, %v1154
    %v1156 = vadd.f32 %v1155, 0.112945676
    %v1157 = vmul.f32 %v1139, %v1156
    %v1158 = vadd.f32 %v1157, 0.4994258
    %v1159 = vmul.f32 %v1139, %v1158
    %v1160 = vadd.f32 %v1159, 1.0
    %v1161 = vrcp.pop %v1160
    %v1162 = vmul.f32 %v1160, %v1161
    %v1163 = vsub.f32 1.0, %v1162
    %v1164 = vmul.f32 %v1161, %v1163
    %v1165 = vadd.f32 %v1161, %v1164
    %vm1166 = vweird.f32 %v1160
    %vm1167 = vweird.f32 %v1161
    %vm1168 = vmor %vm1166, %vm1167
    %v1169 = vsel %vm1168, %v1161, %v1165
    %v1170 = vand.u32 2147483647, %v1160
    %vm1171 = vcmp.eq.f32.partialorder %v1170, 8.507059e+37
    %v1172 = vand.u32 %v1160, 2147483648
    %v1173 = vor.u32 1.1754944e-38, %v1172
    %v1174 = vsel %vm1171, %v1173, %v1169
    %v1175 = vmul.f32 %v1150, %v1174
    %v1176 = vmin.f32 %v1175, 1.0
    %v1177 = vmax.f32 %v1176, -1.0
    %v1178 = vmul.f32 %v1045, %v1045
    %v1179 = vmin.f32 16.0, %v1178
    %v1180 = vmul.f32 %v1179, 2.1237322e-06
    %v1181 = vadd.f32 %v1180, 0.00028619796
    %v1182 = vmul.f32 %v1179, %v1181
    %v1183 = vadd.f32 %v1182, 0.0036580483
    %v1184 = vmul.f32 %v1179, %v1183
    %v1185 = vadd.f32 %v1184, 0.05243302
    %v1186 = vmul.f32 %v1179, %v1185
    %v1187 = vadd.f32 %v1186, 0.18741608
    %v1188 = vmul.f32 %v1179, %v1187
    %v1189 = vadd.f32 %v1188, 1.1283791
    %v1190 = vmul.f32 %v1045, %v1189
    %v1191 = vmul.f32 %v1179, 3.8918573e-05
    %v1192 = vadd.f32 %v1191, 0.001143296
    %v1193 = vmul.f32 %v1179, %v1192
    %v1194 = vadd.f32 %v1193, 0.014752088
    %v1195 = vmul.f32 %v1179, %v1194
    %v1196 = vadd.f32 %v1195, 0.112945676
    %v1197 = vmul.f32 %v1179, %v1196
    %v1198 = vadd.f32 %v1197, 0.4994258
    %v1199 = vmul.f32 %v1179, %v1198
    %v1200 = vadd.f32 %v1199, 1.0
    %v1201 = vrcp.pop %v1200
    %v1202 = vmul.f32 %v1200, %v1201
    %v1203 = vsub.f32 1.0, %v1202
    %v1204 = vmul.f32 %v1201, %v1203
    %v1205 = vadd.f32 %v1201, %v1204
    %vm1206 = vweird.f32 %v1200
    %vm1207 = vweird.f32 %v1201
    %vm1208 = vmor %vm1206, %vm1207
    %v1209 = vsel %vm1208, %v1201, %v1205
    %v1210 = vand.u32 2147483647, %v1200
    %vm1211 = vcmp.eq.f32.partialorder %v1210, 8.507059e+37
    %v1212 = vand.u32 %v1200, 2147483648
    %v1213 = vor.u32 1.1754944e-38, %v1212
    %v1214 = vsel %vm1211, %v1213, %v1209
    %v1215 = vmul.f32 %v1190, %v1214
    %v1216 = vmin.f32 %v1215, 1.0
    %v1217 = vmax.f32 %v1216, -1.0
    %v1218 = vmul.f32 %v1046, %v1046
    %v1219 = vmin.f32 16.0, %v1218
    %v1220 = vmul.f32 %v1219, 2.1237322e-06
    %v1221 = vadd.f32 %v1220, 0.00028619796
    %v1222 = vmul.f32 %v1219, %v1221
    %v1223 = vadd.f32 %v1222, 0.0036580483
    %v1224 = vmul.f32 %v1219, %v1223
    %v1225 = vadd.f32 %v1224, 0.05243302
    %v1226 = vmul.f32 %v1219, %v1225
    %v1227 = vadd.f32 %v1226, 0.18741608
    %v1228 = vmul.f32 %v1219, %v1227
    %v1229 = vadd.f32 %v1228, 1.1283791
    %v1230 = vmul.f32 %v1046, %v1229
    %v1231 = vmul.f32 %v1219, 3.8918573e-05
    %v1232 = vadd.f32 %v1231, 0.001143296
    %v1233 = vmul.f32 %v1219, %v1232
    %v1234 = vadd.f32 %v1233, 0.014752088
    %v1235 = vmul.f32 %v1219, %v1234
    %v1236 = vadd.f32 %v1235, 0.112945676
    %v1237 = vmul.f32 %v1219, %v1236
    %v1238 = vadd.f32 %v1237, 0.4994258
    %v1239 = vmul.f32 %v1219, %v1238
    %v1240 = vadd.f32 %v1239, 1.0
    %v1241 = vrcp.pop %v1240
    %v1242 = vmul.f32 %v1240, %v1241
    %v1243 = vsub.f32 1.0, %v1242
    %v1244 = vmul.f32 %v1241, %v1243
    %v1245 = vadd.f32 %v1241, %v1244
    %vm1246 = vweird.f32 %v1240
    %vm1247 = vweird.f32 %v1241
    %vm1248 = vmor %vm1246, %vm1247
    %v1249 = vsel %vm1248, %v1241, %v1245
    %v1250 = vand.u32 2147483647, %v1240
    %vm1251 = vcmp.eq.f32.partialorder %v1250, 8.507059e+37
    %v1252 = vand.u32 %v1240, 2147483648
    %v1253 = vor.u32 1.1754944e-38, %v1252
    %v1254 = vsel %vm1251, %v1253, %v1249
    %v1255 = vmul.f32 %v1230, %v1254
    %v1256 = vmin.f32 %v1255, 1.0
    %v1257 = vmax.f32 %v1256, -1.0
    %v1258 = vmul.f32 %v1047, %v1047
    %v1259 = vmin.f32 16.0, %v1258
    %v1260 = vmul.f32 %v1259, 2.1237322e-06
    %v1261 = vadd.f32 %v1260, 0.00028619796
    %v1262 = vmul.f32 %v1259, %v1261
    %v1263 = vadd.f32 %v1262, 0.0036580483
    %v1264 = vmul.f32 %v1259, %v1263
    %v1265 = vadd.f32 %v1264, 0.05243302
    %v1266 = vmul.f32 %v1259, %v1265
    %v1267 = vadd.f32 %v1266, 0.18741608
    %v1268 = vmul.f32 %v1259, %v1267
    %v1269 = vadd.f32 %v1268, 1.1283791
    %v1270 = vmul.f32 %v1047, %v1269
    %v1271 = vmul.f32 %v1259, 3.8918573e-05
    %v1272 = vadd.f32 %v1271, 0.001143296
    %v1273 = vmul.f32 %v1259, %v1272
    %v1274 = vadd.f32 %v1273, 0.014752088
    %v1275 = vmul.f32 %v1259, %v1274
    %v1276 = vadd.f32 %v1275, 0.112945676
    %v1277 = vmul.f32 %v1259, %v1276
    %v1278 = vadd.f32 %v1277, 0.4994258
    %v1279 = vmul.f32 %v1259, %v1278
    %v1280 = vadd.f32 %v1279, 1.0
    %v1281 = vrcp.pop %v1280
    %v1282 = vmul.f32 %v1280, %v1281
    %v1283 = vsub.f32 1.0, %v1282
    %v1284 = vmul.f32 %v1281, %v1283
    %v1285 = vadd.f32 %v1281, %v1284
    %vm1286 = vweird.f32 %v1280
    %vm1287 = vweird.f32 %v1281
    %vm1288 = vmor %vm1286, %vm1287
    %v1289 = vsel %vm1288, %v1281, %v1285
    %v1290 = vand.u32 2147483647, %v1280
    %vm1291 = vcmp.eq.f32.partialorder %v1290, 8.507059e+37
    %v1292 = vand.u32 %v1280, 2147483648
    %v1293 = vor.u32 1.1754944e-38, %v1292
    %v1294 = vsel %vm1291, %v1293, %v1289
    %v1295 = vmul.f32 %v1270, %v1294
    %v1296 = vmin.f32 %v1295, 1.0
    %v1297 = vmax.f32 %v1296, -1.0
    %v1298 = vmul.f32 %v1048, %v1048
    %v1299 = vmin.f32 16.0, %v1298
    %v1300 = vmul.f32 %v1299, 2.1237322e-06
    %v1301 = vadd.f32 %v1300, 0.00028619796
    %v1302 = vmul.f32 %v1299, %v1301
    %v1303 = vadd.f32 %v1302, 0.0036580483
    %v1304 = vmul.f32 %v1299, %v1303
    %v1305 = vadd.f32 %v1304, 0.05243302
    %v1306 = vmul.f32 %v1299, %v1305
    %v1307 = vadd.f32 %v1306, 0.18741608
    %v1308 = vmul.f32 %v1299, %v1307
    %v1309 = vadd.f32 %v1308, 1.1283791
    %v1310 = vmul.f32 %v1048, %v1309
    %v1311 = vmul.f32 %v1299, 3.8918573e-05
    %v1312 = vadd.f32 %v1311, 0.001143296
    %v1313 = vmul.f32 %v1299, %v1312
    %v1314 = vadd.f32 %v1313, 0.014752088
    %v1315 = vmul.f32 %v1299, %v1314
    %v1316 = vadd.f32 %v1315, 0.112945676
    %v1317 = vmul.f32 %v1299, %v1316
    %v1318 = vadd.f32 %v1317, 0.4994258
    %v1319 = vmul.f32 %v1299, %v1318
    %v1320 = vadd.f32 %v1319, 1.0
    %v1321 = vrcp.pop %v1320
    %v1322 = vmul.f32 %v1320, %v1321
    %v1323 = vsub.f32 1.0, %v1322
    %v1324 = vmul.f32 %v1321, %v1323
    %v1325 = vadd.f32 %v1321, %v1324
    %vm1326 = vweird.f32 %v1320
    %vm1327 = vweird.f32 %v1321
    %vm1328 = vmor %vm1326, %vm1327
    %v1329 = vsel %vm1328, %v1321, %v1325
    %v1330 = vand.u32 2147483647, %v1320
    %vm1331 = vcmp.eq.f32.partialorder %v1330, 8.507059e+37
    %v1332 = vand.u32 %v1320, 2147483648
    %v1333 = vor.u32 1.1754944e-38, %v1332
    %v1334 = vsel %vm1331, %v1333, %v1329
    %v1335 = vmul.f32 %v1310, %v1334
    %v1336 = vmin.f32 %v1335, 1.0
    %v1337 = vmax.f32 %v1336, -1.0
    %v1338 = vmul.f32 %v1049, %v1049
    %v1339 = vmin.f32 16.0, %v1338
    %v1340 = vmul.f32 %v1339, 2.1237322e-06
    %v1341 = vadd.f32 %v1340, 0.00028619796
    %v1342 = vmul.f32 %v1339, %v1341
    %v1343 = vadd.f32 %v1342, 0.0036580483
    %v1344 = vmul.f32 %v1339, %v1343
    %v1345 = vadd.f32 %v1344, 0.05243302
    %v1346 = vmul.f32 %v1339, %v1345
    %v1347 = vadd.f32 %v1346, 0.18741608
    %v1348 = vmul.f32 %v1339, %v1347
    %v1349 = vadd.f32 %v1348, 1.1283791
    %v1350 = vmul.f32 %v1049, %v1349
    %v1351 = vmul.f32 %v1339, 3.8918573e-05
    %v1352 = vadd.f32 %v1351, 0.001143296
    %v1353 = vmul.f32 %v1339, %v1352
    %v1354 = vadd.f32 %v1353, 0.014752088
    %v1355 = vmul.f32 %v1339, %v1354
    %v1356 = vadd.f32 %v1355, 0.112945676
    %v1357 = vmul.f32 %v1339, %v1356
    %v1358 = vadd.f32 %v1357, 0.4994258
    %v1359 = vmul.f32 %v1339, %v1358
    %v1360 = vadd.f32 %v1359, 1.0
    %v1361 = vrcp.pop %v1360
    %v1362 = vmul.f32 %v1360, %v1361
    %v1363 = vsub.f32 1.0, %v1362
    %v1364 = vmul.f32 %v1361, %v1363
    %v1365 = vadd.f32 %v1361, %v1364
    %vm1366 = vweird.f32 %v1360
    %vm1367 = vweird.f32 %v1361
    %vm1368 = vmor %vm1366, %vm1367
    %v1369 = vsel %vm1368, %v1361, %v1365
    %v1370 = vand.u32 2147483647, %v1360
    %vm1371 = vcmp.eq.f32.partialorder %v1370, 8.507059e+37
    %v1372 = vand.u32 %v1360, 2147483648
    %v1373 = vor.u32 1.1754944e-38, %v1372
    %v1374 = vsel %vm1371, %v1373, %v1369
    %v1375 = vmul.f32 %v1350, %v1374
    %v1376 = vmin.f32 %v1375, 1.0
    %v1377 = vmax.f32 %v1376, -1.0
    %v1378 = vmul.f32 %v1050, %v1050
    %v1379 = vmin.f32 16.0, %v1378
    %v1380 = vmul.f32 %v1379, 2.1237322e-06
    %v1381 = vadd.f32 %v1380, 0.00028619796
    %v1382 = vmul.f32 %v1379, %v1381
    %v1383 = vadd.f32 %v1382, 0.0036580483
    %v1384 = vmul.f32 %v1379, %v1383
    %v1385 = vadd.f32 %v1384, 0.05243302
    %v1386 = vmul.f32 %v1379, %v1385
    %v1387 = vadd.f32 %v1386, 0.18741608
    %v1388 = vmul.f32 %v1379, %v1387
    %v1389 = vadd.f32 %v1388, 1.1283791
    %v1390 = vmul.f32 %v1050, %v1389
    %v1391 = vmul.f32 %v1379, 3.8918573e-05
    %v1392 = vadd.f32 %v1391, 0.001143296
    %v1393 = vmul.f32 %v1379, %v1392
    %v1394 = vadd.f32 %v1393, 0.014752088
    %v1395 = vmul.f32 %v1379, %v1394
    %v1396 = vadd.f32 %v1395, 0.112945676
    %v1397 = vmul.f32 %v1379, %v1396
    %v1398 = vadd.f32 %v1397, 0.4994258
    %v1399 = vmul.f32 %v1379, %v1398
    %v1400 = vadd.f32 %v1399, 1.0
    %v1401 = vrcp.pop %v1400
    %v1402 = vmul.f32 %v1400, %v1401
    %v1403 = vsub.f32 1.0, %v1402
    %v1404 = vmul.f32 %v1401, %v1403
    %v1405 = vadd.f32 %v1401, %v1404
    %vm1406 = vweird.f32 %v1400
    %vm1407 = vweird.f32 %v1401
    %vm1408 = vmor %vm1406, %vm1407
    %v1409 = vsel %vm1408, %v1401, %v1405
    %v1410 = vand.u32 2147483647, %v1400
    %vm1411 = vcmp.eq.f32.partialorder %v1410, 8.507059e+37
    %v1412 = vand.u32 %v1400, 2147483648
    %v1413 = vor.u32 1.1754944e-38, %v1412
    %v1414 = vsel %vm1411, %v1413, %v1409
    %v1415 = vmul.f32 %v1390, %v1414
    %v1416 = vmin.f32 %v1415, 1.0
    %v1417 = vmax.f32 %v1416, -1.0
    %v1418 = vmul.f32 %v1051, %v1051
    %v1419 = vmin.f32 16.0, %v1418
    %v1420 = vmul.f32 %v1419, 2.1237322e-06
    %v1421 = vadd.f32 %v1420, 0.00028619796
    %v1422 = vmul.f32 %v1419, %v1421
    %v1423 = vadd.f32 %v1422, 0.0036580483
    %v1424 = vmul.f32 %v1419, %v1423
    %v1425 = vadd.f32 %v1424, 0.05243302
    %v1426 = vmul.f32 %v1419, %v1425
    %v1427 = vadd.f32 %v1426, 0.18741608
    %v1428 = vmul.f32 %v1419, %v1427
    %v1429 = vadd.f32 %v1428, 1.1283791
    %v1430 = vmul.f32 %v1051, %v1429
    %v1431 = vmul.f32 %v1419, 3.8918573e-05
    %v1432 = vadd.f32 %v1431, 0.001143296
    %v1433 = vmul.f32 %v1419, %v1432
    %v1434 = vadd.f32 %v1433, 0.014752088
    %v1435 = vmul.f32 %v1419, %v1434
    %v1436 = vadd.f32 %v1435, 0.112945676
    %v1437 = vmul.f32 %v1419, %v1436
    %v1438 = vadd.f32 %v1437, 0.4994258
    %v1439 = vmul.f32 %v1419, %v1438
    %v1440 = vadd.f32 %v1439, 1.0
    %v1441 = vrcp.pop %v1440
    %v1442 = vmul.f32 %v1440, %v1441
    %v1443 = vsub.f32 1.0, %v1442
    %v1444 = vmul.f32 %v1441, %v1443
    %v1445 = vadd.f32 %v1441, %v1444
    %vm1446 = vweird.f32 %v1440
    %vm1447 = vweird.f32 %v1441
    %vm1448 = vmor %vm1446, %vm1447
    %v1449 = vsel %vm1448, %v1441, %v1445
    %v1450 = vand.u32 2147483647, %v1440
    %vm1451 = vcmp.eq.f32.partialorder %v1450, 8.507059e+37
    %v1452 = vand.u32 %v1440, 2147483648
    %v1453 = vor.u32 1.1754944e-38, %v1452
    %v1454 = vsel %vm1451, %v1453, %v1449
    %v1455 = vmul.f32 %v1430, %v1454
    %v1456 = vmin.f32 %v1455, 1.0
    %v1457 = vmax.f32 %v1456, -1.0
    %v1458 = vmul.f32 %v1052, %v1052
    %v1459 = vmin.f32 16.0, %v1458
    %v1460 = vmul.f32 %v1459, 2.1237322e-06
    %v1461 = vadd.f32 %v1460, 0.00028619796
    %v1462 = vmul.f32 %v1459, %v1461
    %v1463 = vadd.f32 %v1462, 0.0036580483
    %v1464 = vmul.f32 %v1459, %v1463
    %v1465 = vadd.f32 %v1464, 0.05243302
    %v1466 = vmul.f32 %v1459, %v1465
    %v1467 = vadd.f32 %v1466, 0.18741608
    %v1468 = vmul.f32 %v1459, %v1467
    %v1469 = vadd.f32 %v1468, 1.1283791
    %v1470 = vmul.f32 %v1052, %v1469
    %v1471 = vmul.f32 %v1459, 3.8918573e-05
    %v1472 = vadd.f32 %v1471, 0.001143296
    %v1473 = vmul.f32 %v1459, %v1472
    %v1474 = vadd.f32 %v1473, 0.014752088
    %v1475 = vmul.f32 %v1459, %v1474
    %v1476 = vadd.f32 %v1475, 0.112945676
    %v1477 = vmul.f32 %v1459, %v1476
    %v1478 = vadd.f32 %v1477, 0.4994258
    %v1479 = vmul.f32 %v1459, %v1478
    %v1480 = vadd.f32 %v1479, 1.0
    %v1481 = vrcp.pop %v1480
    %v1482 = vmul.f32 %v1480, %v1481
    %v1483 = vsub.f32 1.0, %v1482
    %v1484 = vmul.f32 %v1481, %v1483
    %v1485 = vadd.f32 %v1481, %v1484
    %vm1486 = vweird.f32 %v1480
    %vm1487 = vweird.f32 %v1481
    %vm1488 = vmor %vm1486, %vm1487
    %v1489 = vsel %vm1488, %v1481, %v1485
    %v1490 = vand.u32 2147483647, %v1480
    %vm1491 = vcmp.eq.f32.partialorder %v1490, 8.507059e+37
    %v1492 = vand.u32 %v1480, 2147483648
    %v1493 = vor.u32 1.1754944e-38, %v1492
    %v1494 = vsel %vm1491, %v1493, %v1489
    %v1495 = vmul.f32 %v1470, %v1494
    %v1496 = vmin.f32 %v1495, 1.0
    %v1497 = vmax.f32 %v1496, -1.0
    %v1498 = vmul.f32 %v1053, %v1053
    %v1499 = vmin.f32 16.0, %v1498
    %v1500 = vmul.f32 %v1499, 2.1237322e-06
    %v1501 = vadd.f32 %v1500, 0.00028619796
    %v1502 = vmul.f32 %v1499, %v1501
    %v1503 = vadd.f32 %v1502, 0.0036580483
    %v1504 = vmul.f32 %v1499, %v1503
    %v1505 = vadd.f32 %v1504, 0.05243302
    %v1506 = vmul.f32 %v1499, %v1505
    %v1507 = vadd.f32 %v1506, 0.18741608
    %v1508 = vmul.f32 %v1499, %v1507
    %v1509 = vadd.f32 %v1508, 1.1283791
    %v1510 = vmul.f32 %v1053, %v1509
    %v1511 = vmul.f32 %v1499, 3.8918573e-05
    %v1512 = vadd.f32 %v1511, 0.001143296
    %v1513 = vmul.f32 %v1499, %v1512
    %v1514 = vadd.f32 %v1513, 0.014752088
    %v1515 = vmul.f32 %v1499, %v1514
    %v1516 = vadd.f32 %v1515, 0.112945676
    %v1517 = vmul.f32 %v1499, %v1516
    %v1518 = vadd.f32 %v1517, 0.4994258
    %v1519 = vmul.f32 %v1499, %v1518
    %v1520 = vadd.f32 %v1519, 1.0
    %v1521 = vrcp.pop %v1520
    %v1522 = vmul.f32 %v1520, %v1521
    %v1523 = vsub.f32 1.0, %v1522
    %v1524 = vmul.f32 %v1521, %v1523
    %v1525 = vadd.f32 %v1521, %v1524
    %vm1526 = vweird.f32 %v1520
    %vm1527 = vweird.f32 %v1521
    %vm1528 = vmor %vm1526, %vm1527
    %v1529 = vsel %vm1528, %v1521, %v1525
    %v1530 = vand.u32 2147483647, %v1520
    %vm1531 = vcmp.eq.f32.partialorder %v1530, 8.507059e+37
    %v1532 = vand.u32 %v1520, 2147483648
    %v1533 = vor.u32 1.1754944e-38, %v1532
    %v1534 = vsel %vm1531, %v1533, %v1529
    %v1535 = vmul.f32 %v1510, %v1534
    %v1536 = vmin.f32 %v1535, 1.0
    %v1537 = vmax.f32 %v1536, -1.0
    %v1538 = vmul.f32 %v1054, %v1054
    %v1539 = vmin.f32 16.0, %v1538
    %v1540 = vmul.f32 %v1539, 2.1237322e-06
    %v1541 = vadd.f32 %v1540, 0.00028619796
    %v1542 = vmul.f32 %v1539, %v1541
    %v1543 = vadd.f32 %v1542, 0.0036580483
    %v1544 = vmul.f32 %v1539, %v1543
    %v1545 = vadd.f32 %v1544, 0.05243302
    %v1546 = vmul.f32 %v1539, %v1545
    %v1547 = vadd.f32 %v1546, 0.18741608
    %v1548 = vmul.f32 %v1539, %v1547
    %v1549 = vadd.f32 %v1548, 1.1283791
    %v1550 = vmul.f32 %v1054, %v1549
    %v1551 = vmul.f32 %v1539, 3.8918573e-05
    %v1552 = vadd.f32 %v1551, 0.001143296
    %v1553 = vmul.f32 %v1539, %v1552
    %v1554 = vadd.f32 %v1553, 0.014752088
    %v1555 = vmul.f32 %v1539, %v1554
    %v1556 = vadd.f32 %v1555, 0.112945676
    %v1557 = vmul.f32 %v1539, %v1556
    %v1558 = vadd.f32 %v1557, 0.4994258
    %v1559 = vmul.f32 %v1539, %v1558
    %v1560 = vadd.f32 %v1559, 1.0
    %v1561 = vrcp.pop %v1560
    %v1562 = vmul.f32 %v1560, %v1561
    %v1563 = vsub.f32 1.0, %v1562
    %v1564 = vmul.f32 %v1561, %v1563
    %v1565 = vadd.f32 %v1561, %v1564
    %vm1566 = vweird.f32 %v1560
    %vm1567 = vweird.f32 %v1561
    %vm1568 = vmor %vm1566, %vm1567
    %v1569 = vsel %vm1568, %v1561, %v1565
    %v1570 = vand.u32 2147483647, %v1560
    %vm1571 = vcmp.eq.f32.partialorder %v1570, 8.507059e+37
    %v1572 = vand.u32 %v1560, 2147483648
    %v1573 = vor.u32 1.1754944e-38, %v1572
    %v1574 = vsel %vm1571, %v1573, %v1569
    %v1575 = vmul.f32 %v1550, %v1574
    %v1576 = vmin.f32 %v1575, 1.0
    %v1577 = vmax.f32 %v1576, -1.0
    %v1578 = vmul.f32 %v1055, %v1055
    %v1579 = vmin.f32 16.0, %v1578
    %v1580 = vmul.f32 %v1579, 2.1237322e-06
    %v1581 = vadd.f32 %v1580, 0.00028619796
    %v1582 = vmul.f32 %v1579, %v1581
    %v1583 = vadd.f32 %v1582, 0.0036580483
    %v1584 = vmul.f32 %v1579, %v1583
    %v1585 = vadd.f32 %v1584, 0.05243302
    %v1586 = vmul.f32 %v1579, %v1585
    %v1587 = vadd.f32 %v1586, 0.18741608
    %v1588 = vmul.f32 %v1579, %v1587
    %v1589 = vadd.f32 %v1588, 1.1283791
    %v1590 = vmul.f32 %v1055, %v1589
    %v1591 = vmul.f32 %v1579, 3.8918573e-05
    %v1592 = vadd.f32 %v1591, 0.001143296
    %v1593 = vmul.f32 %v1579, %v1592
    %v1594 = vadd.f32 %v1593, 0.014752088
    %v1595 = vmul.f32 %v1579, %v1594
    %v1596 = vadd.f32 %v1595, 0.112945676
    %v1597 = vmul.f32 %v1579, %v1596
    %v1598 = vadd.f32 %v1597, 0.4994258
    %v1599 = vmul.f32 %v1579, %v1598
    %v1600 = vadd.f32 %v1599, 1.0
    %v1601 = vrcp.pop %v1600
    %v1602 = vmul.f32 %v1600, %v1601
    %v1603 = vsub.f32 1.0, %v1602
    %v1604 = vmul.f32 %v1601, %v1603
    %v1605 = vadd.f32 %v1601, %v1604
    %vm1606 = vweird.f32 %v1600
    %vm1607 = vweird.f32 %v1601
    %vm1608 = vmor %vm1606, %vm1607
    %v1609 = vsel %vm1608, %v1601, %v1605
    %v1610 = vand.u32 2147483647, %v1600
    %vm1611 = vcmp.eq.f32.partialorder %v1610, 8.507059e+37
    %v1612 = vand.u32 %v1600, 2147483648
    %v1613 = vor.u32 1.1754944e-38, %v1612
    %v1614 = vsel %vm1611, %v1613, %v1609
    %v1615 = vmul.f32 %v1590, %v1614
    %v1616 = vmin.f32 %v1615, 1.0
    %v1617 = vmax.f32 %v1616, -1.0
    %v1618 = vmul.f32 %v1056, %v1056
    %v1619 = vmin.f32 16.0, %v1618
    %v1620 = vmul.f32 %v1619, 2.1237322e-06
    %v1621 = vadd.f32 %v1620, 0.00028619796
    %v1622 = vmul.f32 %v1619, %v1621
    %v1623 = vadd.f32 %v1622, 0.0036580483
    %v1624 = vmul.f32 %v1619, %v1623
    %v1625 = vadd.f32 %v1624, 0.05243302
    %v1626 = vmul.f32 %v1619, %v1625
    %v1627 = vadd.f32 %v1626, 0.18741608
    %v1628 = vmul.f32 %v1619, %v1627
    %v1629 = vadd.f32 %v1628, 1.1283791
    %v1630 = vmul.f32 %v1056, %v1629
    %v1631 = vmul.f32 %v1619, 3.8918573e-05
    %v1632 = vadd.f32 %v1631, 0.001143296
    %v1633 = vmul.f32 %v1619, %v1632
    %v1634 = vadd.f32 %v1633, 0.014752088
    %v1635 = vmul.f32 %v1619, %v1634
    %v1636 = vadd.f32 %v1635, 0.112945676
    %v1637 = vmul.f32 %v1619, %v1636
    %v1638 = vadd.f32 %v1637, 0.4994258
    %v1639 = vmul.f32 %v1619, %v1638
    %v1640 = vadd.f32 %v1639, 1.0
    %v1641 = vrcp.pop %v1640
    %v1642 = vmul.f32 %v1640, %v1641
    %v1643 = vsub.f32 1.0, %v1642
    %v1644 = vmul.f32 %v1641, %v1643
    %v1645 = vadd.f32 %v1641, %v1644
    %vm1646 = vweird.f32 %v1640
    %vm1647 = vweird.f32 %v1641
    %vm1648 = vmor %vm1646, %vm1647
    %v1649 = vsel %vm1648, %v1641, %v1645
    %v1650 = vand.u32 2147483647, %v1640
    %vm1651 = vcmp.eq.f32.partialorder %v1650, 8.507059e+37
    %v1652 = vand.u32 %v1640, 2147483648
    %v1653 = vor.u32 1.1754944e-38, %v1652
    %v1654 = vsel %vm1651, %v1653, %v1649
    %v1655 = vmul.f32 %v1630, %v1654
    %v1656 = vmin.f32 %v1655, 1.0
    %v1657 = vmax.f32 %v1656, -1.0
    %v1658 = vmul.f32 %v1057, %v1057
    %v1659 = vmin.f32 16.0, %v1658
    %v1660 = vmul.f32 %v1659, 2.1237322e-06
    %v1661 = vadd.f32 %v1660, 0.00028619796
    %v1662 = vmul.f32 %v1659, %v1661
    %v1663 = vadd.f32 %v1662, 0.0036580483
    %v1664 = vmul.f32 %v1659, %v1663
    %v1665 = vadd.f32 %v1664, 0.05243302
    %v1666 = vmul.f32 %v1659, %v1665
    %v1667 = vadd.f32 %v1666, 0.18741608
    %v1668 = vmul.f32 %v1659, %v1667
    %v1669 = vadd.f32 %v1668, 1.1283791
    %v1670 = vmul.f32 %v1057, %v1669
    %v1671 = vmul.f32 %v1659, 3.8918573e-05
    %v1672 = vadd.f32 %v1671, 0.001143296
    %v1673 = vmul.f32 %v1659, %v1672
    %v1674 = vadd.f32 %v1673, 0.014752088
    %v1675 = vmul.f32 %v1659, %v1674
    %v1676 = vadd.f32 %v1675, 0.112945676
    %v1677 = vmul.f32 %v1659, %v1676
    %v1678 = vadd.f32 %v1677, 0.4994258
    %v1679 = vmul.f32 %v1659, %v1678
    %v1680 = vadd.f32 %v1679, 1.0
    %v1681 = vrcp.pop %v1680
    %v1682 = vmul.f32 %v1680, %v1681
    %v1683 = vsub.f32 1.0, %v1682
    %v1684 = vmul.f32 %v1681, %v1683
    %v1685 = vadd.f32 %v1681, %v1684
    %vm1686 = vweird.f32 %v1680
    %vm1687 = vweird.f32 %v1681
    %vm1688 = vmor %vm1686, %vm1687
    %v1689 = vsel %vm1688, %v1681, %v1685
    %v1690 = vand.u32 2147483647, %v1680
    %vm1691 = vcmp.eq.f32.partialorder %v1690, 8.507059e+37
    %v1692 = vand.u32 %v1680, 2147483648
    %v1693 = vor.u32 1.1754944e-38, %v1692
    %v1694 = vsel %vm1691, %v1693, %v1689
    %v1695 = vmul.f32 %v1670, %v1694
    %v1696 = vmin.f32 %v1695, 1.0
    %v1697 = vmax.f32 %v1696, -1.0
    %v1698 = vadd.f32 %v1097, 1.0
    %v1699 = vadd.f32 %v1137, 1.0
    %v1700 = vadd.f32 %v1177, 1.0
    %v1701 = vadd.f32 %v1217, 1.0
    %v1702 = vadd.f32 %v1257, 1.0
    %v1703 = vadd.f32 %v1297, 1.0
    %v1704 = vadd.f32 %v1337, 1.0
    %v1705 = vadd.f32 %v1377, 1.0
    %v1706 = vadd.f32 %v1417, 1.0
    %v1707 = vadd.f32 %v1457, 1.0
    %v1708 = vadd.f32 %v1497, 1.0
    %v1709 = vadd.f32 %v1537, 1.0
    %v1710 = vadd.f32 %v1577, 1.0
    %v1711 = vadd.f32 %v1617, 1.0
    %v1712 = vadd.f32 %v1657, 1.0
    %v1713 = vadd.f32 %v1697, 1.0
    %v1714 = vmul.f32 %v1026, %v1698
    %v1715 = vmul.f32 %v1027, %v1699
    %v1716 = vmul.f32 %v1028, %v1700
    %v1717 = vmul.f32 %v1029, %v1701
    %v1718 = vmul.f32 %v1030, %v1702
    %v1719 = vmul.f32 %v1031, %v1703
    %v1720 = vmul.f32 %v1032, %v1704
    %v1721 = vmul.f32 %v1033, %v1705
    %v1722 = vmul.f32 %v1034, %v1706
    %v1723 = vmul.f32 %v1035, %v1707
    %v1724 = vmul.f32 %v1036, %v1708
    %v1725 = vmul.f32 %v1037, %v1709
    %v1726 = vmul.f32 %v1038, %v1710
    %v1727 = vmul.f32 %v1039, %v1711
    %v1728 = vmul.f32 %v1040, %v1712
    %v1729 = vmul.f32 %v1041, %v1713
    %v1730 = vld [vmem:[%s13] sm:$0xff]
    %v1731 = vld [vmem:[%s13 + $0x8] sm:$0xff]
    %v1732 = vld [vmem:[%s13 + $0x10] sm:$0xff]
    %v1733 = vld [vmem:[%s13 + $0x18] sm:$0xff]
    %v1734 = vld [vmem:[%s14] sm:$0xff]
    %v1735 = vld [vmem:[%s14 + $0x8] sm:$0xff]
    %v1736 = vld [vmem:[%s14 + $0x10] sm:$0xff]
    %v1737 = vld [vmem:[%s14 + $0x18] sm:$0xff]
    %1739 = vset.pattern.permute.xlu0 0
    %1740 = vperm.xlu0 %1739, %v1734
    %v1741 = vpop.permute.xlu0 %1740
    %1744 = vset.pattern.permute.xlu0 0
    %1745 = vperm.xlu0 %1744, %v1735
    %v1746 = vpop.permute.xlu0 %1745
    %1749 = vset.pattern.permute.xlu0 0
    %1750 = vperm.xlu0 %1749, %v1736
    %v1751 = vpop.permute.xlu0 %1750
    %1754 = vset.pattern.permute.xlu0 0
    %1755 = vperm.xlu0 %1754, %v1737
    %v1756 = vpop.permute.xlu0 %1755
    %1758 = vmatpush.msra.mxu0 %v1729
    %1759 = vmatpush.msra.mxu0 %v1728
    %1760 = vmatpush.msra.mxu0 %v1727
    %1761 = vmatpush.msra.mxu0 %v1726
    %1762 = vmatpush.msra.mxu0 %v1725
    %1763 = vmatpush.msra.mxu0 %v1724
    %1764 = vmatpush.msra.mxu0 %v1723
    %1765 = vmatpush.msra.mxu0 %v1722
    %1766 = vmatpush.msra.mxu0 %v1721
    %1767 = vmatpush.msra.mxu0 %v1720
    %1768 = vmatpush.msra.mxu0 %v1719
    %1769 = vmatpush.msra.mxu0 %v1718
    %1770 = vmatpush.msra.mxu0 %v1717
    %1771 = vmatpush.msra.mxu0 %v1716
    %1772 = vmatpush.msra.mxu0 %v1715
    %1773 = vmatpush.msra.mxu0 %v1714
    %1774 = vmatmul.f32.gmra.mxu0 %v1730
    %v1775 = vpop.f32.mrf.mxu0
    %v1776 = vadd.f32 %v1741, %v1775
    %1777 = vmatmul.f32.gmra.mxu0 %v1731
    %v1778 = vpop.f32.mrf.mxu0
    %v1779 = vadd.f32 %v1746, %v1778
    %1780 = vmatmul.f32.gmra.mxu0 %v1732
    %v1781 = vpop.f32.mrf.mxu0
    %v1782 = vadd.f32 %v1751, %v1781
    %1783 = vmatmul.f32.gmra.mxu0 %v1733
    %v1784 = vpop.f32.mrf.mxu0
    %v1785 = vadd.f32 %v1756, %v1784
    %1786 = vdwg.mxu0
    %v1787 = vadd.f32 %v685, %v1776
    %v1788 = vadd.f32 %v686, %v1779
    %v1789 = vadd.f32 %v687, %v1782
    %v1790 = vadd.f32 %v688, %v1785
    %v1791 = vld [vmem:[%s15] sm:$0x1]
    %v1792 = vld [vmem:[%s16] sm:$0x1]
    %v1793 = vsel %vm691, %v1787, 0.0
    %1794 = vadd.xlane.f32.xlu0 %v1793
    %v1795 = vpop.xlane.xlu0 %1794
    %v1796 = vsel %vm691, %v1788, 0.0
    %1797 = vadd.xlane.f32.xlu0 %v1796
    %v1798 = vpop.xlane.xlu0 %1797
    %v1799 = vsel %vm691, %v1789, 0.0
    %1800 = vadd.xlane.f32.xlu0 %v1799
    %v1801 = vpop.xlane.xlu0 %1800
    %v1802 = vsel %vm691, %v1790, 0.0
    %1803 = vadd.xlane.f32.xlu0 %v1802
    %v1804 = vpop.xlane.xlu0 %1803
    %v1805 = vmul.f32 %v1795, %v710
    %v1806 = vmul.f32 %v1798, %v710
    %v1807 = vmul.f32 %v1801, %v710
    %v1808 = vmul.f32 %v1804, %v710
    %v1809 = vsub.f32 %v1787, %v1805
    %v1810 = vsub.f32 %v1788, %v1806
    %v1811 = vsub.f32 %v1789, %v1807
    %v1812 = vsub.f32 %v1790, %v1808
    %v1813 = vmul.f32 %v1809, %v1809
    %v1814 = vmul.f32 %v1810, %v1810
    %v1815 = vmul.f32 %v1811, %v1811
    %v1816 = vmul.f32 %v1812, %v1812
    %v1817 = vsel %vm691, %v1813, 0.0
    %1818 = vadd.xlane.f32.xlu0 %v1817
    %v1819 = vpop.xlane.xlu0 %1818
    %v1820 = vsel %vm691, %v1814, 0.0
    %1821 = vadd.xlane.f32.xlu0 %v1820
    %v1822 = vpop.xlane.xlu0 %1821
    %v1823 = vsel %vm691, %v1815, 0.0
    %1824 = vadd.xlane.f32.xlu0 %v1823
    %v1825 = vpop.xlane.xlu0 %1824
    %v1826 = vsel %vm691, %v1816, 0.0
    %1827 = vadd.xlane.f32.xlu0 %v1826
    %v1828 = vpop.xlane.xlu0 %1827
    %v1829 = vmul.f32 %v1819, %v710
    %v1830 = vmul.f32 %v1822, %v710
    %v1831 = vmul.f32 %v1825, %v710
    %v1832 = vmul.f32 %v1828, %v710
    %v1833 = vadd.f32 %v1829, 1e-05
    %v1834 = vadd.f32 %v1830, 1e-05
    %v1835 = vadd.f32 %v1831, 1e-05
    %v1836 = vadd.f32 %v1832, 1e-05
    %v1837 = vrsqrt.pop %v1833
    %v1838 = vmul.f32 %v1837, %v1833
    %v1839 = vmul.f32 %v1838, %v1837
    %v1840 = vmul.f32 0.5, %v1839
    %v1841 = vsub.f32 1.5, %v1840
    %v1842 = vmul.f32 %v1837, %v1841
    %vm1843 = vweird.f32 %v1833
    %vm1844 = vweird.f32 %v1837
    %vm1845 = vmor %vm1843, %vm1844
    %v1846 = vsel %vm1845, %v1837, %v1842
    %v1847 = vrsqrt.pop %v1834
    %v1848 = vmul.f32 %v1847, %v1834
    %v1849 = vmul.f32 %v1848, %v1847
    %v1850 = vmul.f32 0.5, %v1849
    %v1851 = vsub.f32 1.5, %v1850
    %v1852 = vmul.f32 %v1847, %v1851
    %vm1853 = vweird.f32 %v1834
    %vm1854 = vweird.f32 %v1847
    %vm1855 = vmor %vm1853, %vm1854
    %v1856 = vsel %vm1855, %v1847, %v1852
    %v1857 = vrsqrt.pop %v1835
    %v1858 = vmul.f32 %v1857, %v1835
    %v1859 = vmul.f32 %v1858, %v1857
    %v1860 = vmul.f32 0.5, %v1859
    %v1861 = vsub.f32 1.5, %v1860
    %v1862 = vmul.f32 %v1857, %v1861
    %vm1863 = vweird.f32 %v1835
    %vm1864 = vweird.f32 %v1857
    %vm1865 = vmor %vm1863, %vm1864
    %v1866 = vsel %vm1865, %v1857, %v1862
    %v1867 = vrsqrt.pop %v1836
    %v1868 = vmul.f32 %v1867, %v1836
    %v1869 = vmul.f32 %v1868, %v1867
    %v1870 = vmul.f32 0.5, %v1869
    %v1871 = vsub.f32 1.5, %v1870
    %v1872 = vmul.f32 %v1867, %v1871
    %vm1873 = vweird.f32 %v1836
    %vm1874 = vweird.f32 %v1867
    %vm1875 = vmor %vm1873, %vm1874
    %v1876 = vsel %vm1875, %v1867, %v1872
    %v1877 = vmul.f32 %v1809, %v1846
    %v1878 = vmul.f32 %v1810, %v1856
    %v1879 = vmul.f32 %v1811, %v1866
    %v1880 = vmul.f32 %v1812, %v1876
    %v1882 = vperm.slane %v1791, 0
    %v1884 = vmul.f32 %v1877, %v1882
    %v1885 = vmul.f32 %v1878, %v1882
    %v1886 = vmul.f32 %v1879, %v1882
    %v1887 = vmul.f32 %v1880, %v1882
    %v1889 = vperm.slane %v1792, 0
    %v1891 = vadd.f32 %v1884, %v1889
    %v1892 = vadd.f32 %v1885, %v1889
    %v1893 = vadd.f32 %v1886, %v1889
    %v1894 = vadd.f32 %v1887, %v1889
    %v1895 = vld [vmem:[%s17] sm:$0xff]
    %v1896 = vld [vmem:[%s17 + $0x8] sm:$0xff]
    %v1897 = vld [vmem:[%s17 + $0x10] sm:$0xff]
    %v1898 = vld [vmem:[%s17 + $0x18] sm:$0xff]
    %v1899 = vld [vmem:[%s18] sm:$0x1]
    %v1901 = vperm.slane %v1899, 0
    %v1904 = vsel %vm691, %v1891, 0
    %v1907 = vsel %vm691, %v1892, 0
    %v1910 = vsel %vm691, %v1893, 0
    %v1913 = vsel %vm691, %v1894, 0
    %1915 = vmatpush.msra.mxu0 0.0
    %1916 = vmatpush.msra.mxu0 0.0
    %1917 = vmatpush.msra.mxu0 0.0
    %1918 = vmatpush.msra.mxu0 0.0
    %1919 = vmatpush.msra.mxu0 0.0
    %1920 = vmatpush.msra.mxu0 0.0
    %1921 = vmatpush.msra.mxu0 0.0
    %1922 = vmatpush.msra.mxu0 0.0
    %1923 = vmatpush.msra.mxu0 0.0
    %1924 = vmatpush.msra.mxu0 0.0
    %1925 = vmatpush.msra.mxu0 0.0
    %1926 = vmatpush.msra.mxu0 0.0
    %1927 = vmatpush.msra.mxu0 %v1898
    %1928 = vmatpush.msra.mxu0 %v1897
    %1929 = vmatpush.msra.mxu0 %v1896
    %1930 = vmatpush.msra.mxu0 %v1895
    %1931 = vmatmul.f32.gmra.mxu0 %v1904
    %v1932 = vpop.f32.mrf.mxu0
    %v1933 = vadd.f32 %v1901, %v1932
    %1934 = vmatmul.f32.gmra.mxu0 %v1907
    %v1935 = vpop.f32.mrf.mxu0
    %v1936 = vadd.f32 %v1901, %v1935
    %1937 = vmatmul.f32.gmra.mxu0 %v1910
    %v1938 = vpop.f32.mrf.mxu0
    %v1939 = vadd.f32 %v1901, %v1938
    %1940 = vmatmul.f32.gmra.mxu0 %v1913
    %v1941 = vpop.f32.mrf.mxu0
    %v1942 = vadd.f32 %v1901, %v1941
    %1943 = vdwg.mxu0
    %v1944 = vmul.f32 %v1933, 0.5
    %v1945 = vmul.f32 %v1936, 0.5
    %v1946 = vmul.f32 %v1939, 0.5
    %v1947 = vmul.f32 %v1942, 0.5
    %v1948 = vmul.f32 %v1933, 0.70710677
    %v1949 = vmul.f32 %v1936, 0.70710677
    %v1950 = vmul.f32 %v1939, 0.70710677
    %v1951 = vmul.f32 %v1942, 0.70710677
    %v1952 = vmul.f32 %v1948, %v1948
    %v1953 = vmin.f32 16.0, %v1952
    %v1954 = vmul.f32 %v1953, 2.1237322e-06
    %v1955 = vadd.f32 %v1954, 0.00028619796
    %v1956 = vmul.f32 %v1953, %v1955
    %v1957 = vadd.f32 %v1956, 0.0036580483
    %v1958 = vmul.f32 %v1953, %v1957
    %v1959 = vadd.f32 %v1958, 0.05243302
    %v1960 = vmul.f32 %v1953, %v1959
    %v1961 = vadd.f32 %v1960, 0.18741608
    %v1962 = vmul.f32 %v1953, %v1961
    %v1963 = vadd.f32 %v1962, 1.1283791
    %v1964 = vmul.f32 %v1948, %v1963
    %v1965 = vmul.f32 %v1953, 3.8918573e-05
    %v1966 = vadd.f32 %v1965, 0.001143296
    %v1967 = vmul.f32 %v1953, %v1966
    %v1968 = vadd.f32 %v1967, 0.014752088
    %v1969 = vmul.f32 %v1953, %v1968
    %v1970 = vadd.f32 %v1969, 0.112945676
    %v1971 = vmul.f32 %v1953, %v1970
    %v1972 = vadd.f32 %v1971, 0.4994258
    %v1973 = vmul.f32 %v1953, %v1972
    %v1974 = vadd.f32 %v1973, 1.0
    %v1975 = vrcp.pop %v1974
    %v1976 = vmul.f32 %v1974, %v1975
    %v1977 = vsub.f32 1.0, %v1976
    %v1978 = vmul.f32 %v1975, %v1977
    %v1979 = vadd.f32 %v1975, %v1978
    %vm1980 = vweird.f32 %v1974
    %vm1981 = vweird.f32 %v1975
    %vm1982 = vmor %vm1980, %vm1981
    %v1983 = vsel %vm1982, %v1975, %v1979
    %v1984 = vand.u32 2147483647, %v1974
    %vm1985 = vcmp.eq.f32.partialorder %v1984, 8.507059e+37
    %v1986 = vand.u32 %v1974, 2147483648
    %v1987 = vor.u32 1.1754944e-38, %v1986
    %v1988 = vsel %vm1985, %v1987, %v1983
    %v1989 = vmul.f32 %v1964, %v1988
    %v1990 = vmin.f32 %v1989, 1.0
    %v1991 = vmax.f32 %v1990, -1.0
    %v1992 = vmul.f32 %v1949, %v1949
    %v1993 = vmin.f32 16.0, %v1992
    %v1994 = vmul.f32 %v1993, 2.1237322e-06
    %v1995 = vadd.f32 %v1994, 0.00028619796
    %v1996 = vmul.f32 %v1993, %v1995
    %v1997 = vadd.f32 %v1996, 0.0036580483
    %v1998 = vmul.f32 %v1993, %v1997
    %v1999 = vadd.f32 %v1998, 0.05243302
    %v2000 = vmul.f32 %v1993, %v1999
    %v2001 = vadd.f32 %v2000, 0.18741608
    %v2002 = vmul.f32 %v1993, %v2001
    %v2003 = vadd.f32 %v2002, 1.1283791
    %v2004 = vmul.f32 %v1949, %v2003
    %v2005 = vmul.f32 %v1993, 3.8918573e-05
    %v2006 = vadd.f32 %v2005, 0.001143296
    %v2007 = vmul.f32 %v1993, %v2006
    %v2008 = vadd.f32 %v2007, 0.014752088
    %v2009 = vmul.f32 %v1993, %v2008
    %v2010 = vadd.f32 %v2009, 0.112945676
    %v2011 = vmul.f32 %v1993, %v2010
    %v2012 = vadd.f32 %v2011, 0.4994258
    %v2013 = vmul.f32 %v1993, %v2012
    %v2014 = vadd.f32 %v2013, 1.0
    %v2015 = vrcp.pop %v2014
    %v2016 = vmul.f32 %v2014, %v2015
    %v2017 = vsub.f32 1.0, %v2016
    %v2018 = vmul.f32 %v2015, %v2017
    %v2019 = vadd.f32 %v2015, %v2018
    %vm2020 = vweird.f32 %v2014
    %vm2021 = vweird.f32 %v2015
    %vm2022 = vmor %vm2020, %vm2021
    %v2023 = vsel %vm2022, %v2015, %v2019
    %v2024 = vand.u32 2147483647, %v2014
    %vm2025 = vcmp.eq.f32.partialorder %v2024, 8.507059e+37
    %v2026 = vand.u32 %v2014, 2147483648
    %v2027 = vor.u32 1.1754944e-38, %v2026
    %v2028 = vsel %vm2025, %v2027, %v2023
    %v2029 = vmul.f32 %v2004, %v2028
    %v2030 = vmin.f32 %v2029, 1.0
    %v2031 = vmax.f32 %v2030, -1.0
    %v2032 = vmul.f32 %v1950, %v1950
    %v2033 = vmin.f32 16.0, %v2032
    %v2034 = vmul.f32 %v2033, 2.1237322e-06
    %v2035 = vadd.f32 %v2034, 0.00028619796
    %v2036 = vmul.f32 %v2033, %v2035
    %v2037 = vadd.f32 %v2036, 0.0036580483
    %v2038 = vmul.f32 %v2033, %v2037
    %v2039 = vadd.f32 %v2038, 0.05243302
    %v2040 = vmul.f32 %v2033, %v2039
    %v2041 = vadd.f32 %v2040, 0.18741608
    %v2042 = vmul.f32 %v2033, %v2041
    %v2043 = vadd.f32 %v2042, 1.1283791
    %v2044 = vmul.f32 %v1950, %v2043
    %v2045 = vmul.f32 %v2033, 3.8918573e-05
    %v2046 = vadd.f32 %v2045, 0.001143296
    %v2047 = vmul.f32 %v2033, %v2046
    %v2048 = vadd.f32 %v2047, 0.014752088
    %v2049 = vmul.f32 %v2033, %v2048
    %v2050 = vadd.f32 %v2049, 0.112945676
    %v2051 = vmul.f32 %v2033, %v2050
    %v2052 = vadd.f32 %v2051, 0.4994258
    %v2053 = vmul.f32 %v2033, %v2052
    %v2054 = vadd.f32 %v2053, 1.0
    %v2055 = vrcp.pop %v2054
    %v2056 = vmul.f32 %v2054, %v2055
    %v2057 = vsub.f32 1.0, %v2056
    %v2058 = vmul.f32 %v2055, %v2057
    %v2059 = vadd.f32 %v2055, %v2058
    %vm2060 = vweird.f32 %v2054
    %vm2061 = vweird.f32 %v2055
    %vm2062 = vmor %vm2060, %vm2061
    %v2063 = vsel %vm2062, %v2055, %v2059
    %v2064 = vand.u32 2147483647, %v2054
    %vm2065 = vcmp.eq.f32.partialorder %v2064, 8.507059e+37
    %v2066 = vand.u32 %v2054, 2147483648
    %v2067 = vor.u32 1.1754944e-38, %v2066
    %v2068 = vsel %vm2065, %v2067, %v2063
    %v2069 = vmul.f32 %v2044, %v2068
    %v2070 = vmin.f32 %v2069, 1.0
    %v2071 = vmax.f32 %v2070, -1.0
    %v2072 = vmul.f32 %v1951, %v1951
    %v2073 = vmin.f32 16.0, %v2072
    %v2074 = vmul.f32 %v2073, 2.1237322e-06
    %v2075 = vadd.f32 %v2074, 0.00028619796
    %v2076 = vmul.f32 %v2073, %v2075
    %v2077 = vadd.f32 %v2076, 0.0036580483
    %v2078 = vmul.f32 %v2073, %v2077
    %v2079 = vadd.f32 %v2078, 0.05243302
    %v2080 = vmul.f32 %v2073, %v2079
    %v2081 = vadd.f32 %v2080, 0.18741608
    %v2082 = vmul.f32 %v2073, %v2081
    %v2083 = vadd.f32 %v2082, 1.1283791
    %v2084 = vmul.f32 %v1951, %v2083
    %v2085 = vmul.f32 %v2073, 3.8918573e-05
    %v2086 = vadd.f32 %v2085, 0.001143296
    %v2087 = vmul.f32 %v2073, %v2086
    %v2088 = vadd.f32 %v2087, 0.014752088
    %v2089 = vmul.f32 %v2073, %v2088
    %v2090 = vadd.f32 %v2089, 0.112945676
    %v2091 = vmul.f32 %v2073, %v2090
    %v2092 = vadd.f32 %v2091, 0.4994258
    %v2093 = vmul.f32 %v2073, %v2092
    %v2094 = vadd.f32 %v2093, 1.0
    %v2095 = vrcp.pop %v2094
    %v2096 = vmul.f32 %v2094, %v2095
    %v2097 = vsub.f32 1.0, %v2096
    %v2098 = vmul.f32 %v2095, %v2097
    %v2099 = vadd.f32 %v2095, %v2098
    %vm2100 = vweird.f32 %v2094
    %vm2101 = vweird.f32 %v2095
    %vm2102 = vmor %vm2100, %vm2101
    %v2103 = vsel %vm2102, %v2095, %v2099
    %v2104 = vand.u32 2147483647, %v2094
    %vm2105 = vcmp.eq.f32.partialorder %v2104, 8.507059e+37
    %v2106 = vand.u32 %v2094, 2147483648
    %v2107 = vor.u32 1.1754944e-38, %v2106
    %v2108 = vsel %vm2105, %v2107, %v2103
    %v2109 = vmul.f32 %v2084, %v2108
    %v2110 = vmin.f32 %v2109, 1.0
    %v2111 = vmax.f32 %v2110, -1.0
    %v2112 = vadd.f32 %v1991, 1.0
    %v2113 = vadd.f32 %v2031, 1.0
    %v2114 = vadd.f32 %v2071, 1.0
    %v2115 = vadd.f32 %v2111, 1.0
    %v2116 = vmul.f32 %v1944, %v2112
    %v2117 = vmul.f32 %v1945, %v2113
    %v2118 = vmul.f32 %v1946, %v2114
    %v2119 = vmul.f32 %v1947, %v2115
    %v2120 = vld [vmem:[%s19] sm:$0xff]
    %v2121 = vld [vmem:[%s19 + $0x8] sm:$0xff]
    %v2122 = vld [vmem:[%s20] sm:$0x1]
    %v2124 = vperm.slane %v2122, 0
    %v2127 = vsel %vm129, %v2116, 0
    %v2130 = vsel %vm129, %v2117, 0
    %v2133 = vsel %vm129, %v2118, 0
    %v2136 = vsel %vm129, %v2119, 0
    %2138 = vmatpush.msra.mxu0 0.0
    %2139 = vmatpush.msra.mxu0 0.0
    %2140 = vmatpush.msra.mxu0 0.0
    %2141 = vmatpush.msra.mxu0 0.0
    %2142 = vmatpush.msra.mxu0 0.0
    %2143 = vmatpush.msra.mxu0 0.0
    %2144 = vmatpush.msra.mxu0 0.0
    %2145 = vmatpush.msra.mxu0 0.0
    %2146 = vmatpush.msra.mxu0 0.0
    %2147 = vmatpush.msra.mxu0 0.0
    %2148 = vmatpush.msra.mxu0 0.0
    %2149 = vmatpush.msra.mxu0 0.0
    %2150 = vmatpush.msra.mxu0 0.0
    %2151 = vmatpush.msra.mxu0 0.0
    %2152 = vmatpush.msra.mxu0 %v2121
    %2153 = vmatpush.msra.mxu0 %v2120
    %2154 = vmatmul.f32.gmra.mxu0 %v2127
    %v2155 = vpop.f32.mrf.mxu0
    %v2156 = vadd.f32 %v2124, %v2155
    %2157 = vmatmul.f32.gmra.mxu0 %v2130
    %v2158 = vpop.f32.mrf.mxu0
    %v2159 = vadd.f32 %v2124, %v2158
    %2160 = vmatmul.f32.gmra.mxu0 %v2133
    %v2161 = vpop.f32.mrf.mxu0
    %v2162 = vadd.f32 %v2124, %v2161
    %2163 = vmatmul.f32.gmra.mxu0 %v2136
    %v2164 = vpop.f32.mrf.mxu0
    %v2165 = vadd.f32 %v2124, %v2164
    %2166 = vdwg.mxu0
    %v2167 = vadd.f32 %v1787, %v2156
    %v2168 = vadd.f32 %v1788, %v2159
    %v2169 = vadd.f32 %v1789, %v2162
    %v2170 = vadd.f32 %v1790, %v2165
    %s2171 = scalar_lea.vmem %s9, 1
    %v2172 = vld [vmem:[%s2171] sm:$0x1]
    %s2173 = scalar_lea.vmem %s10, 1
    %v2174 = vld [vmem:[%s2173] sm:$0x1]
    %v2175 = vsel %vm691, %v2167, 0.0
    %2176 = vadd.xlane.f32.xlu0 %v2175
    %v2177 = vpop.xlane.xlu0 %2176
    %v2178 = vsel %vm691, %v2168, 0.0
    %2179 = vadd.xlane.f32.xlu0 %v2178
    %v2180 = vpop.xlane.xlu0 %2179
    %v2181 = vsel %vm691, %v2169, 0.0
    %2182 = vadd.xlane.f32.xlu0 %v2181
    %v2183 = vpop.xlane.xlu0 %2182
    %v2184 = vsel %vm691, %v2170, 0.0
    %2185 = vadd.xlane.f32.xlu0 %v2184
    %v2186 = vpop.xlane.xlu0 %2185
    %v2187 = vmul.f32 %v2177, %v710
    %v2188 = vmul.f32 %v2180, %v710
    %v2189 = vmul.f32 %v2183, %v710
    %v2190 = vmul.f32 %v2186, %v710
    %v2191 = vsub.f32 %v2167, %v2187
    %v2192 = vsub.f32 %v2168, %v2188
    %v2193 = vsub.f32 %v2169, %v2189
    %v2194 = vsub.f32 %v2170, %v2190
    %v2195 = vmul.f32 %v2191, %v2191
    %v2196 = vmul.f32 %v2192, %v2192
    %v2197 = vmul.f32 %v2193, %v2193
    %v2198 = vmul.f32 %v2194, %v2194
    %v2199 = vsel %vm691, %v2195, 0.0
    %2200 = vadd.xlane.f32.xlu0 %v2199
    %v2201 = vpop.xlane.xlu0 %2200
    %v2202 = vsel %vm691, %v2196, 0.0
    %2203 = vadd.xlane.f32.xlu0 %v2202
    %v2204 = vpop.xlane.xlu0 %2203
    %v2205 = vsel %vm691, %v2197, 0.0
    %2206 = vadd.xlane.f32.xlu0 %v2205
    %v2207 = vpop.xlane.xlu0 %2206
    %v2208 = vsel %vm691, %v2198, 0.0
    %2209 = vadd.xlane.f32.xlu0 %v2208
    %v2210 = vpop.xlane.xlu0 %2209
    %v2211 = vmul.f32 %v2201, %v710
    %v2212 = vmul.f32 %v2204, %v710
    %v2213 = vmul.f32 %v2207, %v710
    %v2214 = vmul.f32 %v2210, %v710
    %v2215 = vadd.f32 %v2211, 1e-05
    %v2216 = vadd.f32 %v2212, 1e-05
    %v2217 = vadd.f32 %v2213, 1e-05
    %v2218 = vadd.f32 %v2214, 1e-05
    %v2219 = vrsqrt.pop %v2215
    %v2220 = vmul.f32 %v2219, %v2215
    %v2221 = vmul.f32 %v2220, %v2219
    %v2222 = vmul.f32 0.5, %v2221
    %v2223 = vsub.f32 1.5, %v2222
    %v2224 = vmul.f32 %v2219, %v2223
    %vm2225 = vweird.f32 %v2215
    %vm2226 = vweird.f32 %v2219
    %vm2227 = vmor %vm2225, %vm2226
    %v2228 = vsel %vm2227, %v2219, %v2224
    %v2229 = vrsqrt.pop %v2216
    %v2230 = vmul.f32 %v2229, %v2216
    %v2231 = vmul.f32 %v2230, %v2229
    %v2232 = vmul.f32 0.5, %v2231
    %v2233 = vsub.f32 1.5, %v2232
    %v2234 = vmul.f32 %v2229, %v2233
    %vm2235 = vweird.f32 %v2216
    %vm2236 = vweird.f32 %v2229
    %vm2237 = vmor %vm2235, %vm2236
    %v2238 = vsel %vm2237, %v2229, %v2234
    %v2239 = vrsqrt.pop %v2217
    %v2240 = vmul.f32 %v2239, %v2217
    %v2241 = vmul.f32 %v2240, %v2239
    %v2242 = vmul.f32 0.5, %v2241
    %v2243 = vsub.f32 1.5, %v2242
    %v2244 = vmul.f32 %v2239, %v2243
    %vm2245 = vweird.f32 %v2217
    %vm2246 = vweird.f32 %v2239
    %vm2247 = vmor %vm2245, %vm2246
    %v2248 = vsel %vm2247, %v2239, %v2244
    %v2249 = vrsqrt.pop %v2218
    %v2250 = vmul.f32 %v2249, %v2218
    %v2251 = vmul.f32 %v2250, %v2249
    %v2252 = vmul.f32 0.5, %v2251
    %v2253 = vsub.f32 1.5, %v2252
    %v2254 = vmul.f32 %v2249, %v2253
    %vm2255 = vweird.f32 %v2218
    %vm2256 = vweird.f32 %v2249
    %vm2257 = vmor %vm2255, %vm2256
    %v2258 = vsel %vm2257, %v2249, %v2254
    %v2259 = vmul.f32 %v2191, %v2228
    %v2260 = vmul.f32 %v2192, %v2238
    %v2261 = vmul.f32 %v2193, %v2248
    %v2262 = vmul.f32 %v2194, %v2258
    %v2264 = vperm.slane %v2172, 0
    %v2266 = vmul.f32 %v2259, %v2264
    %v2267 = vmul.f32 %v2260, %v2264
    %v2268 = vmul.f32 %v2261, %v2264
    %v2269 = vmul.f32 %v2262, %v2264
    %v2271 = vperm.slane %v2174, 0
    %v2273 = vadd.f32 %v2266, %v2271
    %v2274 = vadd.f32 %v2267, %v2271
    %v2275 = vadd.f32 %v2268, %v2271
    %v2276 = vadd.f32 %v2269, %v2271
    %s2277 = scalar_lea.vmem %s11, 128
    %v2278 = vld [vmem:[%s2277] sm:$0xff]
    %v2279 = vld [vmem:[%s2277 + $0x8] sm:$0xff]
    %v2280 = vld [vmem:[%s2277 + $0x10] sm:$0xff]
    %v2281 = vld [vmem:[%s2277 + $0x18] sm:$0xff]
    %v2282 = vld [vmem:[%s2277 + $0x20] sm:$0xff]
    %v2283 = vld [vmem:[%s2277 + $0x28] sm:$0xff]
    %v2284 = vld [vmem:[%s2277 + $0x30] sm:$0xff]
    %v2285 = vld [vmem:[%s2277 + $0x38] sm:$0xff]
    %v2286 = vld [vmem:[%s2277 + $0x40] sm:$0xff]
    %v2287 = vld [vmem:[%s2277 + $0x48] sm:$0xff]
    %v2288 = vld [vmem:[%s2277 + $0x50] sm:$0xff]
    %v2289 = vld [vmem:[%s2277 + $0x58] sm:$0xff]
    %v2290 = vld [vmem:[%s2277 + $0x60] sm:$0xff]
    %v2291 = vld [vmem:[%s2277 + $0x68] sm:$0xff]
    %v2292 = vld [vmem:[%s2277 + $0x70] sm:$0xff]
    %v2293 = vld [vmem:[%s2277 + $0x78] sm:$0xff]
    %s2294 = scalar_lea.vmem %s12, 128
    %v2295 = vld [vmem:[%s2294] sm:$0xff]
    %v2296 = vld [vmem:[%s2294 + $0x8] sm:$0xff]
    %v2297 = vld [vmem:[%s2294 + $0x10] sm:$0xff]
    %v2298 = vld [vmem:[%s2294 + $0x18] sm:$0xff]
    %v2299 = vld [vmem:[%s2294 + $0x20] sm:$0xff]
    %v2300 = vld [vmem:[%s2294 + $0x28] sm:$0xff]
    %v2301 = vld [vmem:[%s2294 + $0x30] sm:$0xff]
    %v2302 = vld [vmem:[%s2294 + $0x38] sm:$0xff]
    %v2303 = vld [vmem:[%s2294 + $0x40] sm:$0xff]
    %v2304 = vld [vmem:[%s2294 + $0x48] sm:$0xff]
    %v2305 = vld [vmem:[%s2294 + $0x50] sm:$0xff]
    %v2306 = vld [vmem:[%s2294 + $0x58] sm:$0xff]
    %v2307 = vld [vmem:[%s2294 + $0x60] sm:$0xff]
    %v2308 = vld [vmem:[%s2294 + $0x68] sm:$0xff]
    %v2309 = vld [vmem:[%s2294 + $0x70] sm:$0xff]
    %v2310 = vld [vmem:[%s2294 + $0x78] sm:$0xff]
    %2312 = vset.pattern.permute.xlu0 0
    %2313 = vperm.xlu0 %2312, %v2295
    %v2314 = vpop.permute.xlu0 %2313
    %2317 = vset.pattern.permute.xlu0 0
    %2318 = vperm.xlu0 %2317, %v2296
    %v2319 = vpop.permute.xlu0 %2318
    %2322 = vset.pattern.permute.xlu0 0
    %2323 = vperm.xlu0 %2322, %v2297
    %v2324 = vpop.permute.xlu0 %2323
    %2327 = vset.pattern.permute.xlu0 0
    %2328 = vperm.xlu0 %2327, %v2298
    %v2329 = vpop.permute.xlu0 %2328
    %2332 = vset.pattern.permute.xlu0 0
    %2333 = vperm.xlu0 %2332, %v2299
    %v2334 = vpop.permute.xlu0 %2333
    %2337 = vset.pattern.permute.xlu0 0
    %2338 = vperm.xlu0 %2337, %v2300
    %v2339 = vpop.permute.xlu0 %2338
    %2342 = vset.pattern.permute.xlu0 0
    %2343 = vperm.xlu0 %2342, %v2301
    %v2344 = vpop.permute.xlu0 %2343
    %2347 = vset.pattern.permute.xlu0 0
    %2348 = vperm.xlu0 %2347, %v2302
    %v2349 = vpop.permute.xlu0 %2348
    %2352 = vset.pattern.permute.xlu0 0
    %2353 = vperm.xlu0 %2352, %v2303
    %v2354 = vpop.permute.xlu0 %2353
    %2357 = vset.pattern.permute.xlu0 0
    %2358 = vperm.xlu0 %2357, %v2304
    %v2359 = vpop.permute.xlu0 %2358
    %2362 = vset.pattern.permute.xlu0 0
    %2363 = vperm.xlu0 %2362, %v2305
    %v2364 = vpop.permute.xlu0 %2363
    %2367 = vset.pattern.permute.xlu0 0
    %2368 = vperm.xlu0 %2367, %v2306
    %v2369 = vpop.permute.xlu0 %2368
    %2372 = vset.pattern.permute.xlu0 0
    %2373 = vperm.xlu0 %2372, %v2307
    %v2374 = vpop.permute.xlu0 %2373
    %2377 = vset.pattern.permute.xlu0 0
    %2378 = vperm.xlu0 %2377, %v2308
    %v2379 = vpop.permute.xlu0 %2378
    %2382 = vset.pattern.permute.xlu0 0
    %2383 = vperm.xlu0 %2382, %v2309
    %v2384 = vpop.permute.xlu0 %2383
    %2387 = vset.pattern.permute.xlu0 0
    %2388 = vperm.xlu0 %2387, %v2310
    %v2389 = vpop.permute.xlu0 %2388
    %v2392 = vsel %vm691, %v2278, 0
    %v2395 = vsel %vm691, %v2279, 0
    %v2398 = vsel %vm691, %v2280, 0
    %v2401 = vsel %vm691, %v2281, 0
    %v2404 = vsel %vm691, %v2282, 0
    %v2407 = vsel %vm691, %v2283, 0
    %v2410 = vsel %vm691, %v2284, 0
    %v2413 = vsel %vm691, %v2285, 0
    %v2416 = vsel %vm691, %v2286, 0
    %v2419 = vsel %vm691, %v2287, 0
    %v2422 = vsel %vm691, %v2288, 0
    %v2425 = vsel %vm691, %v2289, 0
    %v2428 = vsel %vm691, %v2290, 0
    %v2431 = vsel %vm691, %v2291, 0
    %v2434 = vsel %vm691, %v2292, 0
    %v2437 = vsel %vm691, %v2293, 0
    %2439 = vmatpush.msra.mxu0 0.0
    %2440 = vmatpush.msra.mxu0 0.0
    %2441 = vmatpush.msra.mxu0 0.0
    %2442 = vmatpush.msra.mxu0 0.0
    %2443 = vmatpush.msra.mxu0 0.0
    %2444 = vmatpush.msra.mxu0 0.0
    %2445 = vmatpush.msra.mxu0 0.0
    %2446 = vmatpush.msra.mxu0 0.0
    %2447 = vmatpush.msra.mxu0 0.0
    %2448 = vmatpush.msra.mxu0 0.0
    %2449 = vmatpush.msra.mxu0 0.0
    %2450 = vmatpush.msra.mxu0 0.0
    %2451 = vmatpush.msra.mxu0 %v2276
    %2452 = vmatpush.msra.mxu0 %v2275
    %2453 = vmatpush.msra.mxu0 %v2274
    %2454 = vmatpush.msra.mxu0 %v2273
    %2455 = vmatmul.f32.gmra.mxu0 %v2392
    %v2456 = vpop.f32.mrf.mxu0
    %v2457 = vadd.f32 %v2314, %v2456
    %2458 = vmatmul.f32.gmra.mxu0 %v2395
    %v2459 = vpop.f32.mrf.mxu0
    %v2460 = vadd.f32 %v2319, %v2459
    %2461 = vmatmul.f32.gmra.mxu0 %v2398
    %v2462 = vpop.f32.mrf.mxu0
    %v2463 = vadd.f32 %v2324, %v2462
    %2464 = vmatmul.f32.gmra.mxu0 %v2401
    %v2465 = vpop.f32.mrf.mxu0
    %v2466 = vadd.f32 %v2329, %v2465
    %2467 = vmatmul.f32.gmra.mxu0 %v2404
    %v2468 = vpop.f32.mrf.mxu0
    %v2469 = vadd.f32 %v2334, %v2468
    %2470 = vmatmul.f32.gmra.mxu0 %v2407
    %v2471 = vpop.f32.mrf.mxu0
    %v2472 = vadd.f32 %v2339, %v2471
    %2473 = vmatmul.f32.gmra.mxu0 %v2410
    %v2474 = vpop.f32.mrf.mxu0
    %v2475 = vadd.f32 %v2344, %v2474
    %2476 = vmatmul.f32.gmra.mxu0 %v2413
    %v2477 = vpop.f32.mrf.mxu0
    %v2478 = vadd.f32 %v2349, %v2477
    %2479 = vmatmul.f32.gmra.mxu0 %v2416
    %v2480 = vpop.f32.mrf.mxu0
    %v2481 = vadd.f32 %v2354, %v2480
    %2482 = vmatmul.f32.gmra.mxu0 %v2419
    %v2483 = vpop.f32.mrf.mxu0
    %v2484 = vadd.f32 %v2359, %v2483
    %2485 = vmatmul.f32.gmra.mxu0 %v2422
    %v2486 = vpop.f32.mrf.mxu0
    %v2487 = vadd.f32 %v2364, %v2486
    %2488 = vmatmul.f32.gmra.mxu0 %v2425
    %v2489 = vpop.f32.mrf.mxu0
    %v2490 = vadd.f32 %v2369, %v2489
    %2491 = vmatmul.f32.gmra.mxu0 %v2428
    %v2492 = vpop.f32.mrf.mxu0
    %v2493 = vadd.f32 %v2374, %v2492
    %2494 = vmatmul.f32.gmra.mxu0 %v2431
    %v2495 = vpop.f32.mrf.mxu0
    %v2496 = vadd.f32 %v2379, %v2495
    %2497 = vmatmul.f32.gmra.mxu0 %v2434
    %v2498 = vpop.f32.mrf.mxu0
    %v2499 = vadd.f32 %v2384, %v2498
    %2500 = vmatmul.f32.gmra.mxu0 %v2437
    %v2501 = vpop.f32.mrf.mxu0
    %v2502 = vadd.f32 %v2389, %v2501
    %2503 = vdwg.mxu0
    %v2504 = vmul.f32 %v2457, 0.5
    %v2505 = vmul.f32 %v2460, 0.5
    %v2506 = vmul.f32 %v2463, 0.5
    %v2507 = vmul.f32 %v2466, 0.5
    %v2508 = vmul.f32 %v2469, 0.5
    %v2509 = vmul.f32 %v2472, 0.5
    %v2510 = vmul.f32 %v2475, 0.5
    %v2511 = vmul.f32 %v2478, 0.5
    %v2512 = vmul.f32 %v2481, 0.5
    %v2513 = vmul.f32 %v2484, 0.5
    %v2514 = vmul.f32 %v2487, 0.5
    %v2515 = vmul.f32 %v2490, 0.5
    %v2516 = vmul.f32 %v2493, 0.5
    %v2517 = vmul.f32 %v2496, 0.5
    %v2518 = vmul.f32 %v2499, 0.5
    %v2519 = vmul.f32 %v2502, 0.5
    %v2520 = vmul.f32 %v2457, 0.70710677
    %v2521 = vmul.f32 %v2460, 0.70710677
    %v2522 = vmul.f32 %v2463, 0.70710677
    %v2523 = vmul.f32 %v2466, 0.70710677
    %v2524 = vmul.f32 %v2469, 0.70710677
    %v2525 = vmul.f32 %v2472, 0.70710677
    %v2526 = vmul.f32 %v2475, 0.70710677
    %v2527 = vmul.f32 %v2478, 0.70710677
    %v2528 = vmul.f32 %v2481, 0.70710677
    %v2529 = vmul.f32 %v2484, 0.70710677
    %v2530 = vmul.f32 %v2487, 0.70710677
    %v2531 = vmul.f32 %v2490, 0.70710677
    %v2532 = vmul.f32 %v2493, 0.70710677
    %v2533 = vmul.f32 %v2496, 0.70710677
    %v2534 = vmul.f32 %v2499, 0.70710677
    %v2535 = vmul.f32 %v2502, 0.70710677
    %v2536 = vmul.f32 %v2520, %v2520
    %v2537 = vmin.f32 16.0, %v2536
    %v2538 = vmul.f32 %v2537, 2.1237322e-06
    %v2539 = vadd.f32 %v2538, 0.00028619796
    %v2540 = vmul.f32 %v2537, %v2539
    %v2541 = vadd.f32 %v2540, 0.0036580483
    %v2542 = vmul.f32 %v2537, %v2541
    %v2543 = vadd.f32 %v2542, 0.05243302
    %v2544 = vmul.f32 %v2537, %v2543
    %v2545 = vadd.f32 %v2544, 0.18741608
    %v2546 = vmul.f32 %v2537, %v2545
    %v2547 = vadd.f32 %v2546, 1.1283791
    %v2548 = vmul.f32 %v2520, %v2547
    %v2549 = vmul.f32 %v2537, 3.8918573e-05
    %v2550 = vadd.f32 %v2549, 0.001143296
    %v2551 = vmul.f32 %v2537, %v2550
    %v2552 = vadd.f32 %v2551, 0.014752088
    %v2553 = vmul.f32 %v2537, %v2552
    %v2554 = vadd.f32 %v2553, 0.112945676
    %v2555 = vmul.f32 %v2537, %v2554
    %v2556 = vadd.f32 %v2555, 0.4994258
    %v2557 = vmul.f32 %v2537, %v2556
    %v2558 = vadd.f32 %v2557, 1.0
    %v2559 = vrcp.pop %v2558
    %v2560 = vmul.f32 %v2558, %v2559
    %v2561 = vsub.f32 1.0, %v2560
    %v2562 = vmul.f32 %v2559, %v2561
    %v2563 = vadd.f32 %v2559, %v2562
    %vm2564 = vweird.f32 %v2558
    %vm2565 = vweird.f32 %v2559
    %vm2566 = vmor %vm2564, %vm2565
    %v2567 = vsel %vm2566, %v2559, %v2563
    %v2568 = vand.u32 2147483647, %v2558
    %vm2569 = vcmp.eq.f32.partialorder %v2568, 8.507059e+37
    %v2570 = vand.u32 %v2558, 2147483648
    %v2571 = vor.u32 1.1754944e-38, %v2570
    %v2572 = vsel %vm2569, %v2571, %v2567
    %v2573 = vmul.f32 %v2548, %v2572
    %v2574 = vmin.f32 %v2573, 1.0
    %v2575 = vmax.f32 %v2574, -1.0
    %v2576 = vmul.f32 %v2521, %v2521
    %v2577 = vmin.f32 16.0, %v2576
    %v2578 = vmul.f32 %v2577, 2.1237322e-06
    %v2579 = vadd.f32 %v2578, 0.00028619796
    %v2580 = vmul.f32 %v2577, %v2579
    %v2581 = vadd.f32 %v2580, 0.0036580483
    %v2582 = vmul.f32 %v2577, %v2581
    %v2583 = vadd.f32 %v2582, 0.05243302
    %v2584 = vmul.f32 %v2577, %v2583
    %v2585 = vadd.f32 %v2584, 0.18741608
    %v2586 = vmul.f32 %v2577, %v2585
    %v2587 = vadd.f32 %v2586, 1.1283791
    %v2588 = vmul.f32 %v2521, %v2587
    %v2589 = vmul.f32 %v2577, 3.8918573e-05
    %v2590 = vadd.f32 %v2589, 0.001143296
    %v2591 = vmul.f32 %v2577, %v2590
    %v2592 = vadd.f32 %v2591, 0.014752088
    %v2593 = vmul.f32 %v2577, %v2592
    %v2594 = vadd.f32 %v2593, 0.112945676
    %v2595 = vmul.f32 %v2577, %v2594
    %v2596 = vadd.f32 %v2595, 0.4994258
    %v2597 = vmul.f32 %v2577, %v2596
    %v2598 = vadd.f32 %v2597, 1.0
    %v2599 = vrcp.pop %v2598
    %v2600 = vmul.f32 %v2598, %v2599
    %v2601 = vsub.f32 1.0, %v2600
    %v2602 = vmul.f32 %v2599, %v2601
    %v2603 = vadd.f32 %v2599, %v2602
    %vm2604 = vweird.f32 %v2598
    %vm2605 = vweird.f32 %v2599
    %vm2606 = vmor %vm2604, %vm2605
    %v2607 = vsel %vm2606, %v2599, %v2603
    %v2608 = vand.u32 2147483647, %v2598
    %vm2609 = vcmp.eq.f32.partialorder %v2608, 8.507059e+37
    %v2610 = vand.u32 %v2598, 2147483648
    %v2611 = vor.u32 1.1754944e-38, %v2610
    %v2612 = vsel %vm2609, %v2611, %v2607
    %v2613 = vmul.f32 %v2588, %v2612
    %v2614 = vmin.f32 %v2613, 1.0
    %v2615 = vmax.f32 %v2614, -1.0
    %v2616 = vmul.f32 %v2522, %v2522
    %v2617 = vmin.f32 16.0, %v2616
    %v2618 = vmul.f32 %v2617, 2.1237322e-06
    %v2619 = vadd.f32 %v2618, 0.00028619796
    %v2620 = vmul.f32 %v2617, %v2619
    %v2621 = vadd.f32 %v2620, 0.0036580483
    %v2622 = vmul.f32 %v2617, %v2621
    %v2623 = vadd.f32 %v2622, 0.05243302
    %v2624 = vmul.f32 %v2617, %v2623
    %v2625 = vadd.f32 %v2624, 0.18741608
    %v2626 = vmul.f32 %v2617, %v2625
    %v2627 = vadd.f32 %v2626, 1.1283791
    %v2628 = vmul.f32 %v2522, %v2627
    %v2629 = vmul.f32 %v2617, 3.8918573e-05
    %v2630 = vadd.f32 %v2629, 0.001143296
    %v2631 = vmul.f32 %v2617, %v2630
    %v2632 = vadd.f32 %v2631, 0.014752088
    %v2633 = vmul.f32 %v2617, %v2632
    %v2634 = vadd.f32 %v2633, 0.112945676
    %v2635 = vmul.f32 %v2617, %v2634
    %v2636 = vadd.f32 %v2635, 0.4994258
    %v2637 = vmul.f32 %v2617, %v2636
    %v2638 = vadd.f32 %v2637, 1.0
    %v2639 = vrcp.pop %v2638
    %v2640 = vmul.f32 %v2638, %v2639
    %v2641 = vsub.f32 1.0, %v2640
    %v2642 = vmul.f32 %v2639, %v2641
    %v2643 = vadd.f32 %v2639, %v2642
    %vm2644 = vweird.f32 %v2638
    %vm2645 = vweird.f32 %v2639
    %vm2646 = vmor %vm2644, %vm2645
    %v2647 = vsel %vm2646, %v2639, %v2643
    %v2648 = vand.u32 2147483647, %v2638
    %vm2649 = vcmp.eq.f32.partialorder %v2648, 8.507059e+37
    %v2650 = vand.u32 %v2638, 2147483648
    %v2651 = vor.u32 1.1754944e-38, %v2650
    %v2652 = vsel %vm2649, %v2651, %v2647
    %v2653 = vmul.f32 %v2628, %v2652
    %v2654 = vmin.f32 %v2653, 1.0
    %v2655 = vmax.f32 %v2654, -1.0
    %v2656 = vmul.f32 %v2523, %v2523
    %v2657 = vmin.f32 16.0, %v2656
    %v2658 = vmul.f32 %v2657, 2.1237322e-06
    %v2659 = vadd.f32 %v2658, 0.00028619796
    %v2660 = vmul.f32 %v2657, %v2659
    %v2661 = vadd.f32 %v2660, 0.0036580483
    %v2662 = vmul.f32 %v2657, %v2661
    %v2663 = vadd.f32 %v2662, 0.05243302
    %v2664 = vmul.f32 %v2657, %v2663
    %v2665 = vadd.f32 %v2664, 0.18741608
    %v2666 = vmul.f32 %v2657, %v2665
    %v2667 = vadd.f32 %v2666, 1.1283791
    %v2668 = vmul.f32 %v2523, %v2667
    %v2669 = vmul.f32 %v2657, 3.8918573e-05
    %v2670 = vadd.f32 %v2669, 0.001143296
    %v2671 = vmul.f32 %v2657, %v2670
    %v2672 = vadd.f32 %v2671, 0.014752088
    %v2673 = vmul.f32 %v2657, %v2672
    %v2674 = vadd.f32 %v2673, 0.112945676
    %v2675 = vmul.f32 %v2657, %v2674
    %v2676 = vadd.f32 %v2675, 0.4994258
    %v2677 = vmul.f32 %v2657, %v2676
    %v2678 = vadd.f32 %v2677, 1.0
    %v2679 = vrcp.pop %v2678
    %v2680 = vmul.f32 %v2678, %v2679
    %v2681 = vsub.f32 1.0, %v2680
    %v2682 = vmul.f32 %v2679, %v2681
    %v2683 = vadd.f32 %v2679, %v2682
    %vm2684 = vweird.f32 %v2678
    %vm2685 = vweird.f32 %v2679
    %vm2686 = vmor %vm2684, %vm2685
    %v2687 = vsel %vm2686, %v2679, %v2683
    %v2688 = vand.u32 2147483647, %v2678
    %vm2689 = vcmp.eq.f32.partialorder %v2688, 8.507059e+37
    %v2690 = vand.u32 %v2678, 2147483648
    %v2691 = vor.u32 1.1754944e-38, %v2690
    %v2692 = vsel %vm2689, %v2691, %v2687
    %v2693 = vmul.f32 %v2668, %v2692
    %v2694 = vmin.f32 %v2693, 1.0
    %v2695 = vmax.f32 %v2694, -1.0
    %v2696 = vmul.f32 %v2524, %v2524
    %v2697 = vmin.f32 16.0, %v2696
    %v2698 = vmul.f32 %v2697, 2.1237322e-06
    %v2699 = vadd.f32 %v2698, 0.00028619796
    %v2700 = vmul.f32 %v2697, %v2699
    %v2701 = vadd.f32 %v2700, 0.0036580483
    %v2702 = vmul.f32 %v2697, %v2701
    %v2703 = vadd.f32 %v2702, 0.05243302
    %v2704 = vmul.f32 %v2697, %v2703
    %v2705 = vadd.f32 %v2704, 0.18741608
    %v2706 = vmul.f32 %v2697, %v2705
    %v2707 = vadd.f32 %v2706, 1.1283791
    %v2708 = vmul.f32 %v2524, %v2707
    %v2709 = vmul.f32 %v2697, 3.8918573e-05
    %v2710 = vadd.f32 %v2709, 0.001143296
    %v2711 = vmul.f32 %v2697, %v2710
    %v2712 = vadd.f32 %v2711, 0.014752088
    %v2713 = vmul.f32 %v2697, %v2712
    %v2714 = vadd.f32 %v2713, 0.112945676
    %v2715 = vmul.f32 %v2697, %v2714
    %v2716 = vadd.f32 %v2715, 0.4994258
    %v2717 = vmul.f32 %v2697, %v2716
    %v2718 = vadd.f32 %v2717, 1.0
    %v2719 = vrcp.pop %v2718
    %v2720 = vmul.f32 %v2718, %v2719
    %v2721 = vsub.f32 1.0, %v2720
    %v2722 = vmul.f32 %v2719, %v2721
    %v2723 = vadd.f32 %v2719, %v2722
    %vm2724 = vweird.f32 %v2718
    %vm2725 = vweird.f32 %v2719
    %vm2726 = vmor %vm2724, %vm2725
    %v2727 = vsel %vm2726, %v2719, %v2723
    %v2728 = vand.u32 2147483647, %v2718
    %vm2729 = vcmp.eq.f32.partialorder %v2728, 8.507059e+37
    %v2730 = vand.u32 %v2718, 2147483648
    %v2731 = vor.u32 1.1754944e-38, %v2730
    %v2732 = vsel %vm2729, %v2731, %v2727
    %v2733 = vmul.f32 %v2708, %v2732
    %v2734 = vmin.f32 %v2733, 1.0
    %v2735 = vmax.f32 %v2734, -1.0
    %v2736 = vmul.f32 %v2525, %v2525
    %v2737 = vmin.f32 16.0, %v2736
    %v2738 = vmul.f32 %v2737, 2.1237322e-06
    %v2739 = vadd.f32 %v2738, 0.00028619796
    %v2740 = vmul.f32 %v2737, %v2739
    %v2741 = vadd.f32 %v2740, 0.0036580483
    %v2742 = vmul.f32 %v2737, %v2741
    %v2743 = vadd.f32 %v2742, 0.05243302
    %v2744 = vmul.f32 %v2737, %v2743
    %v2745 = vadd.f32 %v2744, 0.18741608
    %v2746 = vmul.f32 %v2737, %v2745
    %v2747 = vadd.f32 %v2746, 1.1283791
    %v2748 = vmul.f32 %v2525, %v2747
    %v2749 = vmul.f32 %v2737, 3.8918573e-05
    %v2750 = vadd.f32 %v2749, 0.001143296
    %v2751 = vmul.f32 %v2737, %v2750
    %v2752 = vadd.f32 %v2751, 0.014752088
    %v2753 = vmul.f32 %v2737, %v2752
    %v2754 = vadd.f32 %v2753, 0.112945676
    %v2755 = vmul.f32 %v2737, %v2754
    %v2756 = vadd.f32 %v2755, 0.4994258
    %v2757 = vmul.f32 %v2737, %v2756
    %v2758 = vadd.f32 %v2757, 1.0
    %v2759 = vrcp.pop %v2758
    %v2760 = vmul.f32 %v2758, %v2759
    %v2761 = vsub.f32 1.0, %v2760
    %v2762 = vmul.f32 %v2759, %v2761
    %v2763 = vadd.f32 %v2759, %v2762
    %vm2764 = vweird.f32 %v2758
    %vm2765 = vweird.f32 %v2759
    %vm2766 = vmor %vm2764, %vm2765
    %v2767 = vsel %vm2766, %v2759, %v2763
    %v2768 = vand.u32 2147483647, %v2758
    %vm2769 = vcmp.eq.f32.partialorder %v2768, 8.507059e+37
    %v2770 = vand.u32 %v2758, 2147483648
    %v2771 = vor.u32 1.1754944e-38, %v2770
    %v2772 = vsel %vm2769, %v2771, %v2767
    %v2773 = vmul.f32 %v2748, %v2772
    %v2774 = vmin.f32 %v2773, 1.0
    %v2775 = vmax.f32 %v2774, -1.0
    %v2776 = vmul.f32 %v2526, %v2526
    %v2777 = vmin.f32 16.0, %v2776
    %v2778 = vmul.f32 %v2777, 2.1237322e-06
    %v2779 = vadd.f32 %v2778, 0.00028619796
    %v2780 = vmul.f32 %v2777, %v2779
    %v2781 = vadd.f32 %v2780, 0.0036580483
    %v2782 = vmul.f32 %v2777, %v2781
    %v2783 = vadd.f32 %v2782, 0.05243302
    %v2784 = vmul.f32 %v2777, %v2783
    %v2785 = vadd.f32 %v2784, 0.18741608
    %v2786 = vmul.f32 %v2777, %v2785
    %v2787 = vadd.f32 %v2786, 1.1283791
    %v2788 = vmul.f32 %v2526, %v2787
    %v2789 = vmul.f32 %v2777, 3.8918573e-05
    %v2790 = vadd.f32 %v2789, 0.001143296
    %v2791 = vmul.f32 %v2777, %v2790
    %v2792 = vadd.f32 %v2791, 0.014752088
    %v2793 = vmul.f32 %v2777, %v2792
    %v2794 = vadd.f32 %v2793, 0.112945676
    %v2795 = vmul.f32 %v2777, %v2794
    %v2796 = vadd.f32 %v2795, 0.4994258
    %v2797 = vmul.f32 %v2777, %v2796
    %v2798 = vadd.f32 %v2797, 1.0
    %v2799 = vrcp.pop %v2798
    %v2800 = vmul.f32 %v2798, %v2799
    %v2801 = vsub.f32 1.0, %v2800
    %v2802 = vmul.f32 %v2799, %v2801
    %v2803 = vadd.f32 %v2799, %v2802
    %vm2804 = vweird.f32 %v2798
    %vm2805 = vweird.f32 %v2799
    %vm2806 = vmor %vm2804, %vm2805
    %v2807 = vsel %vm2806, %v2799, %v2803
    %v2808 = vand.u32 2147483647, %v2798
    %vm2809 = vcmp.eq.f32.partialorder %v2808, 8.507059e+37
    %v2810 = vand.u32 %v2798, 2147483648
    %v2811 = vor.u32 1.1754944e-38, %v2810
    %v2812 = vsel %vm2809, %v2811, %v2807
    %v2813 = vmul.f32 %v2788, %v2812
    %v2814 = vmin.f32 %v2813, 1.0
    %v2815 = vmax.f32 %v2814, -1.0
    %v2816 = vmul.f32 %v2527, %v2527
    %v2817 = vmin.f32 16.0, %v2816
    %v2818 = vmul.f32 %v2817, 2.1237322e-06
    %v2819 = vadd.f32 %v2818, 0.00028619796
    %v2820 = vmul.f32 %v2817, %v2819
    %v2821 = vadd.f32 %v2820, 0.0036580483
    %v2822 = vmul.f32 %v2817, %v2821
    %v2823 = vadd.f32 %v2822, 0.05243302
    %v2824 = vmul.f32 %v2817, %v2823
    %v2825 = vadd.f32 %v2824, 0.18741608
    %v2826 = vmul.f32 %v2817, %v2825
    %v2827 = vadd.f32 %v2826, 1.1283791
    %v2828 = vmul.f32 %v2527, %v2827
    %v2829 = vmul.f32 %v2817, 3.8918573e-05
    %v2830 = vadd.f32 %v2829, 0.001143296
    %v2831 = vmul.f32 %v2817, %v2830
    %v2832 = vadd.f32 %v2831, 0.014752088
    %v2833 = vmul.f32 %v2817, %v2832
    %v2834 = vadd.f32 %v2833, 0.112945676
    %v2835 = vmul.f32 %v2817, %v2834
    %v2836 = vadd.f32 %v2835, 0.4994258
    %v2837 = vmul.f32 %v2817, %v2836
    %v2838 = vadd.f32 %v2837, 1.0
    %v2839 = vrcp.pop %v2838
    %v2840 = vmul.f32 %v2838, %v2839
    %v2841 = vsub.f32 1.0, %v2840
    %v2842 = vmul.f32 %v2839, %v2841
    %v2843 = vadd.f32 %v2839, %v2842
    %vm2844 = vweird.f32 %v2838
    %vm2845 = vweird.f32 %v2839
    %vm2846 = vmor %vm2844, %vm2845
    %v2847 = vsel %vm2846, %v2839, %v2843
    %v2848 = vand.u32 2147483647, %v2838
    %vm2849 = vcmp.eq.f32.partialorder %v2848, 8.507059e+37
    %v2850 = vand.u32 %v2838, 2147483648
    %v2851 = vor.u32 1.1754944e-38, %v2850
    %v2852 = vsel %vm2849, %v2851, %v2847
    %v2853 = vmul.f32 %v2828, %v2852
    %v2854 = vmin.f32 %v2853, 1.0
    %v2855 = vmax.f32 %v2854, -1.0
    %v2856 = vmul.f32 %v2528, %v2528
    %v2857 = vmin.f32 16.0, %v2856
    %v2858 = vmul.f32 %v2857, 2.1237322e-06
    %v2859 = vadd.f32 %v2858, 0.00028619796
    %v2860 = vmul.f32 %v2857, %v2859
    %v2861 = vadd.f32 %v2860, 0.0036580483
    %v2862 = vmul.f32 %v2857, %v2861
    %v2863 = vadd.f32 %v2862, 0.05243302
    %v2864 = vmul.f32 %v2857, %v2863
    %v2865 = vadd.f32 %v2864, 0.18741608
    %v2866 = vmul.f32 %v2857, %v2865
    %v2867 = vadd.f32 %v2866, 1.1283791
    %v2868 = vmul.f32 %v2528, %v2867
    %v2869 = vmul.f32 %v2857, 3.8918573e-05
    %v2870 = vadd.f32 %v2869, 0.001143296
    %v2871 = vmul.f32 %v2857, %v2870
    %v2872 = vadd.f32 %v2871, 0.014752088
    %v2873 = vmul.f32 %v2857, %v2872
    %v2874 = vadd.f32 %v2873, 0.112945676
    %v2875 = vmul.f32 %v2857, %v2874
    %v2876 = vadd.f32 %v2875, 0.4994258
    %v2877 = vmul.f32 %v2857, %v2876
    %v2878 = vadd.f32 %v2877, 1.0
    %v2879 = vrcp.pop %v2878
    %v2880 = vmul.f32 %v2878, %v2879
    %v2881 = vsub.f32 1.0, %v2880
    %v2882 = vmul.f32 %v2879, %v2881
    %v2883 = vadd.f32 %v2879, %v2882
    %vm2884 = vweird.f32 %v2878
    %vm2885 = vweird.f32 %v2879
    %vm2886 = vmor %vm2884, %vm2885
    %v2887 = vsel %vm2886, %v2879, %v2883
    %v2888 = vand.u32 2147483647, %v2878
    %vm2889 = vcmp.eq.f32.partialorder %v2888, 8.507059e+37
    %v2890 = vand.u32 %v2878, 2147483648
    %v2891 = vor.u32 1.1754944e-38, %v2890
    %v2892 = vsel %vm2889, %v2891, %v2887
    %v2893 = vmul.f32 %v2868, %v2892
    %v2894 = vmin.f32 %v2893, 1.0
    %v2895 = vmax.f32 %v2894, -1.0
    %v2896 = vmul.f32 %v2529, %v2529
    %v2897 = vmin.f32 16.0, %v2896
    %v2898 = vmul.f32 %v2897, 2.1237322e-06
    %v2899 = vadd.f32 %v2898, 0.00028619796
    %v2900 = vmul.f32 %v2897, %v2899
    %v2901 = vadd.f32 %v2900, 0.0036580483
    %v2902 = vmul.f32 %v2897, %v2901
    %v2903 = vadd.f32 %v2902, 0.05243302
    %v2904 = vmul.f32 %v2897, %v2903
    %v2905 = vadd.f32 %v2904, 0.18741608
    %v2906 = vmul.f32 %v2897, %v2905
    %v2907 = vadd.f32 %v2906, 1.1283791
    %v2908 = vmul.f32 %v2529, %v2907
    %v2909 = vmul.f32 %v2897, 3.8918573e-05
    %v2910 = vadd.f32 %v2909, 0.001143296
    %v2911 = vmul.f32 %v2897, %v2910
    %v2912 = vadd.f32 %v2911, 0.014752088
    %v2913 = vmul.f32 %v2897, %v2912
    %v2914 = vadd.f32 %v2913, 0.112945676
    %v2915 = vmul.f32 %v2897, %v2914
    %v2916 = vadd.f32 %v2915, 0.4994258
    %v2917 = vmul.f32 %v2897, %v2916
    %v2918 = vadd.f32 %v2917, 1.0
    %v2919 = vrcp.pop %v2918
    %v2920 = vmul.f32 %v2918, %v2919
    %v2921 = vsub.f32 1.0, %v2920
    %v2922 = vmul.f32 %v2919, %v2921
    %v2923 = vadd.f32 %v2919, %v2922
    %vm2924 = vweird.f32 %v2918
    %vm2925 = vweird.f32 %v2919
    %vm2926 = vmor %vm2924, %vm2925
    %v2927 = vsel %vm2926, %v2919, %v2923
    %v2928 = vand.u32 2147483647, %v2918
    %vm2929 = vcmp.eq.f32.partialorder %v2928, 8.507059e+37
    %v2930 = vand.u32 %v2918, 2147483648
    %v2931 = vor.u32 1.1754944e-38, %v2930
    %v2932 = vsel %vm2929, %v2931, %v2927
    %v2933 = vmul.f32 %v2908, %v2932
    %v2934 = vmin.f32 %v2933, 1.0
    %v2935 = vmax.f32 %v2934, -1.0
    %v2936 = vmul.f32 %v2530, %v2530
    %v2937 = vmin.f32 16.0, %v2936
    %v2938 = vmul.f32 %v2937, 2.1237322e-06
    %v2939 = vadd.f32 %v2938, 0.00028619796
    %v2940 = vmul.f32 %v2937, %v2939
    %v2941 = vadd.f32 %v2940, 0.0036580483
    %v2942 = vmul.f32 %v2937, %v2941
    %v2943 = vadd.f32 %v2942, 0.05243302
    %v2944 = vmul.f32 %v2937, %v2943
    %v2945 = vadd.f32 %v2944, 0.18741608
    %v2946 = vmul.f32 %v2937, %v2945
    %v2947 = vadd.f32 %v2946, 1.1283791
    %v2948 = vmul.f32 %v2530, %v2947
    %v2949 = vmul.f32 %v2937, 3.8918573e-05
    %v2950 = vadd.f32 %v2949, 0.001143296
    %v2951 = vmul.f32 %v2937, %v2950
    %v2952 = vadd.f32 %v2951, 0.014752088
    %v2953 = vmul.f32 %v2937, %v2952
    %v2954 = vadd.f32 %v2953, 0.112945676
    %v2955 = vmul.f32 %v2937, %v2954
    %v2956 = vadd.f32 %v2955, 0.4994258
    %v2957 = vmul.f32 %v2937, %v2956
    %v2958 = vadd.f32 %v2957, 1.0
    %v2959 = vrcp.pop %v2958
    %v2960 = vmul.f32 %v2958, %v2959
    %v2961 = vsub.f32 1.0, %v2960
    %v2962 = vmul.f32 %v2959, %v2961
    %v2963 = vadd.f32 %v2959, %v2962
    %vm2964 = vweird.f32 %v2958
    %vm2965 = vweird.f32 %v2959
    %vm2966 = vmor %vm2964, %vm2965
    %v2967 = vsel %vm2966, %v2959, %v2963
    %v2968 = vand.u32 2147483647, %v2958
    %vm2969 = vcmp.eq.f32.partialorder %v2968, 8.507059e+37
    %v2970 = vand.u32 %v2958, 2147483648
    %v2971 = vor.u32 1.1754944e-38, %v2970
    %v2972 = vsel %vm2969, %v2971, %v2967
    %v2973 = vmul.f32 %v2948, %v2972
    %v2974 = vmin.f32 %v2973, 1.0
    %v2975 = vmax.f32 %v2974, -1.0
    %v2976 = vmul.f32 %v2531, %v2531
    %v2977 = vmin.f32 16.0, %v2976
    %v2978 = vmul.f32 %v2977, 2.1237322e-06
    %v2979 = vadd.f32 %v2978, 0.00028619796
    %v2980 = vmul.f32 %v2977, %v2979
    %v2981 = vadd.f32 %v2980, 0.0036580483
    %v2982 = vmul.f32 %v2977, %v2981
    %v2983 = vadd.f32 %v2982, 0.05243302
    %v2984 = vmul.f32 %v2977, %v2983
    %v2985 = vadd.f32 %v2984, 0.18741608
    %v2986 = vmul.f32 %v2977, %v2985
    %v2987 = vadd.f32 %v2986, 1.1283791
    %v2988 = vmul.f32 %v2531, %v2987
    %v2989 = vmul.f32 %v2977, 3.8918573e-05
    %v2990 = vadd.f32 %v2989, 0.001143296
    %v2991 = vmul.f32 %v2977, %v2990
    %v2992 = vadd.f32 %v2991, 0.014752088
    %v2993 = vmul.f32 %v2977, %v2992
    %v2994 = vadd.f32 %v2993, 0.112945676
    %v2995 = vmul.f32 %v2977, %v2994
    %v2996 = vadd.f32 %v2995, 0.4994258
    %v2997 = vmul.f32 %v2977, %v2996
    %v2998 = vadd.f32 %v2997, 1.0
    %v2999 = vrcp.pop %v2998
    %v3000 = vmul.f32 %v2998, %v2999
    %v3001 = vsub.f32 1.0, %v3000
    %v3002 = vmul.f32 %v2999, %v3001
    %v3003 = vadd.f32 %v2999, %v3002
    %vm3004 = vweird.f32 %v2998
    %vm3005 = vweird.f32 %v2999
    %vm3006 = vmor %vm3004, %vm3005
    %v3007 = vsel %vm3006, %v2999, %v3003
    %v3008 = vand.u32 2147483647, %v2998
    %vm3009 = vcmp.eq.f32.partialorder %v3008, 8.507059e+37
    %v3010 = vand.u32 %v2998, 2147483648
    %v3011 = vor.u32 1.1754944e-38, %v3010
    %v3012 = vsel %vm3009, %v3011, %v3007
    %v3013 = vmul.f32 %v2988, %v3012
    %v3014 = vmin.f32 %v3013, 1.0
    %v3015 = vmax.f32 %v3014, -1.0
    %v3016 = vmul.f32 %v2532, %v2532
    %v3017 = vmin.f32 16.0, %v3016
    %v3018 = vmul.f32 %v3017, 2.1237322e-06
    %v3019 = vadd.f32 %v3018, 0.00028619796
    %v3020 = vmul.f32 %v3017, %v3019
    %v3021 = vadd.f32 %v3020, 0.0036580483
    %v3022 = vmul.f32 %v3017, %v3021
    %v3023 = vadd.f32 %v3022, 0.05243302
    %v3024 = vmul.f32 %v3017, %v3023
    %v3025 = vadd.f32 %v3024, 0.18741608
    %v3026 = vmul.f32 %v3017, %v3025
    %v3027 = vadd.f32 %v3026, 1.1283791
    %v3028 = vmul.f32 %v2532, %v3027
    %v3029 = vmul.f32 %v3017, 3.8918573e-05
    %v3030 = vadd.f32 %v3029, 0.001143296
    %v3031 = vmul.f32 %v3017, %v3030
    %v3032 = vadd.f32 %v3031, 0.014752088
    %v3033 = vmul.f32 %v3017, %v3032
    %v3034 = vadd.f32 %v3033, 0.112945676
    %v3035 = vmul.f32 %v3017, %v3034
    %v3036 = vadd.f32 %v3035, 0.4994258
    %v3037 = vmul.f32 %v3017, %v3036
    %v3038 = vadd.f32 %v3037, 1.0
    %v3039 = vrcp.pop %v3038
    %v3040 = vmul.f32 %v3038, %v3039
    %v3041 = vsub.f32 1.0, %v3040
    %v3042 = vmul.f32 %v3039, %v3041
    %v3043 = vadd.f32 %v3039, %v3042
    %vm3044 = vweird.f32 %v3038
    %vm3045 = vweird.f32 %v3039
    %vm3046 = vmor %vm3044, %vm3045
    %v3047 = vsel %vm3046, %v3039, %v3043
    %v3048 = vand.u32 2147483647, %v3038
    %vm3049 = vcmp.eq.f32.partialorder %v3048, 8.507059e+37
    %v3050 = vand.u32 %v3038, 2147483648
    %v3051 = vor.u32 1.1754944e-38, %v3050
    %v3052 = vsel %vm3049, %v3051, %v3047
    %v3053 = vmul.f32 %v3028, %v3052
    %v3054 = vmin.f32 %v3053, 1.0
    %v3055 = vmax.f32 %v3054, -1.0
    %v3056 = vmul.f32 %v2533, %v2533
    %v3057 = vmin.f32 16.0, %v3056
    %v3058 = vmul.f32 %v3057, 2.1237322e-06
    %v3059 = vadd.f32 %v3058, 0.00028619796
    %v3060 = vmul.f32 %v3057, %v3059
    %v3061 = vadd.f32 %v3060, 0.0036580483
    %v3062 = vmul.f32 %v3057, %v3061
    %v3063 = vadd.f32 %v3062, 0.05243302
    %v3064 = vmul.f32 %v3057, %v3063
    %v3065 = vadd.f32 %v3064, 0.18741608
    %v3066 = vmul.f32 %v3057, %v3065
    %v3067 = vadd.f32 %v3066, 1.1283791
    %v3068 = vmul.f32 %v2533, %v3067
    %v3069 = vmul.f32 %v3057, 3.8918573e-05
    %v3070 = vadd.f32 %v3069, 0.001143296
    %v3071 = vmul.f32 %v3057, %v3070
    %v3072 = vadd.f32 %v3071, 0.014752088
    %v3073 = vmul.f32 %v3057, %v3072
    %v3074 = vadd.f32 %v3073, 0.112945676
    %v3075 = vmul.f32 %v3057, %v3074
    %v3076 = vadd.f32 %v3075, 0.4994258
    %v3077 = vmul.f32 %v3057, %v3076
    %v3078 = vadd.f32 %v3077, 1.0
    %v3079 = vrcp.pop %v3078
    %v3080 = vmul.f32 %v3078, %v3079
    %v3081 = vsub.f32 1.0, %v3080
    %v3082 = vmul.f32 %v3079, %v3081
    %v3083 = vadd.f32 %v3079, %v3082
    %vm3084 = vweird.f32 %v3078
    %vm3085 = vweird.f32 %v3079
    %vm3086 = vmor %vm3084, %vm3085
    %v3087 = vsel %vm3086, %v3079, %v3083
    %v3088 = vand.u32 2147483647, %v3078
    %vm3089 = vcmp.eq.f32.partialorder %v3088, 8.507059e+37
    %v3090 = vand.u32 %v3078, 2147483648
    %v3091 = vor.u32 1.1754944e-38, %v3090
    %v3092 = vsel %vm3089, %v3091, %v3087
    %v3093 = vmul.f32 %v3068, %v3092
    %v3094 = vmin.f32 %v3093, 1.0
    %v3095 = vmax.f32 %v3094, -1.0
    %v3096 = vmul.f32 %v2534, %v2534
    %v3097 = vmin.f32 16.0, %v3096
    %v3098 = vmul.f32 %v3097, 2.1237322e-06
    %v3099 = vadd.f32 %v3098, 0.00028619796
    %v3100 = vmul.f32 %v3097, %v3099
    %v3101 = vadd.f32 %v3100, 0.0036580483
    %v3102 = vmul.f32 %v3097, %v3101
    %v3103 = vadd.f32 %v3102, 0.05243302
    %v3104 = vmul.f32 %v3097, %v3103
    %v3105 = vadd.f32 %v3104, 0.18741608
    %v3106 = vmul.f32 %v3097, %v3105
    %v3107 = vadd.f32 %v3106, 1.1283791
    %v3108 = vmul.f32 %v2534, %v3107
    %v3109 = vmul.f32 %v3097, 3.8918573e-05
    %v3110 = vadd.f32 %v3109, 0.001143296
    %v3111 = vmul.f32 %v3097, %v3110
    %v3112 = vadd.f32 %v3111, 0.014752088
    %v3113 = vmul.f32 %v3097, %v3112
    %v3114 = vadd.f32 %v3113, 0.112945676
    %v3115 = vmul.f32 %v3097, %v3114
    %v3116 = vadd.f32 %v3115, 0.4994258
    %v3117 = vmul.f32 %v3097, %v3116
    %v3118 = vadd.f32 %v3117, 1.0
    %v3119 = vrcp.pop %v3118
    %v3120 = vmul.f32 %v3118, %v3119
    %v3121 = vsub.f32 1.0, %v3120
    %v3122 = vmul.f32 %v3119, %v3121
    %v3123 = vadd.f32 %v3119, %v3122
    %vm3124 = vweird.f32 %v3118
    %vm3125 = vweird.f32 %v3119
    %vm3126 = vmor %vm3124, %vm3125
    %v3127 = vsel %vm3126, %v3119, %v3123
    %v3128 = vand.u32 2147483647, %v3118
    %vm3129 = vcmp.eq.f32.partialorder %v3128, 8.507059e+37
    %v3130 = vand.u32 %v3118, 2147483648
    %v3131 = vor.u32 1.1754944e-38, %v3130
    %v3132 = vsel %vm3129, %v3131, %v3127
    %v3133 = vmul.f32 %v3108, %v3132
    %v3134 = vmin.f32 %v3133, 1.0
    %v3135 = vmax.f32 %v3134, -1.0
    %v3136 = vmul.f32 %v2535, %v2535
    %v3137 = vmin.f32 16.0, %v3136
    %v3138 = vmul.f32 %v3137, 2.1237322e-06
    %v3139 = vadd.f32 %v3138, 0.00028619796
    %v3140 = vmul.f32 %v3137, %v3139
    %v3141 = vadd.f32 %v3140, 0.0036580483
    %v3142 = vmul.f32 %v3137, %v3141
    %v3143 = vadd.f32 %v3142, 0.05243302
    %v3144 = vmul.f32 %v3137, %v3143
    %v3145 = vadd.f32 %v3144, 0.18741608
    %v3146 = vmul.f32 %v3137, %v3145
    %v3147 = vadd.f32 %v3146, 1.1283791
    %v3148 = vmul.f32 %v2535, %v3147
    %v3149 = vmul.f32 %v3137, 3.8918573e-05
    %v3150 = vadd.f32 %v3149, 0.001143296
    %v3151 = vmul.f32 %v3137, %v3150
    %v3152 = vadd.f32 %v3151, 0.014752088
    %v3153 = vmul.f32 %v3137, %v3152
    %v3154 = vadd.f32 %v3153, 0.112945676
    %v3155 = vmul.f32 %v3137, %v3154
    %v3156 = vadd.f32 %v3155, 0.4994258
    %v3157 = vmul.f32 %v3137, %v3156
    %v3158 = vadd.f32 %v3157, 1.0
    %v3159 = vrcp.pop %v3158
    %v3160 = vmul.f32 %v3158, %v3159
    %v3161 = vsub.f32 1.0, %v3160
    %v3162 = vmul.f32 %v3159, %v3161
    %v3163 = vadd.f32 %v3159, %v3162
    %vm3164 = vweird.f32 %v3158
    %vm3165 = vweird.f32 %v3159
    %vm3166 = vmor %vm3164, %vm3165
    %v3167 = vsel %vm3166, %v3159, %v3163
    %v3168 = vand.u32 2147483647, %v3158
    %vm3169 = vcmp.eq.f32.partialorder %v3168, 8.507059e+37
    %v3170 = vand.u32 %v3158, 2147483648
    %v3171 = vor.u32 1.1754944e-38, %v3170
    %v3172 = vsel %vm3169, %v3171, %v3167
    %v3173 = vmul.f32 %v3148, %v3172
    %v3174 = vmin.f32 %v3173, 1.0
    %v3175 = vmax.f32 %v3174, -1.0
    %v3176 = vadd.f32 %v2575, 1.0
    %v3177 = vadd.f32 %v2615, 1.0
    %v3178 = vadd.f32 %v2655, 1.0
    %v3179 = vadd.f32 %v2695, 1.0
    %v3180 = vadd.f32 %v2735, 1.0
    %v3181 = vadd.f32 %v2775, 1.0
    %v3182 = vadd.f32 %v2815, 1.0
    %v3183 = vadd.f32 %v2855, 1.0
    %v3184 = vadd.f32 %v2895, 1.0
    %v3185 = vadd.f32 %v2935, 1.0
    %v3186 = vadd.f32 %v2975, 1.0
    %v3187 = vadd.f32 %v3015, 1.0
    %v3188 = vadd.f32 %v3055, 1.0
    %v3189 = vadd.f32 %v3095, 1.0
    %v3190 = vadd.f32 %v3135, 1.0
    %v3191 = vadd.f32 %v3175, 1.0
    %v3192 = vmul.f32 %v2504, %v3176
    %v3193 = vmul.f32 %v2505, %v3177
    %v3194 = vmul.f32 %v2506, %v3178
    %v3195 = vmul.f32 %v2507, %v3179
    %v3196 = vmul.f32 %v2508, %v3180
    %v3197 = vmul.f32 %v2509, %v3181
    %v3198 = vmul.f32 %v2510, %v3182
    %v3199 = vmul.f32 %v2511, %v3183
    %v3200 = vmul.f32 %v2512, %v3184
    %v3201 = vmul.f32 %v2513, %v3185
    %v3202 = vmul.f32 %v2514, %v3186
    %v3203 = vmul.f32 %v2515, %v3187
    %v3204 = vmul.f32 %v2516, %v3188
    %v3205 = vmul.f32 %v2517, %v3189
    %v3206 = vmul.f32 %v2518, %v3190
    %v3207 = vmul.f32 %v2519, %v3191
    %s3208 = scalar_lea.vmem %s13, 32
    %v3209 = vld [vmem:[%s3208] sm:$0xff]
    %v3210 = vld [vmem:[%s3208 + $0x8] sm:$0xff]
    %v3211 = vld [vmem:[%s3208 + $0x10] sm:$0xff]
    %v3212 = vld [vmem:[%s3208 + $0x18] sm:$0xff]
    %s3213 = scalar_lea.vmem %s14, 32
    %v3214 = vld [vmem:[%s3213] sm:$0xff]
    %v3215 = vld [vmem:[%s3213 + $0x8] sm:$0xff]
    %v3216 = vld [vmem:[%s3213 + $0x10] sm:$0xff]
    %v3217 = vld [vmem:[%s3213 + $0x18] sm:$0xff]
    %3219 = vset.pattern.permute.xlu0 0
    %3220 = vperm.xlu0 %3219, %v3214
    %v3221 = vpop.permute.xlu0 %3220
    %3224 = vset.pattern.permute.xlu0 0
    %3225 = vperm.xlu0 %3224, %v3215
    %v3226 = vpop.permute.xlu0 %3225
    %3229 = vset.pattern.permute.xlu0 0
    %3230 = vperm.xlu0 %3229, %v3216
    %v3231 = vpop.permute.xlu0 %3230
    %3234 = vset.pattern.permute.xlu0 0
    %3235 = vperm.xlu0 %3234, %v3217
    %v3236 = vpop.permute.xlu0 %3235
    %3238 = vmatpush.msra.mxu0 %v3207
    %3239 = vmatpush.msra.mxu0 %v3206
    %3240 = vmatpush.msra.mxu0 %v3205
    %3241 = vmatpush.msra.mxu0 %v3204
    %3242 = vmatpush.msra.mxu0 %v3203
    %3243 = vmatpush.msra.mxu0 %v3202
    %3244 = vmatpush.msra.mxu0 %v3201
    %3245 = vmatpush.msra.mxu0 %v3200
    %3246 = vmatpush.msra.mxu0 %v3199
    %3247 = vmatpush.msra.mxu0 %v3198
    %3248 = vmatpush.msra.mxu0 %v3197
    %3249 = vmatpush.msra.mxu0 %v3196
    %3250 = vmatpush.msra.mxu0 %v3195
    %3251 = vmatpush.msra.mxu0 %v3194
    %3252 = vmatpush.msra.mxu0 %v3193
    %3253 = vmatpush.msra.mxu0 %v3192
    %3254 = vmatmul.f32.gmra.mxu0 %v3209
    %v3255 = vpop.f32.mrf.mxu0
    %v3256 = vadd.f32 %v3221, %v3255
    %3257 = vmatmul.f32.gmra.mxu0 %v3210
    %v3258 = vpop.f32.mrf.mxu0
    %v3259 = vadd.f32 %v3226, %v3258
    %3260 = vmatmul.f32.gmra.mxu0 %v3211
    %v3261 = vpop.f32.mrf.mxu0
    %v3262 = vadd.f32 %v3231, %v3261
    %3263 = vmatmul.f32.gmra.mxu0 %v3212
    %v3264 = vpop.f32.mrf.mxu0
    %v3265 = vadd.f32 %v3236, %v3264
    %3266 = vdwg.mxu0
    %v3267 = vadd.f32 %v2167, %v3256
    %v3268 = vadd.f32 %v2168, %v3259
    %v3269 = vadd.f32 %v2169, %v3262
    %v3270 = vadd.f32 %v2170, %v3265
    %s3271 = scalar_lea.vmem %s15, 1
    %v3272 = vld [vmem:[%s3271] sm:$0x1]
    %s3273 = scalar_lea.vmem %s16, 1
    %v3274 = vld [vmem:[%s3273] sm:$0x1]
    %v3275 = vsel %vm691, %v3267, 0.0
    %3276 = vadd.xlane.f32.xlu0 %v3275
    %v3277 = vpop.xlane.xlu0 %3276
    %v3278 = vsel %vm691, %v3268, 0.0
    %3279 = vadd.xlane.f32.xlu0 %v3278
    %v3280 = vpop.xlane.xlu0 %3279
    %v3281 = vsel %vm691, %v3269, 0.0
    %3282 = vadd.xlane.f32.xlu0 %v3281
    %v3283 = vpop.xlane.xlu0 %3282
    %v3284 = vsel %vm691, %v3270, 0.0
    %3285 = vadd.xlane.f32.xlu0 %v3284
    %v3286 = vpop.xlane.xlu0 %3285
    %v3287 = vmul.f32 %v3277, %v710
    %v3288 = vmul.f32 %v3280, %v710
    %v3289 = vmul.f32 %v3283, %v710
    %v3290 = vmul.f32 %v3286, %v710
    %v3291 = vsub.f32 %v3267, %v3287
    %v3292 = vsub.f32 %v3268, %v3288
    %v3293 = vsub.f32 %v3269, %v3289
    %v3294 = vsub.f32 %v3270, %v3290
    %v3295 = vmul.f32 %v3291, %v3291
    %v3296 = vmul.f32 %v3292, %v3292
    %v3297 = vmul.f32 %v3293, %v3293
    %v3298 = vmul.f32 %v3294, %v3294
    %v3299 = vsel %vm691, %v3295, 0.0
    %3300 = vadd.xlane.f32.xlu0 %v3299
    %v3301 = vpop.xlane.xlu0 %3300
    %v3302 = vsel %vm691, %v3296, 0.0
    %3303 = vadd.xlane.f32.xlu0 %v3302
    %v3304 = vpop.xlane.xlu0 %3303
    %v3305 = vsel %vm691, %v3297, 0.0
    %3306 = vadd.xlane.f32.xlu0 %v3305
    %v3307 = vpop.xlane.xlu0 %3306
    %v3308 = vsel %vm691, %v3298, 0.0
    %3309 = vadd.xlane.f32.xlu0 %v3308
    %v3310 = vpop.xlane.xlu0 %3309
    %v3311 = vmul.f32 %v3301, %v710
    %v3312 = vmul.f32 %v3304, %v710
    %v3313 = vmul.f32 %v3307, %v710
    %v3314 = vmul.f32 %v3310, %v710
    %v3315 = vadd.f32 %v3311, 1e-05
    %v3316 = vadd.f32 %v3312, 1e-05
    %v3317 = vadd.f32 %v3313, 1e-05
    %v3318 = vadd.f32 %v3314, 1e-05
    %v3319 = vrsqrt.pop %v3315
    %v3320 = vmul.f32 %v3319, %v3315
    %v3321 = vmul.f32 %v3320, %v3319
    %v3322 = vmul.f32 0.5, %v3321
    %v3323 = vsub.f32 1.5, %v3322
    %v3324 = vmul.f32 %v3319, %v3323
    %vm3325 = vweird.f32 %v3315
    %vm3326 = vweird.f32 %v3319
    %vm3327 = vmor %vm3325, %vm3326
    %v3328 = vsel %vm3327, %v3319, %v3324
    %v3329 = vrsqrt.pop %v3316
    %v3330 = vmul.f32 %v3329, %v3316
    %v3331 = vmul.f32 %v3330, %v3329
    %v3332 = vmul.f32 0.5, %v3331
    %v3333 = vsub.f32 1.5, %v3332
    %v3334 = vmul.f32 %v3329, %v3333
    %vm3335 = vweird.f32 %v3316
    %vm3336 = vweird.f32 %v3329
    %vm3337 = vmor %vm3335, %vm3336
    %v3338 = vsel %vm3337, %v3329, %v3334
    %v3339 = vrsqrt.pop %v3317
    %v3340 = vmul.f32 %v3339, %v3317
    %v3341 = vmul.f32 %v3340, %v3339
    %v3342 = vmul.f32 0.5, %v3341
    %v3343 = vsub.f32 1.5, %v3342
    %v3344 = vmul.f32 %v3339, %v3343
    %vm3345 = vweird.f32 %v3317
    %vm3346 = vweird.f32 %v3339
    %vm3347 = vmor %vm3345, %vm3346
    %v3348 = vsel %vm3347, %v3339, %v3344
    %v3349 = vrsqrt.pop %v3318
    %v3350 = vmul.f32 %v3349, %v3318
    %v3351 = vmul.f32 %v3350, %v3349
    %v3352 = vmul.f32 0.5, %v3351
    %v3353 = vsub.f32 1.5, %v3352
    %v3354 = vmul.f32 %v3349, %v3353
    %vm3355 = vweird.f32 %v3318
    %vm3356 = vweird.f32 %v3349
    %vm3357 = vmor %vm3355, %vm3356
    %v3358 = vsel %vm3357, %v3349, %v3354
    %v3359 = vmul.f32 %v3291, %v3328
    %v3360 = vmul.f32 %v3292, %v3338
    %v3361 = vmul.f32 %v3293, %v3348
    %v3362 = vmul.f32 %v3294, %v3358
    %v3364 = vperm.slane %v3272, 0
    %v3366 = vmul.f32 %v3359, %v3364
    %v3367 = vmul.f32 %v3360, %v3364
    %v3368 = vmul.f32 %v3361, %v3364
    %v3369 = vmul.f32 %v3362, %v3364
    %v3371 = vperm.slane %v3274, 0
    %v3373 = vadd.f32 %v3366, %v3371
    %v3374 = vadd.f32 %v3367, %v3371
    %v3375 = vadd.f32 %v3368, %v3371
    %v3376 = vadd.f32 %v3369, %v3371
    %s3377 = scalar_lea.vmem %s17, 32
    %v3378 = vld [vmem:[%s3377] sm:$0xff]
    %v3379 = vld [vmem:[%s3377 + $0x8] sm:$0xff]
    %v3380 = vld [vmem:[%s3377 + $0x10] sm:$0xff]
    %v3381 = vld [vmem:[%s3377 + $0x18] sm:$0xff]
    %s3382 = scalar_lea.vmem %s18, 1
    %v3383 = vld [vmem:[%s3382] sm:$0x1]
    %v3385 = vperm.slane %v3383, 0
    %v3388 = vsel %vm691, %v3373, 0
    %v3391 = vsel %vm691, %v3374, 0
    %v3394 = vsel %vm691, %v3375, 0
    %v3397 = vsel %vm691, %v3376, 0
    %3399 = vmatpush.msra.mxu0 0.0
    %3400 = vmatpush.msra.mxu0 0.0
    %3401 = vmatpush.msra.mxu0 0.0
    %3402 = vmatpush.msra.mxu0 0.0
    %3403 = vmatpush.msra.mxu0 0.0
    %3404 = vmatpush.msra.mxu0 0.0
    %3405 = vmatpush.msra.mxu0 0.0
    %3406 = vmatpush.msra.mxu0 0.0
    %3407 = vmatpush.msra.mxu0 0.0
    %3408 = vmatpush.msra.mxu0 0.0
    %3409 = vmatpush.msra.mxu0 0.0
    %3410 = vmatpush.msra.mxu0 0.0
    %3411 = vmatpush.msra.mxu0 %v3381
    %3412 = vmatpush.msra.mxu0 %v3380
    %3413 = vmatpush.msra.mxu0 %v3379
    %3414 = vmatpush.msra.mxu0 %v3378
    %3415 = vmatmul.f32.gmra.mxu0 %v3388
    %v3416 = vpop.f32.mrf.mxu0
    %v3417 = vadd.f32 %v3385, %v3416
    %3418 = vmatmul.f32.gmra.mxu0 %v3391
    %v3419 = vpop.f32.mrf.mxu0
    %v3420 = vadd.f32 %v3385, %v3419
    %3421 = vmatmul.f32.gmra.mxu0 %v3394
    %v3422 = vpop.f32.mrf.mxu0
    %v3423 = vadd.f32 %v3385, %v3422
    %3424 = vmatmul.f32.gmra.mxu0 %v3397
    %v3425 = vpop.f32.mrf.mxu0
    %v3426 = vadd.f32 %v3385, %v3425
    %3427 = vdwg.mxu0
    %v3428 = vmul.f32 %v3417, 0.5
    %v3429 = vmul.f32 %v3420, 0.5
    %v3430 = vmul.f32 %v3423, 0.5
    %v3431 = vmul.f32 %v3426, 0.5
    %v3432 = vmul.f32 %v3417, 0.70710677
    %v3433 = vmul.f32 %v3420, 0.70710677
    %v3434 = vmul.f32 %v3423, 0.70710677
    %v3435 = vmul.f32 %v3426, 0.70710677
    %v3436 = vmul.f32 %v3432, %v3432
    %v3437 = vmin.f32 16.0, %v3436
    %v3438 = vmul.f32 %v3437, 2.1237322e-06
    %v3439 = vadd.f32 %v3438, 0.00028619796
    %v3440 = vmul.f32 %v3437, %v3439
    %v3441 = vadd.f32 %v3440, 0.0036580483
    %v3442 = vmul.f32 %v3437, %v3441
    %v3443 = vadd.f32 %v3442, 0.05243302
    %v3444 = vmul.f32 %v3437, %v3443
    %v3445 = vadd.f32 %v3444, 0.18741608
    %v3446 = vmul.f32 %v3437, %v3445
    %v3447 = vadd.f32 %v3446, 1.1283791
    %v3448 = vmul.f32 %v3432, %v3447
    %v3449 = vmul.f32 %v3437, 3.8918573e-05
    %v3450 = vadd.f32 %v3449, 0.001143296
    %v3451 = vmul.f32 %v3437, %v3450
    %v3452 = vadd.f32 %v3451, 0.014752088
    %v3453 = vmul.f32 %v3437, %v3452
    %v3454 = vadd.f32 %v3453, 0.112945676
    %v3455 = vmul.f32 %v3437, %v3454
    %v3456 = vadd.f32 %v3455, 0.4994258
    %v3457 = vmul.f32 %v3437, %v3456
    %v3458 = vadd.f32 %v3457, 1.0
    %v3459 = vrcp.pop %v3458
    %v3460 = vmul.f32 %v3458, %v3459
    %v3461 = vsub.f32 1.0, %v3460
    %v3462 = vmul.f32 %v3459, %v3461
    %v3463 = vadd.f32 %v3459, %v3462
    %vm3464 = vweird.f32 %v3458
    %vm3465 = vweird.f32 %v3459
    %vm3466 = vmor %vm3464, %vm3465
    %v3467 = vsel %vm3466, %v3459, %v3463
    %v3468 = vand.u32 2147483647, %v3458
    %vm3469 = vcmp.eq.f32.partialorder %v3468, 8.507059e+37
    %v3470 = vand.u32 %v3458, 2147483648
    %v3471 = vor.u32 1.1754944e-38, %v3470
    %v3472 = vsel %vm3469, %v3471, %v3467
    %v3473 = vmul.f32 %v3448, %v3472
    %v3474 = vmin.f32 %v3473, 1.0
    %v3475 = vmax.f32 %v3474, -1.0
    %v3476 = vmul.f32 %v3433, %v3433
    %v3477 = vmin.f32 16.0, %v3476
    %v3478 = vmul.f32 %v3477, 2.1237322e-06
    %v3479 = vadd.f32 %v3478, 0.00028619796
    %v3480 = vmul.f32 %v3477, %v3479
    %v3481 = vadd.f32 %v3480, 0.0036580483
    %v3482 = vmul.f32 %v3477, %v3481
    %v3483 = vadd.f32 %v3482, 0.05243302
    %v3484 = vmul.f32 %v3477, %v3483
    %v3485 = vadd.f32 %v3484, 0.18741608
    %v3486 = vmul.f32 %v3477, %v3485
    %v3487 = vadd.f32 %v3486, 1.1283791
    %v3488 = vmul.f32 %v3433, %v3487
    %v3489 = vmul.f32 %v3477, 3.8918573e-05
    %v3490 = vadd.f32 %v3489, 0.001143296
    %v3491 = vmul.f32 %v3477, %v3490
    %v3492 = vadd.f32 %v3491, 0.014752088
    %v3493 = vmul.f32 %v3477, %v3492
    %v3494 = vadd.f32 %v3493, 0.112945676
    %v3495 = vmul.f32 %v3477, %v3494
    %v3496 = vadd.f32 %v3495, 0.4994258
    %v3497 = vmul.f32 %v3477, %v3496
    %v3498 = vadd.f32 %v3497, 1.0
    %v3499 = vrcp.pop %v3498
    %v3500 = vmul.f32 %v3498, %v3499
    %v3501 = vsub.f32 1.0, %v3500
    %v3502 = vmul.f32 %v3499, %v3501
    %v3503 = vadd.f32 %v3499, %v3502
    %vm3504 = vweird.f32 %v3498
    %vm3505 = vweird.f32 %v3499
    %vm3506 = vmor %vm3504, %vm3505
    %v3507 = vsel %vm3506, %v3499, %v3503
    %v3508 = vand.u32 2147483647, %v3498
    %vm3509 = vcmp.eq.f32.partialorder %v3508, 8.507059e+37
    %v3510 = vand.u32 %v3498, 2147483648
    %v3511 = vor.u32 1.1754944e-38, %v3510
    %v3512 = vsel %vm3509, %v3511, %v3507
    %v3513 = vmul.f32 %v3488, %v3512
    %v3514 = vmin.f32 %v3513, 1.0
    %v3515 = vmax.f32 %v3514, -1.0
    %v3516 = vmul.f32 %v3434, %v3434
    %v3517 = vmin.f32 16.0, %v3516
    %v3518 = vmul.f32 %v3517, 2.1237322e-06
    %v3519 = vadd.f32 %v3518, 0.00028619796
    %v3520 = vmul.f32 %v3517, %v3519
    %v3521 = vadd.f32 %v3520, 0.0036580483
    %v3522 = vmul.f32 %v3517, %v3521
    %v3523 = vadd.f32 %v3522, 0.05243302
    %v3524 = vmul.f32 %v3517, %v3523
    %v3525 = vadd.f32 %v3524, 0.18741608
    %v3526 = vmul.f32 %v3517, %v3525
    %v3527 = vadd.f32 %v3526, 1.1283791
    %v3528 = vmul.f32 %v3434, %v3527
    %v3529 = vmul.f32 %v3517, 3.8918573e-05
    %v3530 = vadd.f32 %v3529, 0.001143296
    %v3531 = vmul.f32 %v3517, %v3530
    %v3532 = vadd.f32 %v3531, 0.014752088
    %v3533 = vmul.f32 %v3517, %v3532
    %v3534 = vadd.f32 %v3533, 0.112945676
    %v3535 = vmul.f32 %v3517, %v3534
    %v3536 = vadd.f32 %v3535, 0.4994258
    %v3537 = vmul.f32 %v3517, %v3536
    %v3538 = vadd.f32 %v3537, 1.0
    %v3539 = vrcp.pop %v3538
    %v3540 = vmul.f32 %v3538, %v3539
    %v3541 = vsub.f32 1.0, %v3540
    %v3542 = vmul.f32 %v3539, %v3541
    %v3543 = vadd.f32 %v3539, %v3542
    %vm3544 = vweird.f32 %v3538
    %vm3545 = vweird.f32 %v3539
    %vm3546 = vmor %vm3544, %vm3545
    %v3547 = vsel %vm3546, %v3539, %v3543
    %v3548 = vand.u32 2147483647, %v3538
    %vm3549 = vcmp.eq.f32.partialorder %v3548, 8.507059e+37
    %v3550 = vand.u32 %v3538, 2147483648
    %v3551 = vor.u32 1.1754944e-38, %v3550
    %v3552 = vsel %vm3549, %v3551, %v3547
    %v3553 = vmul.f32 %v3528, %v3552
    %v3554 = vmin.f32 %v3553, 1.0
    %v3555 = vmax.f32 %v3554, -1.0
    %v3556 = vmul.f32 %v3435, %v3435
    %v3557 = vmin.f32 16.0, %v3556
    %v3558 = vmul.f32 %v3557, 2.1237322e-06
    %v3559 = vadd.f32 %v3558, 0.00028619796
    %v3560 = vmul.f32 %v3557, %v3559
    %v3561 = vadd.f32 %v3560, 0.0036580483
    %v3562 = vmul.f32 %v3557, %v3561
    %v3563 = vadd.f32 %v3562, 0.05243302
    %v3564 = vmul.f32 %v3557, %v3563
    %v3565 = vadd.f32 %v3564, 0.18741608
    %v3566 = vmul.f32 %v3557, %v3565
    %v3567 = vadd.f32 %v3566, 1.1283791
    %v3568 = vmul.f32 %v3435, %v3567
    %v3569 = vmul.f32 %v3557, 3.8918573e-05
    %v3570 = vadd.f32 %v3569, 0.001143296
    %v3571 = vmul.f32 %v3557, %v3570
    %v3572 = vadd.f32 %v3571, 0.014752088
    %v3573 = vmul.f32 %v3557, %v3572
    %v3574 = vadd.f32 %v3573, 0.112945676
    %v3575 = vmul.f32 %v3557, %v3574
    %v3576 = vadd.f32 %v3575, 0.4994258
    %v3577 = vmul.f32 %v3557, %v3576
    %v3578 = vadd.f32 %v3577, 1.0
    %v3579 = vrcp.pop %v3578
    %v3580 = vmul.f32 %v3578, %v3579
    %v3581 = vsub.f32 1.0, %v3580
    %v3582 = vmul.f32 %v3579, %v3581
    %v3583 = vadd.f32 %v3579, %v3582
    %vm3584 = vweird.f32 %v3578
    %vm3585 = vweird.f32 %v3579
    %vm3586 = vmor %vm3584, %vm3585
    %v3587 = vsel %vm3586, %v3579, %v3583
    %v3588 = vand.u32 2147483647, %v3578
    %vm3589 = vcmp.eq.f32.partialorder %v3588, 8.507059e+37
    %v3590 = vand.u32 %v3578, 2147483648
    %v3591 = vor.u32 1.1754944e-38, %v3590
    %v3592 = vsel %vm3589, %v3591, %v3587
    %v3593 = vmul.f32 %v3568, %v3592
    %v3594 = vmin.f32 %v3593, 1.0
    %v3595 = vmax.f32 %v3594, -1.0
    %v3596 = vadd.f32 %v3475, 1.0
    %v3597 = vadd.f32 %v3515, 1.0
    %v3598 = vadd.f32 %v3555, 1.0
    %v3599 = vadd.f32 %v3595, 1.0
    %v3600 = vmul.f32 %v3428, %v3596
    %v3601 = vmul.f32 %v3429, %v3597
    %v3602 = vmul.f32 %v3430, %v3598
    %v3603 = vmul.f32 %v3431, %v3599
    %s3604 = scalar_lea.vmem %s19, 16
    %v3605 = vld [vmem:[%s3604] sm:$0xff]
    %v3606 = vld [vmem:[%s3604 + $0x8] sm:$0xff]
    %s3607 = scalar_lea.vmem %s20, 1
    %v3608 = vld [vmem:[%s3607] sm:$0x1]
    %v3610 = vperm.slane %v3608, 0
    %v3613 = vsel %vm129, %v3600, 0
    %v3616 = vsel %vm129, %v3601, 0
    %v3619 = vsel %vm129, %v3602, 0
    %v3622 = vsel %vm129, %v3603, 0
    %3624 = vmatpush.msra.mxu0 0.0
    %3625 = vmatpush.msra.mxu0 0.0
    %3626 = vmatpush.msra.mxu0 0.0
    %3627 = vmatpush.msra.mxu0 0.0
    %3628 = vmatpush.msra.mxu0 0.0
    %3629 = vmatpush.msra.mxu0 0.0
    %3630 = vmatpush.msra.mxu0 0.0
    %3631 = vmatpush.msra.mxu0 0.0
    %3632 = vmatpush.msra.mxu0 0.0
    %3633 = vmatpush.msra.mxu0 0.0
    %3634 = vmatpush.msra.mxu0 0.0
    %3635 = vmatpush.msra.mxu0 0.0
    %3636 = vmatpush.msra.mxu0 0.0
    %3637 = vmatpush.msra.mxu0 0.0
    %3638 = vmatpush.msra.mxu0 %v3606
    %3639 = vmatpush.msra.mxu0 %v3605
    %3640 = vmatmul.f32.gmra.mxu0 %v3613
    %v3641 = vpop.f32.mrf.mxu0
    %v3642 = vadd.f32 %v3610, %v3641
    %3643 = vmatmul.f32.gmra.mxu0 %v3616
    %v3644 = vpop.f32.mrf.mxu0
    %v3645 = vadd.f32 %v3610, %v3644
    %3646 = vmatmul.f32.gmra.mxu0 %v3619
    %v3647 = vpop.f32.mrf.mxu0
    %v3648 = vadd.f32 %v3610, %v3647
    %3649 = vmatmul.f32.gmra.mxu0 %v3622
    %v3650 = vpop.f32.mrf.mxu0
    %v3651 = vadd.f32 %v3610, %v3650
    %3652 = vdwg.mxu0
    %v3653 = vadd.f32 %v3267, %v3642
    %v3654 = vadd.f32 %v3268, %v3645
    %v3655 = vadd.f32 %v3269, %v3648
    %v3656 = vadd.f32 %v3270, %v3651
    %v3657 = vld [vmem:[%s21] sm:$0x1]
    %v3658 = vld [vmem:[%s22] sm:$0x1]
    %v3659 = vsel %vm691, %v3653, 0.0
    %3660 = vadd.xlane.f32.xlu0 %v3659
    %v3661 = vpop.xlane.xlu0 %3660
    %v3662 = vsel %vm691, %v3654, 0.0
    %3663 = vadd.xlane.f32.xlu0 %v3662
    %v3664 = vpop.xlane.xlu0 %3663
    %v3665 = vsel %vm691, %v3655, 0.0
    %3666 = vadd.xlane.f32.xlu0 %v3665
    %v3667 = vpop.xlane.xlu0 %3666
    %v3668 = vsel %vm691, %v3656, 0.0
    %3669 = vadd.xlane.f32.xlu0 %v3668
    %v3670 = vpop.xlane.xlu0 %3669
    %v3671 = vmul.f32 %v3661, %v710
    %v3672 = vmul.f32 %v3664, %v710
    %v3673 = vmul.f32 %v3667, %v710
    %v3674 = vmul.f32 %v3670, %v710
    %v3675 = vsub.f32 %v3653, %v3671
    %v3676 = vsub.f32 %v3654, %v3672
    %v3677 = vsub.f32 %v3655, %v3673
    %v3678 = vsub.f32 %v3656, %v3674
    %v3679 = vmul.f32 %v3675, %v3675
    %v3680 = vmul.f32 %v3676, %v3676
    %v3681 = vmul.f32 %v3677, %v3677
    %v3682 = vmul.f32 %v3678, %v3678
    %v3683 = vsel %vm691, %v3679, 0.0
    %3684 = vadd.xlane.f32.xlu0 %v3683
    %v3685 = vpop.xlane.xlu0 %3684
    %v3686 = vsel %vm691, %v3680, 0.0
    %3687 = vadd.xlane.f32.xlu0 %v3686
    %v3688 = vpop.xlane.xlu0 %3687
    %v3689 = vsel %vm691, %v3681, 0.0
    %3690 = vadd.xlane.f32.xlu0 %v3689
    %v3691 = vpop.xlane.xlu0 %3690
    %v3692 = vsel %vm691, %v3682, 0.0
    %3693 = vadd.xlane.f32.xlu0 %v3692
    %v3694 = vpop.xlane.xlu0 %3693
    %v3695 = vmul.f32 %v3685, %v710
    %v3696 = vmul.f32 %v3688, %v710
    %v3697 = vmul.f32 %v3691, %v710
    %v3698 = vmul.f32 %v3694, %v710
    %v3699 = vadd.f32 %v3695, 1e-05
    %v3700 = vadd.f32 %v3696, 1e-05
    %v3701 = vadd.f32 %v3697, 1e-05
    %v3702 = vadd.f32 %v3698, 1e-05
    %v3703 = vrsqrt.pop %v3699
    %v3704 = vmul.f32 %v3703, %v3699
    %v3705 = vmul.f32 %v3704, %v3703
    %v3706 = vmul.f32 0.5, %v3705
    %v3707 = vsub.f32 1.5, %v3706
    %v3708 = vmul.f32 %v3703, %v3707
    %vm3709 = vweird.f32 %v3699
    %vm3710 = vweird.f32 %v3703
    %vm3711 = vmor %vm3709, %vm3710
    %v3712 = vsel %vm3711, %v3703, %v3708
    %v3713 = vrsqrt.pop %v3700
    %v3714 = vmul.f32 %v3713, %v3700
    %v3715 = vmul.f32 %v3714, %v3713
    %v3716 = vmul.f32 0.5, %v3715
    %v3717 = vsub.f32 1.5, %v3716
    %v3718 = vmul.f32 %v3713, %v3717
    %vm3719 = vweird.f32 %v3700
    %vm3720 = vweird.f32 %v3713
    %vm3721 = vmor %vm3719, %vm3720
    %v3722 = vsel %vm3721, %v3713, %v3718
    %v3723 = vrsqrt.pop %v3701
    %v3724 = vmul.f32 %v3723, %v3701
    %v3725 = vmul.f32 %v3724, %v3723
    %v3726 = vmul.f32 0.5, %v3725
    %v3727 = vsub.f32 1.5, %v3726
    %v3728 = vmul.f32 %v3723, %v3727
    %vm3729 = vweird.f32 %v3701
    %vm3730 = vweird.f32 %v3723
    %vm3731 = vmor %vm3729, %vm3730
    %v3732 = vsel %vm3731, %v3723, %v3728
    %v3733 = vrsqrt.pop %v3702
    %v3734 = vmul.f32 %v3733, %v3702
    %v3735 = vmul.f32 %v3734, %v3733
    %v3736 = vmul.f32 0.5, %v3735
    %v3737 = vsub.f32 1.5, %v3736
    %v3738 = vmul.f32 %v3733, %v3737
    %vm3739 = vweird.f32 %v3702
    %vm3740 = vweird.f32 %v3733
    %vm3741 = vmor %vm3739, %vm3740
    %v3742 = vsel %vm3741, %v3733, %v3738
    %v3743 = vmul.f32 %v3675, %v3712
    %v3744 = vmul.f32 %v3676, %v3722
    %v3745 = vmul.f32 %v3677, %v3732
    %v3746 = vmul.f32 %v3678, %v3742
    %v3748 = vperm.slane %v3657, 0
    %v3750 = vmul.f32 %v3743, %v3748
    %v3751 = vmul.f32 %v3744, %v3748
    %v3752 = vmul.f32 %v3745, %v3748
    %v3753 = vmul.f32 %v3746, %v3748
    %v3755 = vperm.slane %v3658, 0
    %v3757 = vadd.f32 %v3750, %v3755
    %v3758 = vadd.f32 %v3751, %v3755
    %v3759 = vadd.f32 %v3752, %v3755
    %v3760 = vadd.f32 %v3753, %v3755
    %v3761 = vld [vmem:[%s25] sm:$0x3]
    %v3763 = vsel %vm691, %v3761, 0
    %3765 = vmatpush.msra.mxu0 0.0
    %3766 = vmatpush.msra.mxu0 0.0
    %3767 = vmatpush.msra.mxu0 0.0
    %3768 = vmatpush.msra.mxu0 0.0
    %3769 = vmatpush.msra.mxu0 0.0
    %3770 = vmatpush.msra.mxu0 0.0
    %3771 = vmatpush.msra.mxu0 0.0
    %3772 = vmatpush.msra.mxu0 0.0
    %3773 = vmatpush.msra.mxu0 0.0
    %3774 = vmatpush.msra.mxu0 0.0
    %3775 = vmatpush.msra.mxu0 0.0
    %3776 = vmatpush.msra.mxu0 0.0
    %3777 = vmatpush.msra.mxu0 %v3760
    %3778 = vmatpush.msra.mxu0 %v3759
    %3779 = vmatpush.msra.mxu0 %v3758
    %3780 = vmatpush.msra.mxu0 %v3757
    %3781 = vmatmul.f32.gmra.mxu0 %v3763
    %v3782 = vpop.f32.mrf.mxu0
    %v3783 = vadd.f32 0.0, %v3782
    %3784 = vdwg.mxu0
    %v3785 = vld [vmem:[%s23] sm:$0xff]
    %v3786 = vld [vmem:[%s23 + $0x8] sm:$0xff]
    %v3787 = vld [vmem:[%s23 + $0x10] sm:$0xff]
    %v3788 = vld [vmem:[%s23 + $0x18] sm:$0xff]
    %v3789 = vld [vmem:[%s24] sm:$0x1]
    %v3791 = vperm.slane %v3789, 0
    %v3794 = vsel %vm691, %v3783, 0
    %3796 = vmatpush.msra.mxu0 0.0
    %3797 = vmatpush.msra.mxu0 0.0
    %3798 = vmatpush.msra.mxu0 0.0
    %3799 = vmatpush.msra.mxu0 0.0
    %3800 = vmatpush.msra.mxu0 0.0
    %3801 = vmatpush.msra.mxu0 0.0
    %3802 = vmatpush.msra.mxu0 0.0
    %3803 = vmatpush.msra.mxu0 0.0
    %3804 = vmatpush.msra.mxu0 0.0
    %3805 = vmatpush.msra.mxu0 0.0
    %3806 = vmatpush.msra.mxu0 0.0
    %3807 = vmatpush.msra.mxu0 0.0
    %3808 = vmatpush.msra.mxu0 %v3788
    %3809 = vmatpush.msra.mxu0 %v3787
    %3810 = vmatpush.msra.mxu0 %v3786
    %3811 = vmatpush.msra.mxu0 %v3785
    %3812 = vmatmul.f32.gmra.mxu0 %v3794
    %v3813 = vpop.f32.mrf.mxu0
    %v3814 = vadd.f32 %v3791, %v3813
    %3815 = vdwg.mxu0
    %vm3816 = vcmask 66560
    %3817 = vst.msk [vmem:[#allocation3] sm:$0x3] %vm3816, %v3814
    // Predicated region
    $region106: #{mlp_mixer_roberta_forward.1} parent=1 // pred_check
      _
    $region107: #{mlp_mixer_roberta_forward.1} parent=1 // pred_check_branch
      %3819 = sbr.rel (0) target = $region109
    $region108: #{mlp_mixer_roberta_forward.1} parent=1 // pred_region
      %3821 = vsyncadd [#allocation4], 0
      %s3823 = sshll.u32 [#allocation3], 4
      %s3824 = int_to_ptr.vmem [resolvable:$true] %s3823
      %s3825 = sshll.u32 %s26, 4
      %s3826 = int_to_ptr.hbm [resolvable:$true] %s3825
      %3828 = dma.vmem_to_hbm [thread:$0]  %s3824, 32, %s3826, [#allocation4]
    $region109: #{mlp_mixer_roberta_forward.1} parent=1 // pred_fallthru
      _
    // Predicated region
    $region110: #{mlp_mixer_roberta_forward.1} parent=1 // pred_check
      _
    $region111: #{mlp_mixer_roberta_forward.1} parent=1 // pred_check_branch
      %3830 = sbr.rel (0) target = $region113
    $region112: #{mlp_mixer_roberta_forward.1} parent=1 // pred_region
      %3832 = dma.done [#allocation4], 32
    $region113: #{mlp_mixer_roberta_forward.1} parent=1 // pred_fallthru
      _
    %3833 = vsyncpa [#allocation4], 1

</llo_original>
